<compile_context>
chip_gen: v7x
topology: tpu7x:2x2x1
jax: 0.10.0
libtpu: 0.0.40
codegen_flags: <defaults>
</compile_context>

<pallas_src>
import functools

import jax
import jax.numpy as jnp
from jax.experimental import pallas as pl
from jax.experimental.pallas import tpu as pltpu

BN_EPS = 1e-5
LN_EPS = 1e-5


# ------------------------------ Pallas kernel --------------------------------

def _aid_fused_kernel(mlp_ref, y_ref, ycs_ref, wp_ref, wy_ref, b1_ref,
                      w7_ref, b7_ref, gam_ref, bet_ref, w2_ref, b2_ref,
                      out_ref, cmpad_ref, col_ref, *, H, W, C, K, W_OFF):
  """Full AID forward for one batch element; all intermediates stay in VMEM."""
  f32 = jnp.float32
  PAD = K // 2
  HW = H * W

  y = y_ref[0]                                    # (H, W, C)
  ycs = ycs_ref[0]                                # y with W (column) pairs swapped

  # ---- PCWA patch attention: 2x2 max / avg pool broadcast to pixel res ----
  def _row_pair_swap(v):                          # leading-dim reshape + concat
    v4 = v.reshape(H // 2, 2, W, C)
    v4 = jnp.concatenate([v4[:, 1:2], v4[:, 0:1]], axis=1)
    return v4.reshape(H, W, C)

  yr = _row_pair_swap(y)                          # y[h^1, w]
  ycr = _row_pair_swap(ycs)                       # y[h^1, w^1]
  pmax = jnp.maximum(jnp.maximum(y, yr), jnp.maximum(ycs, ycr))
  pavg = (y + yr + ycs + ycr) * 0.25
  w_lin = mlp_ref[0]                              # nn.Linear(1, 1) weight (SMEM)
  b_lin = mlp_ref[1]                              # nn.Linear(1, 1) bias
  scale = jax.nn.sigmoid(w_lin * (pmax + pavg) + 2.0 * b_lin)   # (H, W, C)

  # ---- 1x1 conv over cat([y * scale, y])  ==  two MXU matmuls ----
  prod = (y * scale).reshape(HW, C)
  ypix = y.reshape(HW, C)
  fs = (jnp.dot(prod, wp_ref[...], preferred_element_type=f32)
        + jnp.dot(ypix, wy_ref[...], preferred_element_type=f32)
        + b1_ref[...])                            # (HW, C)

  # ---- channel max / avg pool, written into a zero-padded VMEM halo ----
  cmax = jnp.max(fs, axis=1, keepdims=True).reshape(H, W, 1)
  cavg = jnp.mean(fs, axis=1, keepdims=True).reshape(H, W, 1)
  cmpad_ref[...] = jnp.zeros((H + 2 * PAD, W_OFF + W + PAD, 2), f32)
  cmpad_ref[PAD:PAD + H, W_OFF:W_OFF + W, 0:1] = cmax   # aligned sublane tile
  cmpad_ref[PAD:PAD + H, W_OFF:W_OFF + W, 1:2] = cavg

  # ---- 7x7 conv (2 -> C, pad 3, BN folded) as im2col + one MXU matmul ----
  for dh in range(K):
    for dw in range(K):
      k2 = 2 * (dh * K + dw)
      ws = W_OFF - PAD + dw
      win = cmpad_ref[dh:dh + H, ws:ws + W, :]    # (H, W, 2) halo window
      col_ref[:, k2:k2 + 2] = win.reshape(HW, 2)
  c7 = (jnp.dot(col_ref[...], w7_ref[...], preferred_element_type=f32)
        + b7_ref[...])                            # (HW, C)
  act = c7 * jax.nn.sigmoid(c7)                   # SiLU (Conv activation)
  gated = jax.nn.sigmoid(act) * fs                # PCWA output

  # ---- per-sample LayerNorm over the full (C, H, W) slab ----
  mu = jnp.mean(gated)
  var = jnp.mean((gated - mu) ** 2)
  ln = (gated - mu) * jax.lax.rsqrt(var + LN_EPS)
  ln = ln * gam_ref[...] + bet_ref[...]

  # ---- final 1x1 conv (C -> C // 2, BN folded) + SiLU ----
  h = jnp.dot(ln, w2_ref[...], preferred_element_type=f32) + b2_ref[...]
  out_ref[0] = h * jax.nn.sigmoid(h)


# ------------------------------ glue ------------------------------------------

def _split_groups(x, stride, group):
  """AID._split: interlaced strided slicing, concatenated on channels."""
  gfor = group // stride
  gs = [x[:, :, i // stride::stride, i // stride::gfor] for i in range(group)]
  return jnp.concatenate(gs, axis=1)


def aid_forward_pallas(x, P, *, stride=2, group=4, patch=2):
  if patch != 2:
    raise NotImplementedError(
        "in-kernel patch pooling is implemented for patch_size=2")
  f32 = jnp.float32
  y = _split_groups(x, stride, group)              # (B, Cg, H2, W2), NCHW
  B, Cg, H2, W2 = y.shape
  HW = H2 * W2
  Cg2 = Cg // 2
  K = 7
  PAD = K // 2
  W_OFF = ((PAD + 7) // 8) * 8                     # aligned column offset of halo

  # ---- layout plumbing (glue) ----
  y_sp = jnp.transpose(y, (0, 2, 3, 1)).astype(f32)              # (B, H, W, Cg)
  y_cs = jnp.flip(y_sp.reshape(B, H2, W2 // 2, 2, Cg),
                  axis=3).reshape(B, H2, W2, Cg)                 # column-pair swap

  mlp_params = jnp.array([P['mlp_w'], P['mlp_b']], f32)          # SMEM scalars
  Wp = P['conv1_w'][:, :Cg].T.astype(f32)                        # product half
  Wy = P['conv1_w'][:, Cg:].T.astype(f32)                        # identity half
  b1 = P['conv1_b'].reshape(1, Cg).astype(f32)

  # fold BatchNorm running stats (eval mode) into the conv_out weights
  s7 = P['bn7_gamma'] / jnp.sqrt(P['bn7_var'] + BN_EPS)
  w7 = jnp.transpose(P['conv7_w'] * s7[:, None, None, None],
                     (2, 3, 1, 0)).reshape(K * K * 2, Cg).astype(f32)
  b7 = (P['bn7_beta'] - P['bn7_mean'] * s7).reshape(1, Cg).astype(f32)

  gam = jnp.transpose(P['ln_gamma'], (1, 2, 0)).reshape(HW, Cg).astype(f32)
  bet = jnp.transpose(P['ln_beta'], (1, 2, 0)).reshape(HW, Cg).astype(f32)

  s2 = P['bn2_gamma'] / jnp.sqrt(P['bn2_var'] + BN_EPS)
  w2t = (P['conv2_w'] * s2[:, None]).T.astype(f32)               # (Cg, Cg2)
  b2 = (P['bn2_beta'] - P['bn2_mean'] * s2).reshape(1, Cg2).astype(f32)

  kernel = functools.partial(_aid_fused_kernel, H=H2, W=W2, C=Cg, K=K,
                             W_OFF=W_OFF)
  out_pix = pl.pallas_call(
      kernel,
      out_shape=jax.ShapeDtypeStruct((B, HW, Cg2), f32),
      grid=(B,),
      in_specs=[
          pl.BlockSpec(memory_space=pltpu.MemorySpace.SMEM),         # mlp w, b
          pl.BlockSpec((1, H2, W2, Cg), lambda b: (b, 0, 0, 0)),     # y
          pl.BlockSpec((1, H2, W2, Cg), lambda b: (b, 0, 0, 0)),     # y col-swapped
          pl.BlockSpec((Cg, Cg), lambda b: (0, 0)),                  # Wp
          pl.BlockSpec((Cg, Cg), lambda b: (0, 0)),                  # Wy
          pl.BlockSpec((1, Cg), lambda b: (0, 0)),                   # b1
          pl.BlockSpec((2 * K * K, Cg), lambda b: (0, 0)),           # w7 (im2col)
          pl.BlockSpec((1, Cg), lambda b: (0, 0)),                   # b7
          pl.BlockSpec((HW, Cg), lambda b: (0, 0)),                  # LN gamma
          pl.BlockSpec((HW, Cg), lambda b: (0, 0)),                  # LN beta
          pl.BlockSpec((Cg, Cg2), lambda b: (0, 0)),                 # head W
          pl.BlockSpec((1, Cg2), lambda b: (0, 0)),                  # head b
      ],
      out_specs=pl.BlockSpec((1, HW, Cg2), lambda b: (b, 0, 0)),
      scratch_shapes=[
          pltpu.VMEM((H2 + 2 * PAD, W_OFF + W2 + PAD, 2), f32),      # padded cm
          pltpu.VMEM((HW, 2 * K * K), f32),                          # im2col
      ],
      compiler_params=pltpu.CompilerParams(
          dimension_semantics=("parallel",)),
  )(mlp_params, y_sp, y_cs, Wp, Wy, b1, w7, b7, gam, bet, w2t, b2)

  # back to NCHW to match the PyTorch module output
  return jnp.transpose(out_pix, (0, 2, 1)).reshape(B, Cg2, H2, W2)


# ------------------------- pure-JAX reference --------------------------------

def aid_forward_reference(x, P, *, stride=2, group=4, patch=2):
  hi = jax.lax.Precision.HIGHEST
  y = _split_groups(x, stride, group)
  B, Cg, H2, W2 = y.shape
  p = patch
  hn, wn = H2 // p, W2 // p
  yp = y.reshape(B, Cg, hn, p, wn, p)
  pmax = yp.max(axis=(3, 5))
  pavg = yp.mean(axis=(3, 5))
  scale = jax.nn.sigmoid(P['mlp_w'] * (pmax + pavg) + 2.0 * P['mlp_b'])
  scale_full = jnp.repeat(jnp.repeat(scale, p, axis=2), p, axis=3)
  product = y * scale_full
  cat = jnp.concatenate([product, y], axis=1)
  fs = (jnp.einsum('bihw,oi->bohw', cat, P['conv1_w'], precision=hi)
        + P['conv1_b'][None, :, None, None])
  cm = jnp.concatenate([fs.max(axis=1, keepdims=True),
                        fs.mean(axis=1, keepdims=True)], axis=1)
  c7 = jax.lax.conv_general_dilated(
      cm, P['conv7_w'], (1, 1), ((3, 3), (3, 3)),
      dimension_numbers=('NCHW', 'OIHW', 'NCHW'), precision=hi)
  s7 = P['bn7_gamma'] / jnp.sqrt(P['bn7_var'] + BN_EPS)
  b7 = P['bn7_beta'] - P['bn7_mean'] * s7
  c7 = c7 * s7[None, :, None, None] + b7[None, :, None, None]
  act = c7 * jax.nn.sigmoid(c7)
  out = jax.nn.sigmoid(act) * fs
  mu = out.mean(axis=(1, 2, 3), keepdims=True)
  var = ((out - mu) ** 2).mean(axis=(1, 2, 3), keepdims=True)
  out = ((out - mu) / jnp.sqrt(var + LN_EPS) * P['ln_gamma'][None]
         + P['ln_beta'][None])
  h = jnp.einsum('bihw,oi->bohw', out, P['conv2_w'], precision=hi)
  s2 = P['bn2_gamma'] / jnp.sqrt(P['bn2_var'] + BN_EPS)
  b2 = P['bn2_beta'] - P['bn2_mean'] * s2
  h = h * s2[None, :, None, None] + b2[None, :, None, None]
  return h * jax.nn.sigmoid(h)


# --------------------------------- main ---------------------------------------

if __name__ == "__main__":
  B, C, H, W = 2, 4, 16, 16
  stride, group, patch = 2, 4, 2
  Cg = C * group                                   # 16
  H2, W2 = H // stride, W // (group // stride)     # 8, 8

  key = jax.random.PRNGKey(0)
  ks = jax.random.split(key, 16)
  P = {
      'mlp_w': 0.7,                                # nn.Linear(1,1) weight
      'mlp_b': -0.1,                               # nn.Linear(1,1) bias
      'conv1_w': 0.10 * jax.random.normal(ks[1], (Cg, 2 * Cg), jnp.float32),
      'conv1_b': 0.05 * jax.random.normal(ks[2], (Cg,), jnp.float32),
      'conv7_w': 0.05 * jax.random.normal(ks[3], (Cg, 2, 7, 7), jnp.float32),
      'bn7_gamma': 1.0 + 0.1 * jax.random.normal(ks[4], (Cg,), jnp.float32),
      'bn7_beta': 0.1 * jax.random.normal(ks[5], (Cg,), jnp.float32),
      'bn7_mean': 0.05 * jax.random.normal(ks[6], (Cg,), jnp.float32),
      'bn7_var': 0.8 + 0.4 * jax.random.uniform(ks[7], (Cg,), dtype=jnp.float32),
      'ln_gamma': 1.0 + 0.1 * jax.random.normal(ks[8], (Cg, H2, W2), jnp.float32),
      'ln_beta': 0.1 * jax.random.normal(ks[9], (Cg, H2, W2), jnp.float32),
      'conv2_w': 0.20 * jax.random.normal(ks[10], (Cg // 2, Cg), jnp.float32),
      'bn2_gamma': 1.0 + 0.1 * jax.random.normal(ks[11], (Cg // 2,), jnp.float32),
      'bn2_beta': 0.1 * jax.random.normal(ks[12], (Cg // 2,), jnp.float32),
      'bn2_mean': 0.05 * jax.random.normal(ks[13], (Cg // 2,), jnp.float32),
      'bn2_var': 0.8 + 0.4 * jax.random.uniform(ks[14], (Cg // 2,),
                                                dtype=jnp.float32),
  }
  x = jax.random.normal(ks[0], (B, C, H, W), jnp.float32)

  out = jax.block_until_ready(
      aid_forward_pallas(x, P, stride=stride, group=group, patch=patch))
  ref = jax.block_until_ready(
      aid_forward_reference(x, P, stride=stride, group=group, patch=patch))

  assert out.shape == (B, Cg // 2, H2, W2), out.shape
  err = float(jnp.max(jnp.abs(out - ref)))
  assert err < 2e-3, f"max abs error vs reference: {err}"
  print("KERNEL_OK")
</pallas_src>

<mosaic_0001>
module attributes {stable_mosaic.version = 11 : i64} {
  func.func @_aid_fused_kernel(%arg0: i32, %arg1: memref<2xf32, #tpu.memory_space<smem>>, %arg2: memref<1x8x8x16xf32, #tpu.memory_space<vmem>>, %arg3: memref<1x8x8x16xf32, #tpu.memory_space<vmem>>, %arg4: memref<16x16xf32, #tpu.memory_space<vmem>>, %arg5: memref<16x16xf32, #tpu.memory_space<vmem>>, %arg6: memref<1x16xf32, #tpu.memory_space<vmem>>, %arg7: memref<98x16xf32, #tpu.memory_space<vmem>>, %arg8: memref<1x16xf32, #tpu.memory_space<vmem>>, %arg9: memref<64x16xf32, #tpu.memory_space<vmem>>, %arg10: memref<64x16xf32, #tpu.memory_space<vmem>>, %arg11: memref<16x8xf32, #tpu.memory_space<vmem>>, %arg12: memref<1x8xf32, #tpu.memory_space<vmem>>, %arg13: memref<1x64x8xf32, #tpu.memory_space<vmem>>, %arg14: memref<14x19x2xf32, #tpu.memory_space<vmem>>, %arg15: memref<64x98xf32, #tpu.memory_space<vmem>>) attributes {dimension_semantics = [#tpu.dimension_semantics<parallel>], iteration_bounds = array<i64: 2>, scalar_prefetch = 0 : i64, scratch_operands = 2 : i64, tpu.core_type = #tpu.core_type<tc>, window_params = [{transform_indices = @transform_0, window_bounds = array<i64: 2>}, {transform_indices = @transform_1, window_bounds = array<i64: 1, 8, 8, 16>}, {transform_indices = @transform_2, window_bounds = array<i64: 1, 8, 8, 16>}, {pipeline_mode = #tpu.pipeline_mode<synchronous>, transform_indices = @transform_3, window_bounds = array<i64: 16, 16>}, {pipeline_mode = #tpu.pipeline_mode<synchronous>, transform_indices = @transform_4, window_bounds = array<i64: 16, 16>}, {pipeline_mode = #tpu.pipeline_mode<synchronous>, transform_indices = @transform_5, window_bounds = array<i64: 1, 16>}, {pipeline_mode = #tpu.pipeline_mode<synchronous>, transform_indices = @transform_6, window_bounds = array<i64: 98, 16>}, {pipeline_mode = #tpu.pipeline_mode<synchronous>, transform_indices = @transform_7, window_bounds = array<i64: 1, 16>}, {pipeline_mode = #tpu.pipeline_mode<synchronous>, transform_indices = @transform_8, window_bounds = array<i64: 64, 16>}, {pipeline_mode = #tpu.pipeline_mode<synchronous>, transform_indices = @transform_9, window_bounds = array<i64: 64, 16>}, {pipeline_mode = #tpu.pipeline_mode<synchronous>, transform_indices = @transform_10, window_bounds = array<i64: 16, 8>}, {pipeline_mode = #tpu.pipeline_mode<synchronous>, transform_indices = @transform_11, window_bounds = array<i64: 1, 8>}, {transform_indices = @transform_12, window_bounds = array<i64: 1, 64, 8>}]} {
    %c0 = arith.constant 0 : index
    %c0_0 = arith.constant 0 : index
    %c0_1 = arith.constant 0 : index
    %c0_2 = arith.constant 0 : index
    %0 = vector.load %arg2[%c0, %c0_0, %c0_1, %c0_2] : memref<1x8x8x16xf32, #tpu.memory_space<vmem>>, vector<1x8x8x16xf32>
    %1 = vector.shape_cast %0 : vector<1x8x8x16xf32> to vector<8x8x16xf32>
    %c0_3 = arith.constant 0 : index
    %c0_4 = arith.constant 0 : index
    %c0_5 = arith.constant 0 : index
    %c0_6 = arith.constant 0 : index
    %2 = vector.load %arg3[%c0_3, %c0_4, %c0_5, %c0_6] : memref<1x8x8x16xf32, #tpu.memory_space<vmem>>, vector<1x8x8x16xf32>
    %3 = vector.shape_cast %2 : vector<1x8x8x16xf32> to vector<8x8x16xf32>
    %4 = vector.shape_cast %1 : vector<8x8x16xf32> to vector<4x2x8x16xf32>
    %5 = vector.extract_strided_slice %4 {offsets = [0, 1, 0, 0], sizes = [4, 1, 8, 16], strides = [1, 1, 1, 1]} : vector<4x2x8x16xf32> to vector<4x1x8x16xf32>
    %6 = vector.extract_strided_slice %4 {offsets = [0, 0, 0, 0], sizes = [4, 1, 8, 16], strides = [1, 1, 1, 1]} : vector<4x2x8x16xf32> to vector<4x1x8x16xf32>
    %7 = tpu.concatenate %5, %6 in 1 : vector<4x1x8x16xf32>, vector<4x1x8x16xf32> -> vector<4x2x8x16xf32>
    %8 = vector.shape_cast %7 : vector<4x2x8x16xf32> to vector<8x8x16xf32>
    %9 = vector.shape_cast %3 : vector<8x8x16xf32> to vector<4x2x8x16xf32>
    %10 = vector.extract_strided_slice %9 {offsets = [0, 1, 0, 0], sizes = [4, 1, 8, 16], strides = [1, 1, 1, 1]} : vector<4x2x8x16xf32> to vector<4x1x8x16xf32>
    %11 = vector.extract_strided_slice %9 {offsets = [0, 0, 0, 0], sizes = [4, 1, 8, 16], strides = [1, 1, 1, 1]} : vector<4x2x8x16xf32> to vector<4x1x8x16xf32>
    %12 = tpu.concatenate %10, %11 in 1 : vector<4x1x8x16xf32>, vector<4x1x8x16xf32> -> vector<4x2x8x16xf32>
    %13 = vector.shape_cast %12 : vector<4x2x8x16xf32> to vector<8x8x16xf32>
    %14 = arith.maximumf %1, %8 : vector<8x8x16xf32>
    %15 = arith.maximumf %3, %13 : vector<8x8x16xf32>
    %16 = arith.maximumf %14, %15 : vector<8x8x16xf32>
    %17 = arith.addf %1, %8 : vector<8x8x16xf32>
    %18 = arith.addf %17, %3 : vector<8x8x16xf32>
    %19 = arith.addf %18, %13 : vector<8x8x16xf32>
    %cst = arith.constant 2.500000e-01 : f32
    %20 = vector.broadcast %cst : f32 to vector<8x8x16xf32>
    %21 = arith.mulf %19, %20 : vector<8x8x16xf32>
    %c0_7 = arith.constant 0 : index
    %22 = memref.load %arg1[%c0_7] : memref<2xf32, #tpu.memory_space<smem>>
    %c1 = arith.constant 1 : index
    %23 = memref.load %arg1[%c1] : memref<2xf32, #tpu.memory_space<smem>>
    %24 = arith.addf %16, %21 : vector<8x8x16xf32>
    %25 = vector.broadcast %22 : f32 to vector<8x8x16xf32>
    %26 = arith.mulf %25, %24 : vector<8x8x16xf32>
    %cst_8 = arith.constant 2.000000e+00 : f32
    %27 = arith.mulf %cst_8, %23 : f32
    %28 = vector.broadcast %27 : f32 to vector<8x8x16xf32>
    %29 = arith.addf %26, %28 : vector<8x8x16xf32>
    %30 = arith.negf %29 : vector<8x8x16xf32>
    %31 = math.exp %30 : vector<8x8x16xf32>
    %cst_9 = arith.constant 1.000000e+00 : f32
    %32 = vector.broadcast %cst_9 : f32 to vector<8x8x16xf32>
    %33 = arith.addf %32, %31 : vector<8x8x16xf32>
    %34 = arith.divf %32, %33 : vector<8x8x16xf32>
    %35 = arith.mulf %1, %34 : vector<8x8x16xf32>
    %36 = vector.shape_cast %35 : vector<8x8x16xf32> to vector<64x16xf32>
    %37 = vector.shape_cast %1 : vector<8x8x16xf32> to vector<64x16xf32>
    %c0_10 = arith.constant 0 : index
    %c0_11 = arith.constant 0 : index
    %38 = vector.load %arg4[%c0_10, %c0_11] : memref<16x16xf32, #tpu.memory_space<vmem>>, vector<16x16xf32>
    %cst_12 = arith.constant dense<0.000000e+00> : vector<64x16xf32>
    %39 = tpu.matmul %36, %38, %cst_12 {dimension_numbers = #tpu.dot_dimension_numbers<[1], [0], [0], [1], [0, 0, 1, 1], [], []>} : vector<64x16xf32>, vector<16x16xf32>, vector<64x16xf32> -> vector<64x16xf32>
    %c0_13 = arith.constant 0 : index
    %c0_14 = arith.constant 0 : index
    %40 = vector.load %arg5[%c0_13, %c0_14] : memref<16x16xf32, #tpu.memory_space<vmem>>, vector<16x16xf32>
    %cst_15 = arith.constant dense<0.000000e+00> : vector<64x16xf32>
    %41 = tpu.matmul %37, %40, %cst_15 {dimension_numbers = #tpu.dot_dimension_numbers<[1], [0], [0], [1], [0, 0, 1, 1], [], []>} : vector<64x16xf32>, vector<16x16xf32>, vector<64x16xf32> -> vector<64x16xf32>
    %42 = arith.addf %39, %41 : vector<64x16xf32>
    %c0_16 = arith.constant 0 : index
    %c0_17 = arith.constant 0 : index
    %43 = vector.load %arg6[%c0_16, %c0_17] : memref<1x16xf32, #tpu.memory_space<vmem>>, vector<1x16xf32>
    %44 = vector.broadcast %43 : vector<1x16xf32> to vector<64x16xf32>
    %45 = arith.addf %42, %44 : vector<64x16xf32>
    %cst_18 = arith.constant dense<0xFF800000> : vector<64xf32>
    %46 = vector.multi_reduction <maximumf>, %45, %cst_18 [1] : vector<64x16xf32> to vector<64xf32>
    %47 = vector.shape_cast %46 : vector<64xf32> to vector<64x1xf32>
    %48 = vector.shape_cast %47 : vector<64x1xf32> to vector<8x8x1xf32>
    %cst_19 = arith.constant dense<0.000000e+00> : vector<64xf32>
    %49 = vector.multi_reduction <add>, %45, %cst_19 [1] : vector<64x16xf32> to vector<64xf32>
    %50 = vector.shape_cast %49 : vector<64xf32> to vector<64x1xf32>
    %cst_20 = arith.constant 1.600000e+01 : f32
    %51 = vector.broadcast %cst_20 : f32 to vector<64x1xf32>
    %52 = arith.divf %50, %51 : vector<64x1xf32>
    %53 = vector.shape_cast %52 : vector<64x1xf32> to vector<8x8x1xf32>
    %cst_21 = arith.constant 0.000000e+00 : f32
    %54 = vector.broadcast %cst_21 : f32 to vector<14x19x2xf32>
    %c0_22 = arith.constant 0 : index
    %c0_23 = arith.constant 0 : index
    %c0_24 = arith.constant 0 : index
    %55 = vector.load %arg14[%c0_22, %c0_23, %c0_24] : memref<14x19x2xf32, #tpu.memory_space<vmem>>, vector<14x19x2xf32>
    tpu.vector_store %arg14[%c0_22, %c0_23, %c0_24], %54 {strides = array<i32>} : memref<14x19x2xf32, #tpu.memory_space<vmem>>, vector<14x19x2xf32>,
    %c3 = arith.constant 3 : index
    %c8 = arith.constant 8 : index
    %c0_25 = arith.constant 0 : index
    %56 = vector.load %arg14[%c3, %c8, %c0_25] : memref<14x19x2xf32, #tpu.memory_space<vmem>>, vector<8x8x1xf32>
    tpu.vector_store %arg14[%c3, %c8, %c0_25], %48 {strides = array<i32>} : memref<14x19x2xf32, #tpu.memory_space<vmem>>, vector<8x8x1xf32>,
    %c3_26 = arith.constant 3 : index
    %c8_27 = arith.constant 8 : index
    %c1_28 = arith.constant 1 : index
    %57 = vector.load %arg14[%c3_26, %c8_27, %c1_28] : memref<14x19x2xf32, #tpu.memory_space<vmem>>, vector<8x8x1xf32>
    tpu.vector_store %arg14[%c3_26, %c8_27, %c1_28], %53 {strides = array<i32>} : memref<14x19x2xf32, #tpu.memory_space<vmem>>, vector<8x8x1xf32>,
    %c0_29 = arith.constant 0 : index
    %c5 = arith.constant 5 : index
    %c0_30 = arith.constant 0 : index
    %58 = vector.load %arg14[%c0_29, %c5, %c0_30] : memref<14x19x2xf32, #tpu.memory_space<vmem>>, vector<8x8x2xf32>
    %59 = vector.shape_cast %58 : vector<8x8x2xf32> to vector<64x2xf32>
    %c0_31 = arith.constant 0 : index
    %c0_32 = arith.constant 0 : index
    %60 = vector.load %arg15[%c0_31, %c0_32] : memref<64x98xf32, #tpu.memory_space<vmem>>, vector<64x2xf32>
    tpu.vector_store %arg15[%c0_31, %c0_32], %59 {strides = array<i32>} : memref<64x98xf32, #tpu.memory_space<vmem>>, vector<64x2xf32>,
    %c0_33 = arith.constant 0 : index
    %c6 = arith.constant 6 : index
    %c0_34 = arith.constant 0 : index
    %61 = vector.load %arg14[%c0_33, %c6, %c0_34] : memref<14x19x2xf32, #tpu.memory_space<vmem>>, vector<8x8x2xf32>
    %62 = vector.shape_cast %61 : vector<8x8x2xf32> to vector<64x2xf32>
    %c0_35 = arith.constant 0 : index
    %c2 = arith.constant 2 : index
    %63 = vector.load %arg15[%c0_35, %c2] : memref<64x98xf32, #tpu.memory_space<vmem>>, vector<64x2xf32>
    tpu.vector_store %arg15[%c0_35, %c2], %62 {strides = array<i32>} : memref<64x98xf32, #tpu.memory_space<vmem>>, vector<64x2xf32>,
    %c0_36 = arith.constant 0 : index
    %c7 = arith.constant 7 : index
    %c0_37 = arith.constant 0 : index
    %64 = vector.load %arg14[%c0_36, %c7, %c0_37] : memref<14x19x2xf32, #tpu.memory_space<vmem>>, vector<8x8x2xf32>
    %65 = vector.shape_cast %64 : vector<8x8x2xf32> to vector<64x2xf32>
    %c0_38 = arith.constant 0 : index
    %c4 = arith.constant 4 : index
    %66 = vector.load %arg15[%c0_38, %c4] : memref<64x98xf32, #tpu.memory_space<vmem>>, vector<64x2xf32>
    tpu.vector_store %arg15[%c0_38, %c4], %65 {strides = array<i32>} : memref<64x98xf32, #tpu.memory_space<vmem>>, vector<64x2xf32>,
    %c0_39 = arith.constant 0 : index
    %c8_40 = arith.constant 8 : index
    %c0_41 = arith.constant 0 : index
    %67 = vector.load %arg14[%c0_39, %c8_40, %c0_41] : memref<14x19x2xf32, #tpu.memory_space<vmem>>, vector<8x8x2xf32>
    %68 = vector.shape_cast %67 : vector<8x8x2xf32> to vector<64x2xf32>
    %c0_42 = arith.constant 0 : index
    %c6_43 = arith.constant 6 : index
    %69 = vector.load %arg15[%c0_42, %c6_43] : memref<64x98xf32, #tpu.memory_space<vmem>>, vector<64x2xf32>
    tpu.vector_store %arg15[%c0_42, %c6_43], %68 {strides = array<i32>} : memref<64x98xf32, #tpu.memory_space<vmem>>, vector<64x2xf32>,
    %c0_44 = arith.constant 0 : index
    %c9 = arith.constant 9 : index
    %c0_45 = arith.constant 0 : index
    %70 = vector.load %arg14[%c0_44, %c9, %c0_45] : memref<14x19x2xf32, #tpu.memory_space<vmem>>, vector<8x8x2xf32>
    %71 = vector.shape_cast %70 : vector<8x8x2xf32> to vector<64x2xf32>
    %c0_46 = arith.constant 0 : index
    %c8_47 = arith.constant 8 : index
    %72 = vector.load %arg15[%c0_46, %c8_47] : memref<64x98xf32, #tpu.memory_space<vmem>>, vector<64x2xf32>
    tpu.vector_store %arg15[%c0_46, %c8_47], %71 {strides = array<i32>} : memref<64x98xf32, #tpu.memory_space<vmem>>, vector<64x2xf32>,
    %c0_48 = arith.constant 0 : index
    %c10 = arith.constant 10 : index
    %c0_49 = arith.constant 0 : index
    %73 = vector.load %arg14[%c0_48, %c10, %c0_49] : memref<14x19x2xf32, #tpu.memory_space<vmem>>, vector<8x8x2xf32>
    %74 = vector.shape_cast %73 : vector<8x8x2xf32> to vector<64x2xf32>
    %c0_50 = arith.constant 0 : index
    %c10_51 = arith.constant 10 : index
    %75 = vector.load %arg15[%c0_50, %c10_51] : memref<64x98xf32, #tpu.memory_space<vmem>>, vector<64x2xf32>
    tpu.vector_store %arg15[%c0_50, %c10_51], %74 {strides = array<i32>} : memref<64x98xf32, #tpu.memory_space<vmem>>, vector<64x2xf32>,
    %c0_52 = arith.constant 0 : index
    %c11 = arith.constant 11 : index
    %c0_53 = arith.constant 0 : index
    %76 = vector.load %arg14[%c0_52, %c11, %c0_53] : memref<14x19x2xf32, #tpu.memory_space<vmem>>, vector<8x8x2xf32>
    %77 = vector.shape_cast %76 : vector<8x8x2xf32> to vector<64x2xf32>
    %c0_54 = arith.constant 0 : index
    %c12 = arith.constant 12 : index
    %78 = vector.load %arg15[%c0_54, %c12] : memref<64x98xf32, #tpu.memory_space<vmem>>, vector<64x2xf32>
    tpu.vector_store %arg15[%c0_54, %c12], %77 {strides = array<i32>} : memref<64x98xf32, #tpu.memory_space<vmem>>, vector<64x2xf32>,
    %c1_55 = arith.constant 1 : index
    %c5_56 = arith.constant 5 : index
    %c0_57 = arith.constant 0 : index
    %79 = vector.load %arg14[%c1_55, %c5_56, %c0_57] : memref<14x19x2xf32, #tpu.memory_space<vmem>>, vector<8x8x2xf32>
    %80 = vector.shape_cast %79 : vector<8x8x2xf32> to vector<64x2xf32>
    %c0_58 = arith.constant 0 : index
    %c14 = arith.constant 14 : index
    %81 = vector.load %arg15[%c0_58, %c14] : memref<64x98xf32, #tpu.memory_space<vmem>>, vector<64x2xf32>
    tpu.vector_store %arg15[%c0_58, %c14], %80 {strides = array<i32>} : memref<64x98xf32, #tpu.memory_space<vmem>>, vector<64x2xf32>,
    %c1_59 = arith.constant 1 : index
    %c6_60 = arith.constant 6 : index
    %c0_61 = arith.constant 0 : index
    %82 = vector.load %arg14[%c1_59, %c6_60, %c0_61] : memref<14x19x2xf32, #tpu.memory_space<vmem>>, vector<8x8x2xf32>
    %83 = vector.shape_cast %82 : vector<8x8x2xf32> to vector<64x2xf32>
    %c0_62 = arith.constant 0 : index
    %c16 = arith.constant 16 : index
    %84 = vector.load %arg15[%c0_62, %c16] : memref<64x98xf32, #tpu.memory_space<vmem>>, vector<64x2xf32>
    tpu.vector_store %arg15[%c0_62, %c16], %83 {strides = array<i32>} : memref<64x98xf32, #tpu.memory_space<vmem>>, vector<64x2xf32>,
    %c1_63 = arith.constant 1 : index
    %c7_64 = arith.constant 7 : index
    %c0_65 = arith.constant 0 : index
    %85 = vector.load %arg14[%c1_63, %c7_64, %c0_65] : memref<14x19x2xf32, #tpu.memory_space<vmem>>, vector<8x8x2xf32>
    %86 = vector.shape_cast %85 : vector<8x8x2xf32> to vector<64x2xf32>
    %c0_66 = arith.constant 0 : index
    %c18 = arith.constant 18 : index
    %87 = vector.load %arg15[%c0_66, %c18] : memref<64x98xf32, #tpu.memory_space<vmem>>, vector<64x2xf32>
    tpu.vector_store %arg15[%c0_66, %c18], %86 {strides = array<i32>} : memref<64x98xf32, #tpu.memory_space<vmem>>, vector<64x2xf32>,
    %c1_67 = arith.constant 1 : index
    %c8_68 = arith.constant 8 : index
    %c0_69 = arith.constant 0 : index
    %88 = vector.load %arg14[%c1_67, %c8_68, %c0_69] : memref<14x19x2xf32, #tpu.memory_space<vmem>>, vector<8x8x2xf32>
    %89 = vector.shape_cast %88 : vector<8x8x2xf32> to vector<64x2xf32>
    %c0_70 = arith.constant 0 : index
    %c20 = arith.constant 20 : index
    %90 = vector.load %arg15[%c0_70, %c20] : memref<64x98xf32, #tpu.memory_space<vmem>>, vector<64x2xf32>
    tpu.vector_store %arg15[%c0_70, %c20], %89 {strides = array<i32>} : memref<64x98xf32, #tpu.memory_space<vmem>>, vector<64x2xf32>,
    %c1_71 = arith.constant 1 : index
    %c9_72 = arith.constant 9 : index
    %c0_73 = arith.constant 0 : index
    %91 = vector.load %arg14[%c1_71, %c9_72, %c0_73] : memref<14x19x2xf32, #tpu.memory_space<vmem>>, vector<8x8x2xf32>
    %92 = vector.shape_cast %91 : vector<8x8x2xf32> to vector<64x2xf32>
    %c0_74 = arith.constant 0 : index
    %c22 = arith.constant 22 : index
    %93 = vector.load %arg15[%c0_74, %c22] : memref<64x98xf32, #tpu.memory_space<vmem>>, vector<64x2xf32>
    tpu.vector_store %arg15[%c0_74, %c22], %92 {strides = array<i32>} : memref<64x98xf32, #tpu.memory_space<vmem>>, vector<64x2xf32>,
    %c1_75 = arith.constant 1 : index
    %c10_76 = arith.constant 10 : index
    %c0_77 = arith.constant 0 : index
    %94 = vector.load %arg14[%c1_75, %c10_76, %c0_77] : memref<14x19x2xf32, #tpu.memory_space<vmem>>, vector<8x8x2xf32>
    %95 = vector.shape_cast %94 : vector<8x8x2xf32> to vector<64x2xf32>
    %c0_78 = arith.constant 0 : index
    %c24 = arith.constant 24 : index
    %96 = vector.load %arg15[%c0_78, %c24] : memref<64x98xf32, #tpu.memory_space<vmem>>, vector<64x2xf32>
    tpu.vector_store %arg15[%c0_78, %c24], %95 {strides = array<i32>} : memref<64x98xf32, #tpu.memory_space<vmem>>, vector<64x2xf32>,
    %c1_79 = arith.constant 1 : index
    %c11_80 = arith.constant 11 : index
    %c0_81 = arith.constant 0 : index
    %97 = vector.load %arg14[%c1_79, %c11_80, %c0_81] : memref<14x19x2xf32, #tpu.memory_space<vmem>>, vector<8x8x2xf32>
    %98 = vector.shape_cast %97 : vector<8x8x2xf32> to vector<64x2xf32>
    %c0_82 = arith.constant 0 : index
    %c26 = arith.constant 26 : index
    %99 = vector.load %arg15[%c0_82, %c26] : memref<64x98xf32, #tpu.memory_space<vmem>>, vector<64x2xf32>
    tpu.vector_store %arg15[%c0_82, %c26], %98 {strides = array<i32>} : memref<64x98xf32, #tpu.memory_space<vmem>>, vector<64x2xf32>,
    %c2_83 = arith.constant 2 : index
    %c5_84 = arith.constant 5 : index
    %c0_85 = arith.constant 0 : index
    %100 = vector.load %arg14[%c2_83, %c5_84, %c0_85] : memref<14x19x2xf32, #tpu.memory_space<vmem>>, vector<8x8x2xf32>
    %101 = vector.shape_cast %100 : vector<8x8x2xf32> to vector<64x2xf32>
    %c0_86 = arith.constant 0 : index
    %c28 = arith.constant 28 : index
    %102 = vector.load %arg15[%c0_86, %c28] : memref<64x98xf32, #tpu.memory_space<vmem>>, vector<64x2xf32>
    tpu.vector_store %arg15[%c0_86, %c28], %101 {strides = array<i32>} : memref<64x98xf32, #tpu.memory_space<vmem>>, vector<64x2xf32>,
    %c2_87 = arith.constant 2 : index
    %c6_88 = arith.constant 6 : index
    %c0_89 = arith.constant 0 : index
    %103 = vector.load %arg14[%c2_87, %c6_88, %c0_89] : memref<14x19x2xf32, #tpu.memory_space<vmem>>, vector<8x8x2xf32>
    %104 = vector.shape_cast %103 : vector<8x8x2xf32> to vector<64x2xf32>
    %c0_90 = arith.constant 0 : index
    %c30 = arith.constant 30 : index
    %105 = vector.load %arg15[%c0_90, %c30] : memref<64x98xf32, #tpu.memory_space<vmem>>, vector<64x2xf32>
    tpu.vector_store %arg15[%c0_90, %c30], %104 {strides = array<i32>} : memref<64x98xf32, #tpu.memory_space<vmem>>, vector<64x2xf32>,
    %c2_91 = arith.constant 2 : index
    %c7_92 = arith.constant 7 : index
    %c0_93 = arith.constant 0 : index
    %106 = vector.load %arg14[%c2_91, %c7_92, %c0_93] : memref<14x19x2xf32, #tpu.memory_space<vmem>>, vector<8x8x2xf32>
    %107 = vector.shape_cast %106 : vector<8x8x2xf32> to vector<64x2xf32>
    %c0_94 = arith.constant 0 : index
    %c32 = arith.constant 32 : index
    %108 = vector.load %arg15[%c0_94, %c32] : memref<64x98xf32, #tpu.memory_space<vmem>>, vector<64x2xf32>
    tpu.vector_store %arg15[%c0_94, %c32], %107 {strides = array<i32>} : memref<64x98xf32, #tpu.memory_space<vmem>>, vector<64x2xf32>,
    %c2_95 = arith.constant 2 : index
    %c8_96 = arith.constant 8 : index
    %c0_97 = arith.constant 0 : index
    %109 = vector.load %arg14[%c2_95, %c8_96, %c0_97] : memref<14x19x2xf32, #tpu.memory_space<vmem>>, vector<8x8x2xf32>
    %110 = vector.shape_cast %109 : vector<8x8x2xf32> to vector<64x2xf32>
    %c0_98 = arith.constant 0 : index
    %c34 = arith.constant 34 : index
    %111 = vector.load %arg15[%c0_98, %c34] : memref<64x98xf32, #tpu.memory_space<vmem>>, vector<64x2xf32>
    tpu.vector_store %arg15[%c0_98, %c34], %110 {strides = array<i32>} : memref<64x98xf32, #tpu.memory_space<vmem>>, vector<64x2xf32>,
    %c2_99 = arith.constant 2 : index
    %c9_100 = arith.constant 9 : index
    %c0_101 = arith.constant 0 : index
    %112 = vector.load %arg14[%c2_99, %c9_100, %c0_101] : memref<14x19x2xf32, #tpu.memory_space<vmem>>, vector<8x8x2xf32>
    %113 = vector.shape_cast %112 : vector<8x8x2xf32> to vector<64x2xf32>
    %c0_102 = arith.constant 0 : index
    %c36 = arith.constant 36 : index
    %114 = vector.load %arg15[%c0_102, %c36] : memref<64x98xf32, #tpu.memory_space<vmem>>, vector<64x2xf32>
    tpu.vector_store %arg15[%c0_102, %c36], %113 {strides = array<i32>} : memref<64x98xf32, #tpu.memory_space<vmem>>, vector<64x2xf32>,
    %c2_103 = arith.constant 2 : index
    %c10_104 = arith.constant 10 : index
    %c0_105 = arith.constant 0 : index
    %115 = vector.load %arg14[%c2_103, %c10_104, %c0_105] : memref<14x19x2xf32, #tpu.memory_space<vmem>>, vector<8x8x2xf32>
    %116 = vector.shape_cast %115 : vector<8x8x2xf32> to vector<64x2xf32>
    %c0_106 = arith.constant 0 : index
    %c38 = arith.constant 38 : index
    %117 = vector.load %arg15[%c0_106, %c38] : memref<64x98xf32, #tpu.memory_space<vmem>>, vector<64x2xf32>
    tpu.vector_store %arg15[%c0_106, %c38], %116 {strides = array<i32>} : memref<64x98xf32, #tpu.memory_space<vmem>>, vector<64x2xf32>,
    %c2_107 = arith.constant 2 : index
    %c11_108 = arith.constant 11 : index
    %c0_109 = arith.constant 0 : index
    %118 = vector.load %arg14[%c2_107, %c11_108, %c0_109] : memref<14x19x2xf32, #tpu.memory_space<vmem>>, vector<8x8x2xf32>
    %119 = vector.shape_cast %118 : vector<8x8x2xf32> to vector<64x2xf32>
    %c0_110 = arith.constant 0 : index
    %c40 = arith.constant 40 : index
    %120 = vector.load %arg15[%c0_110, %c40] : memref<64x98xf32, #tpu.memory_space<vmem>>, vector<64x2xf32>
    tpu.vector_store %arg15[%c0_110, %c40], %119 {strides = array<i32>} : memref<64x98xf32, #tpu.memory_space<vmem>>, vector<64x2xf32>,
    %c3_111 = arith.constant 3 : index
    %c5_112 = arith.constant 5 : index
    %c0_113 = arith.constant 0 : index
    %121 = vector.load %arg14[%c3_111, %c5_112, %c0_113] : memref<14x19x2xf32, #tpu.memory_space<vmem>>, vector<8x8x2xf32>
    %122 = vector.shape_cast %121 : vector<8x8x2xf32> to vector<64x2xf32>
    %c0_114 = arith.constant 0 : index
    %c42 = arith.constant 42 : index
    %123 = vector.load %arg15[%c0_114, %c42] : memref<64x98xf32, #tpu.memory_space<vmem>>, vector<64x2xf32>
    tpu.vector_store %arg15[%c0_114, %c42], %122 {strides = array<i32>} : memref<64x98xf32, #tpu.memory_space<vmem>>, vector<64x2xf32>,
    %c3_115 = arith.constant 3 : index
    %c6_116 = arith.constant 6 : index
    %c0_117 = arith.constant 0 : index
    %124 = vector.load %arg14[%c3_115, %c6_116, %c0_117] : memref<14x19x2xf32, #tpu.memory_space<vmem>>, vector<8x8x2xf32>
    %125 = vector.shape_cast %124 : vector<8x8x2xf32> to vector<64x2xf32>
    %c0_118 = arith.constant 0 : index
    %c44 = arith.constant 44 : index
    %126 = vector.load %arg15[%c0_118, %c44] : memref<64x98xf32, #tpu.memory_space<vmem>>, vector<64x2xf32>
    tpu.vector_store %arg15[%c0_118, %c44], %125 {strides = array<i32>} : memref<64x98xf32, #tpu.memory_space<vmem>>, vector<64x2xf32>,
    %c3_119 = arith.constant 3 : index
    %c7_120 = arith.constant 7 : index
    %c0_121 = arith.constant 0 : index
    %127 = vector.load %arg14[%c3_119, %c7_120, %c0_121] : memref<14x19x2xf32, #tpu.memory_space<vmem>>, vector<8x8x2xf32>
    %128 = vector.shape_cast %127 : vector<8x8x2xf32> to vector<64x2xf32>
    %c0_122 = arith.constant 0 : index
    %c46 = arith.constant 46 : index
    %129 = vector.load %arg15[%c0_122, %c46] : memref<64x98xf32, #tpu.memory_space<vmem>>, vector<64x2xf32>
    tpu.vector_store %arg15[%c0_122, %c46], %128 {strides = array<i32>} : memref<64x98xf32, #tpu.memory_space<vmem>>, vector<64x2xf32>,
    %c3_123 = arith.constant 3 : index
    %c8_124 = arith.constant 8 : index
    %c0_125 = arith.constant 0 : index
    %130 = vector.load %arg14[%c3_123, %c8_124, %c0_125] : memref<14x19x2xf32, #tpu.memory_space<vmem>>, vector<8x8x2xf32>
    %131 = vector.shape_cast %130 : vector<8x8x2xf32> to vector<64x2xf32>
    %c0_126 = arith.constant 0 : index
    %c48 = arith.constant 48 : index
    %132 = vector.load %arg15[%c0_126, %c48] : memref<64x98xf32, #tpu.memory_space<vmem>>, vector<64x2xf32>
    tpu.vector_store %arg15[%c0_126, %c48], %131 {strides = array<i32>} : memref<64x98xf32, #tpu.memory_space<vmem>>, vector<64x2xf32>,
    %c3_127 = arith.constant 3 : index
    %c9_128 = arith.constant 9 : index
    %c0_129 = arith.constant 0 : index
    %133 = vector.load %arg14[%c3_127, %c9_128, %c0_129] : memref<14x19x2xf32, #tpu.memory_space<vmem>>, vector<8x8x2xf32>
    %134 = vector.shape_cast %133 : vector<8x8x2xf32> to vector<64x2xf32>
    %c0_130 = arith.constant 0 : index
    %c50 = arith.constant 50 : index
    %135 = vector.load %arg15[%c0_130, %c50] : memref<64x98xf32, #tpu.memory_space<vmem>>, vector<64x2xf32>
    tpu.vector_store %arg15[%c0_130, %c50], %134 {strides = array<i32>} : memref<64x98xf32, #tpu.memory_space<vmem>>, vector<64x2xf32>,
    %c3_131 = arith.constant 3 : index
    %c10_132 = arith.constant 10 : index
    %c0_133 = arith.constant 0 : index
    %136 = vector.load %arg14[%c3_131, %c10_132, %c0_133] : memref<14x19x2xf32, #tpu.memory_space<vmem>>, vector<8x8x2xf32>
    %137 = vector.shape_cast %136 : vector<8x8x2xf32> to vector<64x2xf32>
    %c0_134 = arith.constant 0 : index
    %c52 = arith.constant 52 : index
    %138 = vector.load %arg15[%c0_134, %c52] : memref<64x98xf32, #tpu.memory_space<vmem>>, vector<64x2xf32>
    tpu.vector_store %arg15[%c0_134, %c52], %137 {strides = array<i32>} : memref<64x98xf32, #tpu.memory_space<vmem>>, vector<64x2xf32>,
    %c3_135 = arith.constant 3 : index
    %c11_136 = arith.constant 11 : index
    %c0_137 = arith.constant 0 : index
    %139 = vector.load %arg14[%c3_135, %c11_136, %c0_137] : memref<14x19x2xf32, #tpu.memory_space<vmem>>, vector<8x8x2xf32>
    %140 = vector.shape_cast %139 : vector<8x8x2xf32> to vector<64x2xf32>
    %c0_138 = arith.constant 0 : index
    %c54 = arith.constant 54 : index
    %141 = vector.load %arg15[%c0_138, %c54] : memref<64x98xf32, #tpu.memory_space<vmem>>, vector<64x2xf32>
    tpu.vector_store %arg15[%c0_138, %c54], %140 {strides = array<i32>} : memref<64x98xf32, #tpu.memory_space<vmem>>, vector<64x2xf32>,
    %c4_139 = arith.constant 4 : index
    %c5_140 = arith.constant 5 : index
    %c0_141 = arith.constant 0 : index
    %142 = vector.load %arg14[%c4_139, %c5_140, %c0_141] : memref<14x19x2xf32, #tpu.memory_space<vmem>>, vector<8x8x2xf32>
    %143 = vector.shape_cast %142 : vector<8x8x2xf32> to vector<64x2xf32>
    %c0_142 = arith.constant 0 : index
    %c56 = arith.constant 56 : index
    %144 = vector.load %arg15[%c0_142, %c56] : memref<64x98xf32, #tpu.memory_space<vmem>>, vector<64x2xf32>
    tpu.vector_store %arg15[%c0_142, %c56], %143 {strides = array<i32>} : memref<64x98xf32, #tpu.memory_space<vmem>>, vector<64x2xf32>,
    %c4_143 = arith.constant 4 : index
    %c6_144 = arith.constant 6 : index
    %c0_145 = arith.constant 0 : index
    %145 = vector.load %arg14[%c4_143, %c6_144, %c0_145] : memref<14x19x2xf32, #tpu.memory_space<vmem>>, vector<8x8x2xf32>
    %146 = vector.shape_cast %145 : vector<8x8x2xf32> to vector<64x2xf32>
    %c0_146 = arith.constant 0 : index
    %c58 = arith.constant 58 : index
    %147 = vector.load %arg15[%c0_146, %c58] : memref<64x98xf32, #tpu.memory_space<vmem>>, vector<64x2xf32>
    tpu.vector_store %arg15[%c0_146, %c58], %146 {strides = array<i32>} : memref<64x98xf32, #tpu.memory_space<vmem>>, vector<64x2xf32>,
    %c4_147 = arith.constant 4 : index
    %c7_148 = arith.constant 7 : index
    %c0_149 = arith.constant 0 : index
    %148 = vector.load %arg14[%c4_147, %c7_148, %c0_149] : memref<14x19x2xf32, #tpu.memory_space<vmem>>, vector<8x8x2xf32>
    %149 = vector.shape_cast %148 : vector<8x8x2xf32> to vector<64x2xf32>
    %c0_150 = arith.constant 0 : index
    %c60 = arith.constant 60 : index
    %150 = vector.load %arg15[%c0_150, %c60] : memref<64x98xf32, #tpu.memory_space<vmem>>, vector<64x2xf32>
    tpu.vector_store %arg15[%c0_150, %c60], %149 {strides = array<i32>} : memref<64x98xf32, #tpu.memory_space<vmem>>, vector<64x2xf32>,
    %c4_151 = arith.constant 4 : index
    %c8_152 = arith.constant 8 : index
    %c0_153 = arith.constant 0 : index
    %151 = vector.load %arg14[%c4_151, %c8_152, %c0_153] : memref<14x19x2xf32, #tpu.memory_space<vmem>>, vector<8x8x2xf32>
    %152 = vector.shape_cast %151 : vector<8x8x2xf32> to vector<64x2xf32>
    %c0_154 = arith.constant 0 : index
    %c62 = arith.constant 62 : index
    %153 = vector.load %arg15[%c0_154, %c62] : memref<64x98xf32, #tpu.memory_space<vmem>>, vector<64x2xf32>
    tpu.vector_store %arg15[%c0_154, %c62], %152 {strides = array<i32>} : memref<64x98xf32, #tpu.memory_space<vmem>>, vector<64x2xf32>,
    %c4_155 = arith.constant 4 : index
    %c9_156 = arith.constant 9 : index
    %c0_157 = arith.constant 0 : index
    %154 = vector.load %arg14[%c4_155, %c9_156, %c0_157] : memref<14x19x2xf32, #tpu.memory_space<vmem>>, vector<8x8x2xf32>
    %155 = vector.shape_cast %154 : vector<8x8x2xf32> to vector<64x2xf32>
    %c0_158 = arith.constant 0 : index
    %c64 = arith.constant 64 : index
    %156 = vector.load %arg15[%c0_158, %c64] : memref<64x98xf32, #tpu.memory_space<vmem>>, vector<64x2xf32>
    tpu.vector_store %arg15[%c0_158, %c64], %155 {strides = array<i32>} : memref<64x98xf32, #tpu.memory_space<vmem>>, vector<64x2xf32>,
    %c4_159 = arith.constant 4 : index
    %c10_160 = arith.constant 10 : index
    %c0_161 = arith.constant 0 : index
    %157 = vector.load %arg14[%c4_159, %c10_160, %c0_161] : memref<14x19x2xf32, #tpu.memory_space<vmem>>, vector<8x8x2xf32>
    %158 = vector.shape_cast %157 : vector<8x8x2xf32> to vector<64x2xf32>
    %c0_162 = arith.constant 0 : index
    %c66 = arith.constant 66 : index
    %159 = vector.load %arg15[%c0_162, %c66] : memref<64x98xf32, #tpu.memory_space<vmem>>, vector<64x2xf32>
    tpu.vector_store %arg15[%c0_162, %c66], %158 {strides = array<i32>} : memref<64x98xf32, #tpu.memory_space<vmem>>, vector<64x2xf32>,
    %c4_163 = arith.constant 4 : index
    %c11_164 = arith.constant 11 : index
    %c0_165 = arith.constant 0 : index
    %160 = vector.load %arg14[%c4_163, %c11_164, %c0_165] : memref<14x19x2xf32, #tpu.memory_space<vmem>>, vector<8x8x2xf32>
    %161 = vector.shape_cast %160 : vector<8x8x2xf32> to vector<64x2xf32>
    %c0_166 = arith.constant 0 : index
    %c68 = arith.constant 68 : index
    %162 = vector.load %arg15[%c0_166, %c68] : memref<64x98xf32, #tpu.memory_space<vmem>>, vector<64x2xf32>
    tpu.vector_store %arg15[%c0_166, %c68], %161 {strides = array<i32>} : memref<64x98xf32, #tpu.memory_space<vmem>>, vector<64x2xf32>,
    %c5_167 = arith.constant 5 : index
    %c5_168 = arith.constant 5 : index
    %c0_169 = arith.constant 0 : index
    %163 = vector.load %arg14[%c5_167, %c5_168, %c0_169] : memref<14x19x2xf32, #tpu.memory_space<vmem>>, vector<8x8x2xf32>
    %164 = vector.shape_cast %163 : vector<8x8x2xf32> to vector<64x2xf32>
    %c0_170 = arith.constant 0 : index
    %c70 = arith.constant 70 : index
    %165 = vector.load %arg15[%c0_170, %c70] : memref<64x98xf32, #tpu.memory_space<vmem>>, vector<64x2xf32>
    tpu.vector_store %arg15[%c0_170, %c70], %164 {strides = array<i32>} : memref<64x98xf32, #tpu.memory_space<vmem>>, vector<64x2xf32>,
    %c5_171 = arith.constant 5 : index
    %c6_172 = arith.constant 6 : index
    %c0_173 = arith.constant 0 : index
    %166 = vector.load %arg14[%c5_171, %c6_172, %c0_173] : memref<14x19x2xf32, #tpu.memory_space<vmem>>, vector<8x8x2xf32>
    %167 = vector.shape_cast %166 : vector<8x8x2xf32> to vector<64x2xf32>
    %c0_174 = arith.constant 0 : index
    %c72 = arith.constant 72 : index
    %168 = vector.load %arg15[%c0_174, %c72] : memref<64x98xf32, #tpu.memory_space<vmem>>, vector<64x2xf32>
    tpu.vector_store %arg15[%c0_174, %c72], %167 {strides = array<i32>} : memref<64x98xf32, #tpu.memory_space<vmem>>, vector<64x2xf32>,
    %c5_175 = arith.constant 5 : index
    %c7_176 = arith.constant 7 : index
    %c0_177 = arith.constant 0 : index
    %169 = vector.load %arg14[%c5_175, %c7_176, %c0_177] : memref<14x19x2xf32, #tpu.memory_space<vmem>>, vector<8x8x2xf32>
    %170 = vector.shape_cast %169 : vector<8x8x2xf32> to vector<64x2xf32>
    %c0_178 = arith.constant 0 : index
    %c74 = arith.constant 74 : index
    %171 = vector.load %arg15[%c0_178, %c74] : memref<64x98xf32, #tpu.memory_space<vmem>>, vector<64x2xf32>
    tpu.vector_store %arg15[%c0_178, %c74], %170 {strides = array<i32>} : memref<64x98xf32, #tpu.memory_space<vmem>>, vector<64x2xf32>,
    %c5_179 = arith.constant 5 : index
    %c8_180 = arith.constant 8 : index
    %c0_181 = arith.constant 0 : index
    %172 = vector.load %arg14[%c5_179, %c8_180, %c0_181] : memref<14x19x2xf32, #tpu.memory_space<vmem>>, vector<8x8x2xf32>
    %173 = vector.shape_cast %172 : vector<8x8x2xf32> to vector<64x2xf32>
    %c0_182 = arith.constant 0 : index
    %c76 = arith.constant 76 : index
    %174 = vector.load %arg15[%c0_182, %c76] : memref<64x98xf32, #tpu.memory_space<vmem>>, vector<64x2xf32>
    tpu.vector_store %arg15[%c0_182, %c76], %173 {strides = array<i32>} : memref<64x98xf32, #tpu.memory_space<vmem>>, vector<64x2xf32>,
    %c5_183 = arith.constant 5 : index
    %c9_184 = arith.constant 9 : index
    %c0_185 = arith.constant 0 : index
    %175 = vector.load %arg14[%c5_183, %c9_184, %c0_185] : memref<14x19x2xf32, #tpu.memory_space<vmem>>, vector<8x8x2xf32>
    %176 = vector.shape_cast %175 : vector<8x8x2xf32> to vector<64x2xf32>
    %c0_186 = arith.constant 0 : index
    %c78 = arith.constant 78 : index
    %177 = vector.load %arg15[%c0_186, %c78] : memref<64x98xf32, #tpu.memory_space<vmem>>, vector<64x2xf32>
    tpu.vector_store %arg15[%c0_186, %c78], %176 {strides = array<i32>} : memref<64x98xf32, #tpu.memory_space<vmem>>, vector<64x2xf32>,
    %c5_187 = arith.constant 5 : index
    %c10_188 = arith.constant 10 : index
    %c0_189 = arith.constant 0 : index
    %178 = vector.load %arg14[%c5_187, %c10_188, %c0_189] : memref<14x19x2xf32, #tpu.memory_space<vmem>>, vector<8x8x2xf32>
    %179 = vector.shape_cast %178 : vector<8x8x2xf32> to vector<64x2xf32>
    %c0_190 = arith.constant 0 : index
    %c80 = arith.constant 80 : index
    %180 = vector.load %arg15[%c0_190, %c80] : memref<64x98xf32, #tpu.memory_space<vmem>>, vector<64x2xf32>
    tpu.vector_store %arg15[%c0_190, %c80], %179 {strides = array<i32>} : memref<64x98xf32, #tpu.memory_space<vmem>>, vector<64x2xf32>,
    %c5_191 = arith.constant 5 : index
    %c11_192 = arith.constant 11 : index
    %c0_193 = arith.constant 0 : index
    %181 = vector.load %arg14[%c5_191, %c11_192, %c0_193] : memref<14x19x2xf32, #tpu.memory_space<vmem>>, vector<8x8x2xf32>
    %182 = vector.shape_cast %181 : vector<8x8x2xf32> to vector<64x2xf32>
    %c0_194 = arith.constant 0 : index
    %c82 = arith.constant 82 : index
    %183 = vector.load %arg15[%c0_194, %c82] : memref<64x98xf32, #tpu.memory_space<vmem>>, vector<64x2xf32>
    tpu.vector_store %arg15[%c0_194, %c82], %182 {strides = array<i32>} : memref<64x98xf32, #tpu.memory_space<vmem>>, vector<64x2xf32>,
    %c6_195 = arith.constant 6 : index
    %c5_196 = arith.constant 5 : index
    %c0_197 = arith.constant 0 : index
    %184 = vector.load %arg14[%c6_195, %c5_196, %c0_197] : memref<14x19x2xf32, #tpu.memory_space<vmem>>, vector<8x8x2xf32>
    %185 = vector.shape_cast %184 : vector<8x8x2xf32> to vector<64x2xf32>
    %c0_198 = arith.constant 0 : index
    %c84 = arith.constant 84 : index
    %186 = vector.load %arg15[%c0_198, %c84] : memref<64x98xf32, #tpu.memory_space<vmem>>, vector<64x2xf32>
    tpu.vector_store %arg15[%c0_198, %c84], %185 {strides = array<i32>} : memref<64x98xf32, #tpu.memory_space<vmem>>, vector<64x2xf32>,
    %c6_199 = arith.constant 6 : index
    %c6_200 = arith.constant 6 : index
    %c0_201 = arith.constant 0 : index
    %187 = vector.load %arg14[%c6_199, %c6_200, %c0_201] : memref<14x19x2xf32, #tpu.memory_space<vmem>>, vector<8x8x2xf32>
    %188 = vector.shape_cast %187 : vector<8x8x2xf32> to vector<64x2xf32>
    %c0_202 = arith.constant 0 : index
    %c86 = arith.constant 86 : index
    %189 = vector.load %arg15[%c0_202, %c86] : memref<64x98xf32, #tpu.memory_space<vmem>>, vector<64x2xf32>
    tpu.vector_store %arg15[%c0_202, %c86], %188 {strides = array<i32>} : memref<64x98xf32, #tpu.memory_space<vmem>>, vector<64x2xf32>,
    %c6_203 = arith.constant 6 : index
    %c7_204 = arith.constant 7 : index
    %c0_205 = arith.constant 0 : index
    %190 = vector.load %arg14[%c6_203, %c7_204, %c0_205] : memref<14x19x2xf32, #tpu.memory_space<vmem>>, vector<8x8x2xf32>
    %191 = vector.shape_cast %190 : vector<8x8x2xf32> to vector<64x2xf32>
    %c0_206 = arith.constant 0 : index
    %c88 = arith.constant 88 : index
    %192 = vector.load %arg15[%c0_206, %c88] : memref<64x98xf32, #tpu.memory_space<vmem>>, vector<64x2xf32>
    tpu.vector_store %arg15[%c0_206, %c88], %191 {strides = array<i32>} : memref<64x98xf32, #tpu.memory_space<vmem>>, vector<64x2xf32>,
    %c6_207 = arith.constant 6 : index
    %c8_208 = arith.constant 8 : index
    %c0_209 = arith.constant 0 : index
    %193 = vector.load %arg14[%c6_207, %c8_208, %c0_209] : memref<14x19x2xf32, #tpu.memory_space<vmem>>, vector<8x8x2xf32>
    %194 = vector.shape_cast %193 : vector<8x8x2xf32> to vector<64x2xf32>
    %c0_210 = arith.constant 0 : index
    %c90 = arith.constant 90 : index
    %195 = vector.load %arg15[%c0_210, %c90] : memref<64x98xf32, #tpu.memory_space<vmem>>, vector<64x2xf32>
    tpu.vector_store %arg15[%c0_210, %c90], %194 {strides = array<i32>} : memref<64x98xf32, #tpu.memory_space<vmem>>, vector<64x2xf32>,
    %c6_211 = arith.constant 6 : index
    %c9_212 = arith.constant 9 : index
    %c0_213 = arith.constant 0 : index
    %196 = vector.load %arg14[%c6_211, %c9_212, %c0_213] : memref<14x19x2xf32, #tpu.memory_space<vmem>>, vector<8x8x2xf32>
    %197 = vector.shape_cast %196 : vector<8x8x2xf32> to vector<64x2xf32>
    %c0_214 = arith.constant 0 : index
    %c92 = arith.constant 92 : index
    %198 = vector.load %arg15[%c0_214, %c92] : memref<64x98xf32, #tpu.memory_space<vmem>>, vector<64x2xf32>
    tpu.vector_store %arg15[%c0_214, %c92], %197 {strides = array<i32>} : memref<64x98xf32, #tpu.memory_space<vmem>>, vector<64x2xf32>,
    %c6_215 = arith.constant 6 : index
    %c10_216 = arith.constant 10 : index
    %c0_217 = arith.constant 0 : index
    %199 = vector.load %arg14[%c6_215, %c10_216, %c0_217] : memref<14x19x2xf32, #tpu.memory_space<vmem>>, vector<8x8x2xf32>
    %200 = vector.shape_cast %199 : vector<8x8x2xf32> to vector<64x2xf32>
    %c0_218 = arith.constant 0 : index
    %c94 = arith.constant 94 : index
    %201 = vector.load %arg15[%c0_218, %c94] : memref<64x98xf32, #tpu.memory_space<vmem>>, vector<64x2xf32>
    tpu.vector_store %arg15[%c0_218, %c94], %200 {strides = array<i32>} : memref<64x98xf32, #tpu.memory_space<vmem>>, vector<64x2xf32>,
    %c6_219 = arith.constant 6 : index
    %c11_220 = arith.constant 11 : index
    %c0_221 = arith.constant 0 : index
    %202 = vector.load %arg14[%c6_219, %c11_220, %c0_221] : memref<14x19x2xf32, #tpu.memory_space<vmem>>, vector<8x8x2xf32>
    %203 = vector.shape_cast %202 : vector<8x8x2xf32> to vector<64x2xf32>
    %c0_222 = arith.constant 0 : index
    %c96 = arith.constant 96 : index
    %204 = vector.load %arg15[%c0_222, %c96] : memref<64x98xf32, #tpu.memory_space<vmem>>, vector<64x2xf32>
    tpu.vector_store %arg15[%c0_222, %c96], %203 {strides = array<i32>} : memref<64x98xf32, #tpu.memory_space<vmem>>, vector<64x2xf32>,
    %c0_223 = arith.constant 0 : index
    %c0_224 = arith.constant 0 : index
    %205 = vector.load %arg15[%c0_223, %c0_224] : memref<64x98xf32, #tpu.memory_space<vmem>>, vector<64x98xf32>
    %c0_225 = arith.constant 0 : index
    %c0_226 = arith.constant 0 : index
    %206 = vector.load %arg7[%c0_225, %c0_226] : memref<98x16xf32, #tpu.memory_space<vmem>>, vector<98x16xf32>
    %cst_227 = arith.constant dense<0.000000e+00> : vector<64x16xf32>
    %207 = tpu.matmul %205, %206, %cst_227 {dimension_numbers = #tpu.dot_dimension_numbers<[1], [0], [0], [1], [0, 0, 1, 1], [], []>} : vector<64x98xf32>, vector<98x16xf32>, vector<64x16xf32> -> vector<64x16xf32>
    %c0_228 = arith.constant 0 : index
    %c0_229 = arith.constant 0 : index
    %208 = vector.load %arg8[%c0_228, %c0_229] : memref<1x16xf32, #tpu.memory_space<vmem>>, vector<1x16xf32>
    %209 = vector.broadcast %208 : vector<1x16xf32> to vector<64x16xf32>
    %210 = arith.addf %207, %209 : vector<64x16xf32>
    %211 = arith.negf %210 : vector<64x16xf32>
    %212 = math.exp %211 : vector<64x16xf32>
    %cst_230 = arith.constant 1.000000e+00 : f32
    %213 = vector.broadcast %cst_230 : f32 to vector<64x16xf32>
    %214 = arith.addf %213, %212 : vector<64x16xf32>
    %215 = arith.divf %213, %214 : vector<64x16xf32>
    %216 = arith.mulf %210, %215 : vector<64x16xf32>
    %217 = arith.negf %216 : vector<64x16xf32>
    %218 = math.exp %217 : vector<64x16xf32>
    %cst_231 = arith.constant 1.000000e+00 : f32
    %219 = vector.broadcast %cst_231 : f32 to vector<64x16xf32>
    %220 = arith.addf %219, %218 : vector<64x16xf32>
    %221 = arith.divf %219, %220 : vector<64x16xf32>
    %222 = arith.mulf %221, %45 : vector<64x16xf32>
    %223 = vector.shape_cast %222 : vector<64x16xf32> to vector<1x64x16xf32>
    %cst_232 = arith.constant dense<0.000000e+00> : vector<1xf32>
    %224 = vector.multi_reduction <add>, %223, %cst_232 [1, 2] : vector<1x64x16xf32> to vector<1xf32>
    %225 = vector.shape_cast %224 : vector<1xf32> to vector<1x1x1xf32>
    %226 = vector.extract %225[0, 0, 0] : f32 from vector<1x1x1xf32>
    %cst_233 = arith.constant 1.024000e+03 : f32
    %227 = arith.divf %226, %cst_233 : f32
    %228 = vector.broadcast %227 : f32 to vector<64x16xf32>
    %229 = arith.subf %222, %228 : vector<64x16xf32>
    %230 = arith.mulf %229, %229 : vector<64x16xf32>
    %231 = vector.shape_cast %230 : vector<64x16xf32> to vector<1x64x16xf32>
    %cst_234 = arith.constant dense<0.000000e+00> : vector<1xf32>
    %232 = vector.multi_reduction <add>, %231, %cst_234 [1, 2] : vector<1x64x16xf32> to vector<1xf32>
    %233 = vector.shape_cast %232 : vector<1xf32> to vector<1x1x1xf32>
    %234 = vector.extract %233[0, 0, 0] : f32 from vector<1x1x1xf32>
    %cst_235 = arith.constant 1.024000e+03 : f32
    %235 = arith.divf %234, %cst_235 : f32
    %236 = vector.broadcast %227 : f32 to vector<64x16xf32>
    %237 = arith.subf %222, %236 : vector<64x16xf32>
    %cst_236 = arith.constant 9.99999974E-6 : f32
    %238 = arith.addf %235, %cst_236 : f32
    %239 = math.rsqrt %238 : f32
    %240 = vector.broadcast %239 : f32 to vector<64x16xf32>
    %241 = arith.mulf %237, %240 : vector<64x16xf32>
    %c0_237 = arith.constant 0 : index
    %c0_238 = arith.constant 0 : index
    %242 = vector.load %arg9[%c0_237, %c0_238] : memref<64x16xf32, #tpu.memory_space<vmem>>, vector<64x16xf32>
    %243 = arith.mulf %241, %242 : vector<64x16xf32>
    %c0_239 = arith.constant 0 : index
    %c0_240 = arith.constant 0 : index
    %244 = vector.load %arg10[%c0_239, %c0_240] : memref<64x16xf32, #tpu.memory_space<vmem>>, vector<64x16xf32>
    %245 = arith.addf %243, %244 : vector<64x16xf32>
    %c0_241 = arith.constant 0 : index
    %c0_242 = arith.constant 0 : index
    %246 = vector.load %arg11[%c0_241, %c0_242] : memref<16x8xf32, #tpu.memory_space<vmem>>, vector<16x8xf32>
    %cst_243 = arith.constant dense<0.000000e+00> : vector<64x8xf32>
    %247 = tpu.matmul %245, %246, %cst_243 {dimension_numbers = #tpu.dot_dimension_numbers<[1], [0], [0], [1], [0, 0, 1, 1], [], []>} : vector<64x16xf32>, vector<16x8xf32>, vector<64x8xf32> -> vector<64x8xf32>
    %c0_244 = arith.constant 0 : index
    %c0_245 = arith.constant 0 : index
    %248 = vector.load %arg12[%c0_244, %c0_245] : memref<1x8xf32, #tpu.memory_space<vmem>>, vector<1x8xf32>
    %249 = vector.broadcast %248 : vector<1x8xf32> to vector<64x8xf32>
    %250 = arith.addf %247, %249 : vector<64x8xf32>
    %251 = arith.negf %250 : vector<64x8xf32>
    %252 = math.exp %251 : vector<64x8xf32>
    %cst_246 = arith.constant 1.000000e+00 : f32
    %253 = vector.broadcast %cst_246 : f32 to vector<64x8xf32>
    %254 = arith.addf %253, %252 : vector<64x8xf32>
    %255 = arith.divf %253, %254 : vector<64x8xf32>
    %256 = arith.mulf %250, %255 : vector<64x8xf32>
    %c0_247 = arith.constant 0 : index
    %c0_248 = arith.constant 0 : index
    %c0_249 = arith.constant 0 : index
    %257 = vector.load %arg13[%c0_247, %c0_248, %c0_249] : memref<1x64x8xf32, #tpu.memory_space<vmem>>, vector<1x64x8xf32>
    %258 = vector.shape_cast %257 : vector<1x64x8xf32> to vector<64x8xf32>
    %259 = vector.shape_cast %256 : vector<64x8xf32> to vector<1x64x8xf32>
    tpu.vector_store %arg13[%c0_247, %c0_248, %c0_249], %259 {strides = array<i32>} : memref<1x64x8xf32, #tpu.memory_space<vmem>>, vector<1x64x8xf32>,
    return
  }
  func.func @transform_0(%arg0: i32) -> i32 {
    %c0_i32 = arith.constant 0 : i32
    %c0_i32_0 = arith.constant 0 : i32
    return %c0_i32 : i32
  }
  func.func @transform_1(%arg0: i32) -> (i32, i32, i32, i32) {
    %c0_i32 = arith.constant 0 : i32
    %c0_i32_0 = arith.constant 0 : i32
    %c0_i32_1 = arith.constant 0 : i32
    %c0_i32_2 = arith.constant 0 : i32
    return %arg0, %c0_i32, %c0_i32_0, %c0_i32_1 : i32, i32, i32, i32
  }
  func.func @transform_2(%arg0: i32) -> (i32, i32, i32, i32) {
    %c0_i32 = arith.constant 0 : i32
    %c0_i32_0 = arith.constant 0 : i32
    %c0_i32_1 = arith.constant 0 : i32
    %c0_i32_2 = arith.constant 0 : i32
    return %arg0, %c0_i32, %c0_i32_0, %c0_i32_1 : i32, i32, i32, i32
  }
  func.func @transform_3(%arg0: i32) -> (i32, i32) {
    %c0_i32 = arith.constant 0 : i32
    %c0_i32_0 = arith.constant 0 : i32
    %c0_i32_1 = arith.constant 0 : i32
    return %c0_i32, %c0_i32_0 : i32, i32
  }
  func.func @transform_4(%arg0: i32) -> (i32, i32) {
    %c0_i32 = arith.constant 0 : i32
    %c0_i32_0 = arith.constant 0 : i32
    %c0_i32_1 = arith.constant 0 : i32
    return %c0_i32, %c0_i32_0 : i32, i32
  }
  func.func @transform_5(%arg0: i32) -> (i32, i32) {
    %c0_i32 = arith.constant 0 : i32
    %c0_i32_0 = arith.constant 0 : i32
    %c0_i32_1 = arith.constant 0 : i32
    return %c0_i32, %c0_i32_0 : i32, i32
  }
  func.func @transform_6(%arg0: i32) -> (i32, i32) {
    %c0_i32 = arith.constant 0 : i32
    %c0_i32_0 = arith.constant 0 : i32
    %c0_i32_1 = arith.constant 0 : i32
    return %c0_i32, %c0_i32_0 : i32, i32
  }
  func.func @transform_7(%arg0: i32) -> (i32, i32) {
    %c0_i32 = arith.constant 0 : i32
    %c0_i32_0 = arith.constant 0 : i32
    %c0_i32_1 = arith.constant 0 : i32
    return %c0_i32, %c0_i32_0 : i32, i32
  }
  func.func @transform_8(%arg0: i32) -> (i32, i32) {
    %c0_i32 = arith.constant 0 : i32
    %c0_i32_0 = arith.constant 0 : i32
    %c0_i32_1 = arith.constant 0 : i32
    return %c0_i32, %c0_i32_0 : i32, i32
  }
  func.func @transform_9(%arg0: i32) -> (i32, i32) {
    %c0_i32 = arith.constant 0 : i32
    %c0_i32_0 = arith.constant 0 : i32
    %c0_i32_1 = arith.constant 0 : i32
    return %c0_i32, %c0_i32_0 : i32, i32
  }
  func.func @transform_10(%arg0: i32) -> (i32, i32) {
    %c0_i32 = arith.constant 0 : i32
    %c0_i32_0 = arith.constant 0 : i32
    %c0_i32_1 = arith.constant 0 : i32
    return %c0_i32, %c0_i32_0 : i32, i32
  }
  func.func @transform_11(%arg0: i32) -> (i32, i32) {
    %c0_i32 = arith.constant 0 : i32
    %c0_i32_0 = arith.constant 0 : i32
    %c0_i32_1 = arith.constant 0 : i32
    return %c0_i32, %c0_i32_0 : i32, i32
  }
  func.func @transform_12(%arg0: i32) -> (i32, i32, i32) {
    %c0_i32 = arith.constant 0 : i32
    %c0_i32_0 = arith.constant 0 : i32
    %c0_i32_1 = arith.constant 0 : i32
    return %arg0, %c0_i32, %c0_i32_0 : i32, i32, i32
  }
}

</mosaic_0001>

<llo_original>
// kernel: tpu_custom_call.1
$region0: #{tpu_custom_call.1}
  #allocation0 [shape = 'u32[]', space=smem, size = 0x4, offset = 0x4, fixed_abs, tag = 'smem constant byte address 0x4 - core index']
  #allocation1 [shape = 'u32[144,128]{1,0:T(1,128)}', space=vmem, size = 0x12000, scoped, tag = 'internal scratch']
  #allocation2 [shape = 'f32[14,19,2]{2,1,0:T(8,128)}', space=vmem, size = 0x2a000, scoped, tag = 'scratch operand']
  #allocation3 [shape = 'f32[64,98]{1,0:T(8,128)}', space=vmem, size = 0x8000, scoped, tag = 'scratch operand']
  %s0 = inlined_call_operand.vmem [shape: f32[2], index: 0, kind: input, shape index: {}]
  %s1 = inlined_call_operand.vmem [shape: f32[2,8,8,16], index: 1, kind: input, shape index: {}]
  %s2 = inlined_call_operand.vmem [shape: f32[2,8,8,16], index: 2, kind: input, shape index: {}]
  %s3 = inlined_call_operand.hbm [shape: f32[16,16], index: 3, kind: input, shape index: {}]
  %s4 = inlined_call_operand.hbm [shape: f32[16,16], index: 4, kind: input, shape index: {}]
  %s5 = inlined_call_operand.vmem [shape: f32[1,16], index: 5, kind: input, shape index: {}]
  %s6 = inlined_call_operand.vmem [shape: f32[98,16], index: 6, kind: input, shape index: {}]
  %s7 = inlined_call_operand.vmem [shape: f32[1,16], index: 7, kind: input, shape index: {}]
  %s8 = inlined_call_operand.vmem [shape: f32[64,16], index: 8, kind: input, shape index: {}]
  %s9 = inlined_call_operand.vmem [shape: f32[64,16], index: 9, kind: input, shape index: {}]
  %s10 = inlined_call_operand.vmem [shape: f32[16,8], index: 10, kind: input, shape index: {}]
  %s11 = inlined_call_operand.vmem [shape: f32[1,8], index: 11, kind: input, shape index: {}]
  %s12 = inlined_call_operand.vmem [shape: f32[2,64,8], index: 12, kind: output, shape index: {}]
  %s13 = sld [smem:[#allocation0]]
  $region93: #{tpu_custom_call.1} parent=0
    _
  %s15 = ssub.s32 1, %s13
  %s16 = scalar_select 0, %s15, %s13
  $region1: #{tpu_custom_call.1} parent=0
    #allocation4 [shape = 'u8[512]{0}', space=smem, size = 0x200, scoped, tag = 'input window, operand 0, single buffered']
    #allocation5 [shape = 's32[2]{0}', space=sflag, size = 0x8, scoped, tag = 'scoped memory for tpu_custom_call.1']
    #allocation6 [shape = 's32[2]{0}', space=sflag, size = 0x8, scoped, tag = 'scoped memory for tpu_custom_call.1']
    #allocation7 [shape = 'u8[8192]{0}', space=vmem, size = 0x2000, scoped, tag = 'input window, operand 3, single buffered']
    #allocation8 [shape = 'u8[8192]{0}', space=vmem, size = 0x2000, scoped, tag = 'input window, operand 4, single buffered']
    #allocation9 [shape = 's32[1]{0}', space=sflag, size = 0x4, scoped, tag = 'scoped memory for tpu_custom_call.1']
    %17 = vsyncpa [#allocation6], 0
    %18 = vsyncpa [#allocation5], 0
    %19 = vsyncpa [#allocation9], 0
    loop: start=0, step=1, limit=4
    $region2: #{tpu_custom_call.1} parent=1 // loop_pre_header
      _
    $region3: #{tpu_custom_call.1} parent=1 // loop_header
      %s21 = sphi 0, %s25
      %p22 = scmp.ge.s32.totalorder %s21, 4
      %s29 = sphi 0, %s29
      %s31 = sphi 0, %s29
      %s32 = sphi 0, %s31
      %s46 = sphi 0, %s32
      %s52 = sphi 0, %s54
      %s55 = sphi 0, %s52
      %s56 = sphi 0, %s55
      %s72 = sphi 0, %s56
      %s78 = sphi 0, %s80
      %s81 = sphi 0, %s78
      %s82 = sphi 0, %s81
      %s98 = sphi 0, %s82
      %s102 = sphi 0, %s102
      %s104 = sphi 0, %s102
      %s105 = sphi 0, %s104
      %s119 = sphi 0, %s105
      %s123 = sphi 0, %s123
      %s125 = sphi 0, %s123
      %s126 = sphi 0, %s125
      %s140 = sphi 0, %s126
      %s144 = sphi 0, %s144
      %s146 = sphi 0, %s144
      %s147 = sphi 0, %s146
      %s161 = sphi 0, %s147
      %s165 = sphi 0, %s165
      %s167 = sphi 0, %s165
      %s168 = sphi 0, %s167
      %s182 = sphi 0, %s168
      %s186 = sphi 0, %s186
      %s188 = sphi 0, %s186
      %s189 = sphi 0, %s188
      %s203 = sphi 0, %s189
      %s207 = sphi 0, %s207
      %s209 = sphi 0, %s207
      %s210 = sphi 0, %s209
      %s224 = sphi 0, %s210
      %s228 = sphi 0, %s228
      %s230 = sphi 0, %s228
      %s231 = sphi 0, %s230
      %s245 = sphi 0, %s231
      %s249 = sphi 0, %s249
      %s251 = sphi 0, %s249
      %s252 = sphi 0, %s251
      %s266 = sphi 0, %s252
      %s270 = sphi 0, %s270
      %s272 = sphi 0, %s270
      %s273 = sphi 0, %s272
      %s287 = sphi 0, %s273
      %s293 = sphi 0, %s295
      %s296 = sphi 0, %s293
      %s297 = sphi 0, %s296
      %s313 = sphi 0, %s297
    $region4: #{tpu_custom_call.1} parent=1 // loop_header_branch
      %24 = sbr.rel (%p22) target = $region8
    $region5: #{tpu_custom_call.1} parent=1 // loop_body
      %s26 = ssub.s32 %s21, 1
      %s27 = ssub.s32 %s21, 2
      %s28 = sadd.s32 %s21, 1
      %s30 = sadd.s32 %s29, 1
      %p33 = scmp.eq.s32.totalorder %s21, 1
      %p34 = scmp.ne.s32.totalorder %s29, %s31
      %p35 = scmp.eq.s32.totalorder %s21, 0
      %p36 = por %p34, %p35
      %p37 = scmp.ne.s32.totalorder %s29, %s31
      %p38 = scmp.eq.s32.totalorder %s26, 1
      %p39 = por %p37, %p38
      %p40 = scmp.ne.s32.totalorder %s31, %s32
      %p41 = scmp.eq.s32.totalorder %s26, 0
      %p42 = por %p40, %p41
      %p43 = scmp.ne.s32.totalorder %s31, %s32
      %p44 = scmp.eq.s32.totalorder %s27, 1
      %p45 = por %p43, %p44
      %p47 = scmp.ne.s32.totalorder %s32, %s46
      %p48 = scmp.eq.s32.totalorder %s27, 0
      %p49 = por %p47, %p48
      %s50 = ssub.s32 %s21, %s28
      %p51 = scmp.eq.s32.totalorder %s50, 0
      %s53 = sadd.s32 %s52, 1
      %s54 = scalar_select %p51, %s52, %s53
      %p57 = pneg %p51
      %p58 = scmp.eq.s32.totalorder %s21, 1
      %p59 = por %p57, %p58
      %p60 = scmp.ne.s32.totalorder %s52, %s55
      %p61 = scmp.eq.s32.totalorder %s21, 0
      %p62 = por %p60, %p61
      %p63 = scmp.ne.s32.totalorder %s52, %s55
      %p64 = scmp.eq.s32.totalorder %s26, 1
      %p65 = por %p63, %p64
      %p66 = scmp.ne.s32.totalorder %s55, %s56
      %p67 = scmp.eq.s32.totalorder %s26, 0
      %p68 = por %p66, %p67
      %p69 = scmp.ne.s32.totalorder %s55, %s56
      %p70 = scmp.eq.s32.totalorder %s27, 1
      %p71 = por %p69, %p70
      %p73 = scmp.ne.s32.totalorder %s56, %s72
      %p74 = scmp.eq.s32.totalorder %s27, 0
      %p75 = por %p73, %p74
      %s76 = ssub.s32 %s21, %s28
      %p77 = scmp.eq.s32.totalorder %s76, 0
      %s79 = sadd.s32 %s78, 1
      %s80 = scalar_select %p77, %s78, %s79
      %p83 = pneg %p77
      %p84 = scmp.eq.s32.totalorder %s21, 1
      %p85 = por %p83, %p84
      %p86 = scmp.ne.s32.totalorder %s78, %s81
      %p87 = scmp.eq.s32.totalorder %s21, 0
      %p88 = por %p86, %p87
      %p89 = scmp.ne.s32.totalorder %s78, %s81
      %p90 = scmp.eq.s32.totalorder %s26, 1
      %p91 = por %p89, %p90
      %p92 = scmp.ne.s32.totalorder %s81, %s82
      %p93 = scmp.eq.s32.totalorder %s26, 0
      %p94 = por %p92, %p93
      %p95 = scmp.ne.s32.totalorder %s81, %s82
      %p96 = scmp.eq.s32.totalorder %s27, 1
      %p97 = por %p95, %p96
      %p99 = scmp.ne.s32.totalorder %s82, %s98
      %p100 = scmp.eq.s32.totalorder %s27, 0
      %p101 = por %p99, %p100
      %s103 = sadd.s32 %s102, 1
      %p106 = scmp.eq.s32.totalorder %s21, 1
      %p107 = scmp.ne.s32.totalorder %s102, %s104
      %p108 = scmp.eq.s32.totalorder %s21, 0
      %p109 = por %p107, %p108
      %p110 = scmp.ne.s32.totalorder %s102, %s104
      %p111 = scmp.eq.s32.totalorder %s26, 1
      %p112 = por %p110, %p111
      %p113 = scmp.ne.s32.totalorder %s104, %s105
      %p114 = scmp.eq.s32.totalorder %s26, 0
      %p115 = por %p113, %p114
      %p116 = scmp.ne.s32.totalorder %s104, %s105
      %p117 = scmp.eq.s32.totalorder %s27, 1
      %p118 = por %p116, %p117
      %p120 = scmp.ne.s32.totalorder %s105, %s119
      %p121 = scmp.eq.s32.totalorder %s27, 0
      %p122 = por %p120, %p121
      %s124 = sadd.s32 %s123, 1
      %p127 = scmp.eq.s32.totalorder %s21, 1
      %p128 = scmp.ne.s32.totalorder %s123, %s125
      %p129 = scmp.eq.s32.totalorder %s21, 0
      %p130 = por %p128, %p129
      %p131 = scmp.ne.s32.totalorder %s123, %s125
      %p132 = scmp.eq.s32.totalorder %s26, 1
      %p133 = por %p131, %p132
      %p134 = scmp.ne.s32.totalorder %s125, %s126
      %p135 = scmp.eq.s32.totalorder %s26, 0
      %p136 = por %p134, %p135
      %p137 = scmp.ne.s32.totalorder %s125, %s126
      %p138 = scmp.eq.s32.totalorder %s27, 1
      %p139 = por %p137, %p138
      %p141 = scmp.ne.s32.totalorder %s126, %s140
      %p142 = scmp.eq.s32.totalorder %s27, 0
      %p143 = por %p141, %p142
      %s145 = sadd.s32 %s144, 1
      %p148 = scmp.eq.s32.totalorder %s21, 1
      %p149 = scmp.ne.s32.totalorder %s144, %s146
      %p150 = scmp.eq.s32.totalorder %s21, 0
      %p151 = por %p149, %p150
      %p152 = scmp.ne.s32.totalorder %s144, %s146
      %p153 = scmp.eq.s32.totalorder %s26, 1
      %p154 = por %p152, %p153
      %p155 = scmp.ne.s32.totalorder %s146, %s147
      %p156 = scmp.eq.s32.totalorder %s26, 0
      %p157 = por %p155, %p156
      %p158 = scmp.ne.s32.totalorder %s146, %s147
      %p159 = scmp.eq.s32.totalorder %s27, 1
      %p160 = por %p158, %p159
      %p162 = scmp.ne.s32.totalorder %s147, %s161
      %p163 = scmp.eq.s32.totalorder %s27, 0
      %p164 = por %p162, %p163
      %s166 = sadd.s32 %s165, 1
      %p169 = scmp.eq.s32.totalorder %s21, 1
      %p170 = scmp.ne.s32.totalorder %s165, %s167
      %p171 = scmp.eq.s32.totalorder %s21, 0
      %p172 = por %p170, %p171
      %p173 = scmp.ne.s32.totalorder %s165, %s167
      %p174 = scmp.eq.s32.totalorder %s26, 1
      %p175 = por %p173, %p174
      %p176 = scmp.ne.s32.totalorder %s167, %s168
      %p177 = scmp.eq.s32.totalorder %s26, 0
      %p178 = por %p176, %p177
      %p179 = scmp.ne.s32.totalorder %s167, %s168
      %p180 = scmp.eq.s32.totalorder %s27, 1
      %p181 = por %p179, %p180
      %p183 = scmp.ne.s32.totalorder %s168, %s182
      %p184 = scmp.eq.s32.totalorder %s27, 0
      %p185 = por %p183, %p184
      %s187 = sadd.s32 %s186, 1
      %p190 = scmp.eq.s32.totalorder %s21, 1
      %p191 = scmp.ne.s32.totalorder %s186, %s188
      %p192 = scmp.eq.s32.totalorder %s21, 0
      %p193 = por %p191, %p192
      %p194 = scmp.ne.s32.totalorder %s186, %s188
      %p195 = scmp.eq.s32.totalorder %s26, 1
      %p196 = por %p194, %p195
      %p197 = scmp.ne.s32.totalorder %s188, %s189
      %p198 = scmp.eq.s32.totalorder %s26, 0
      %p199 = por %p197, %p198
      %p200 = scmp.ne.s32.totalorder %s188, %s189
      %p201 = scmp.eq.s32.totalorder %s27, 1
      %p202 = por %p200, %p201
      %p204 = scmp.ne.s32.totalorder %s189, %s203
      %p205 = scmp.eq.s32.totalorder %s27, 0
      %p206 = por %p204, %p205
      %s208 = sadd.s32 %s207, 1
      %p211 = scmp.eq.s32.totalorder %s21, 1
      %p212 = scmp.ne.s32.totalorder %s207, %s209
      %p213 = scmp.eq.s32.totalorder %s21, 0
      %p214 = por %p212, %p213
      %p215 = scmp.ne.s32.totalorder %s207, %s209
      %p216 = scmp.eq.s32.totalorder %s26, 1
      %p217 = por %p215, %p216
      %p218 = scmp.ne.s32.totalorder %s209, %s210
      %p219 = scmp.eq.s32.totalorder %s26, 0
      %p220 = por %p218, %p219
      %p221 = scmp.ne.s32.totalorder %s209, %s210
      %p222 = scmp.eq.s32.totalorder %s27, 1
      %p223 = por %p221, %p222
      %p225 = scmp.ne.s32.totalorder %s210, %s224
      %p226 = scmp.eq.s32.totalorder %s27, 0
      %p227 = por %p225, %p226
      %s229 = sadd.s32 %s228, 1
      %p232 = scmp.eq.s32.totalorder %s21, 1
      %p233 = scmp.ne.s32.totalorder %s228, %s230
      %p234 = scmp.eq.s32.totalorder %s21, 0
      %p235 = por %p233, %p234
      %p236 = scmp.ne.s32.totalorder %s228, %s230
      %p237 = scmp.eq.s32.totalorder %s26, 1
      %p238 = por %p236, %p237
      %p239 = scmp.ne.s32.totalorder %s230, %s231
      %p240 = scmp.eq.s32.totalorder %s26, 0
      %p241 = por %p239, %p240
      %p242 = scmp.ne.s32.totalorder %s230, %s231
      %p243 = scmp.eq.s32.totalorder %s27, 1
      %p244 = por %p242, %p243
      %p246 = scmp.ne.s32.totalorder %s231, %s245
      %p247 = scmp.eq.s32.totalorder %s27, 0
      %p248 = por %p246, %p247
      %s250 = sadd.s32 %s249, 1
      %p253 = scmp.eq.s32.totalorder %s21, 1
      %p254 = scmp.ne.s32.totalorder %s249, %s251
      %p255 = scmp.eq.s32.totalorder %s21, 0
      %p256 = por %p254, %p255
      %p257 = scmp.ne.s32.totalorder %s249, %s251
      %p258 = scmp.eq.s32.totalorder %s26, 1
      %p259 = por %p257, %p258
      %p260 = scmp.ne.s32.totalorder %s251, %s252
      %p261 = scmp.eq.s32.totalorder %s26, 0
      %p262 = por %p260, %p261
      %p263 = scmp.ne.s32.totalorder %s251, %s252
      %p264 = scmp.eq.s32.totalorder %s27, 1
      %p265 = por %p263, %p264
      %p267 = scmp.ne.s32.totalorder %s252, %s266
      %p268 = scmp.eq.s32.totalorder %s27, 0
      %p269 = por %p267, %p268
      %s271 = sadd.s32 %s270, 1
      %p274 = scmp.eq.s32.totalorder %s21, 1
      %p275 = scmp.ne.s32.totalorder %s270, %s272
      %p276 = scmp.eq.s32.totalorder %s21, 0
      %p277 = por %p275, %p276
      %p278 = scmp.ne.s32.totalorder %s270, %s272
      %p279 = scmp.eq.s32.totalorder %s26, 1
      %p280 = por %p278, %p279
      %p281 = scmp.ne.s32.totalorder %s272, %s273
      %p282 = scmp.eq.s32.totalorder %s26, 0
      %p283 = por %p281, %p282
      %p284 = scmp.ne.s32.totalorder %s272, %s273
      %p285 = scmp.eq.s32.totalorder %s27, 1
      %p286 = por %p284, %p285
      %p288 = scmp.ne.s32.totalorder %s273, %s287
      %p289 = scmp.eq.s32.totalorder %s27, 0
      %p290 = por %p288, %p289
      %s291 = ssub.s32 %s21, %s28
      %p292 = scmp.eq.s32.totalorder %s291, 0
      %s294 = sadd.s32 %s293, 1
      %s295 = scalar_select %p292, %s293, %s294
      %p298 = pneg %p292
      %p299 = scmp.eq.s32.totalorder %s21, 1
      %p300 = por %p298, %p299
      %p301 = scmp.ne.s32.totalorder %s293, %s296
      %p302 = scmp.eq.s32.totalorder %s21, 0
      %p303 = por %p301, %p302
      %p304 = scmp.ne.s32.totalorder %s293, %s296
      %p305 = scmp.eq.s32.totalorder %s26, 1
      %p306 = por %p304, %p305
      %p307 = scmp.ne.s32.totalorder %s296, %s297
      %p308 = scmp.eq.s32.totalorder %s26, 0
      %p309 = por %p307, %p308
      %p310 = scmp.ne.s32.totalorder %s296, %s297
      %p311 = scmp.eq.s32.totalorder %s27, 1
      %p312 = por %p310, %p311
      %p314 = scmp.ne.s32.totalorder %s297, %s313
      %p315 = scmp.eq.s32.totalorder %s27, 0
      %p316 = por %p314, %p315
      %p317 = scmp.le.s32.totalorder 1, %s21
      %p318 = scmp.lt.s32.totalorder %s21, 3
      %p319 = pnand %p317, %p318
      %p320 = pneg %p319
      // Predicated region
      $region9: #{tpu_custom_call.1} parent=5 // pred_check
        _
      $region10: #{tpu_custom_call.1} parent=5 // pred_check_branch
        %322 = sbr.rel (%p319) target = $region12
      $region11: #{tpu_custom_call.1} parent=5 // pred_region
        %s323 = ssub.s32 %s21, 1
        // Predicated region
        $region13: #{tpu_custom_call.1} parent=11 // pred_check
          %p324 = pneg %p42
        $region14: #{tpu_custom_call.1} parent=11 // pred_check_branch
          %326 = sbr.rel (%p324) target = $region16
        $region15: #{tpu_custom_call.1} parent=11 // pred_region
          %s328 = ssub.s32 16, 16
          %329 = vsyncadd [#allocation6], %s328
          %s331 = sshll.u32 %s0, 4
          %s332 = int_to_ptr.vmem [resolvable:$true] %s331
          %334 = dma.vmem_to_smem %s332, 16, [#allocation4], [#allocation6]
        $region16: #{tpu_custom_call.1} parent=11 // pred_fallthru
          _
        // Predicated region
        $region17: #{tpu_custom_call.1} parent=11 // pred_check
          %p335 = pneg %p115
        $region18: #{tpu_custom_call.1} parent=11 // pred_check_branch
          %337 = sbr.rel (%p335) target = $region20
        $region19: #{tpu_custom_call.1} parent=11 // pred_region
          %s339 = ssub.s32 256, 256
          %340 = vsyncadd [#allocation5], %s339
          %s341 = sshll.u32 [#allocation7], 4
          %s342 = int_to_ptr.vmem [resolvable:$true] %s341
          %347 = dma.hbm_to_vmem [thread:$0]  %s3, 256, %s342, [#allocation5], 128, 128, 8
        $region20: #{tpu_custom_call.1} parent=11 // pred_fallthru
          _
        // Predicated region
        $region21: #{tpu_custom_call.1} parent=11 // pred_check
          %p348 = pneg %p136
        $region22: #{tpu_custom_call.1} parent=11 // pred_check_branch
          %350 = sbr.rel (%p348) target = $region24
        $region23: #{tpu_custom_call.1} parent=11 // pred_region
          %s352 = ssub.s32 256, 256
          %353 = vsyncadd [#allocation9], %s352
          %s354 = sshll.u32 [#allocation8], 4
          %s355 = int_to_ptr.vmem [resolvable:$true] %s354
          %360 = dma.hbm_to_vmem [thread:$0]  %s4, 256, %s355, [#allocation9], 128, 128, 8
        $region24: #{tpu_custom_call.1} parent=11 // pred_fallthru
          _
        // Predicated region
        $region25: #{tpu_custom_call.1} parent=11 // pred_check
          %p361 = pneg %p157
        $region26: #{tpu_custom_call.1} parent=11 // pred_check_branch
          %363 = sbr.rel (%p361) target = $region28
        $region27: #{tpu_custom_call.1} parent=11 // pred_region
          _
        $region28: #{tpu_custom_call.1} parent=11 // pred_fallthru
          _
        // Predicated region
        $region29: #{tpu_custom_call.1} parent=11 // pred_check
          %p364 = pneg %p178
        $region30: #{tpu_custom_call.1} parent=11 // pred_check_branch
          %366 = sbr.rel (%p364) target = $region32
        $region31: #{tpu_custom_call.1} parent=11 // pred_region
          _
        $region32: #{tpu_custom_call.1} parent=11 // pred_fallthru
          _
        // Predicated region
        $region33: #{tpu_custom_call.1} parent=11 // pred_check
          %p367 = pneg %p199
        $region34: #{tpu_custom_call.1} parent=11 // pred_check_branch
          %369 = sbr.rel (%p367) target = $region36
        $region35: #{tpu_custom_call.1} parent=11 // pred_region
          _
        $region36: #{tpu_custom_call.1} parent=11 // pred_fallthru
          _
        // Predicated region
        $region37: #{tpu_custom_call.1} parent=11 // pred_check
          %p370 = pneg %p220
        $region38: #{tpu_custom_call.1} parent=11 // pred_check_branch
          %372 = sbr.rel (%p370) target = $region40
        $region39: #{tpu_custom_call.1} parent=11 // pred_region
          _
        $region40: #{tpu_custom_call.1} parent=11 // pred_fallthru
          _
        // Predicated region
        $region41: #{tpu_custom_call.1} parent=11 // pred_check
          %p373 = pneg %p241
        $region42: #{tpu_custom_call.1} parent=11 // pred_check_branch
          %375 = sbr.rel (%p373) target = $region44
        $region43: #{tpu_custom_call.1} parent=11 // pred_region
          _
        $region44: #{tpu_custom_call.1} parent=11 // pred_fallthru
          _
        // Predicated region
        $region45: #{tpu_custom_call.1} parent=11 // pred_check
          %p376 = pneg %p262
        $region46: #{tpu_custom_call.1} parent=11 // pred_check_branch
          %378 = sbr.rel (%p376) target = $region48
        $region47: #{tpu_custom_call.1} parent=11 // pred_region
          _
        $region48: #{tpu_custom_call.1} parent=11 // pred_fallthru
          _
        // Predicated region
        $region49: #{tpu_custom_call.1} parent=11 // pred_check
          %p379 = pneg %p283
        $region50: #{tpu_custom_call.1} parent=11 // pred_check_branch
          %381 = sbr.rel (%p379) target = $region52
        $region51: #{tpu_custom_call.1} parent=11 // pred_region
          _
        $region52: #{tpu_custom_call.1} parent=11 // pred_fallthru
          _
      $region12: #{tpu_custom_call.1} parent=5 // pred_fallthru
        _
      %p382 = scmp.lt.s32.totalorder %s21, 2
      // Predicated region
      $region53: #{tpu_custom_call.1} parent=5 // pred_check
        %p383 = pneg %p382
      $region54: #{tpu_custom_call.1} parent=5 // pred_check_branch
        %385 = sbr.rel (%p383) target = $region56
      $region55: #{tpu_custom_call.1} parent=5 // pred_region
        // Predicated region
        $region57: #{tpu_custom_call.1} parent=55 // pred_check
          %p386 = pneg %p62
        $region58: #{tpu_custom_call.1} parent=55 // pred_check_branch
          %388 = sbr.rel (%p386) target = $region60
        $region59: #{tpu_custom_call.1} parent=55 // pred_region
          %p389 = scmp.lt.s32.totalorder %s21, 1
          %s390 = scalar_select %p389, %s21, 1
          %s391 = smul.addr %s390, 8
          %s392 = smul.addr %s391, 8
          %s393 = scalar_lea.vmem %s1, %s392
        $region60: #{tpu_custom_call.1} parent=55 // pred_fallthru
          _
        // Predicated region
        $region61: #{tpu_custom_call.1} parent=55 // pred_check
          %p394 = pneg %p88
        $region62: #{tpu_custom_call.1} parent=55 // pred_check_branch
          %396 = sbr.rel (%p394) target = $region64
        $region63: #{tpu_custom_call.1} parent=55 // pred_region
          %p397 = scmp.lt.s32.totalorder %s21, 1
          %s398 = scalar_select %p397, %s21, 1
          %s399 = smul.addr %s398, 8
          %s400 = smul.addr %s399, 8
          %s401 = scalar_lea.vmem %s2, %s400
        $region64: #{tpu_custom_call.1} parent=55 // pred_fallthru
          _
      $region56: #{tpu_custom_call.1} parent=5 // pred_fallthru
        _
      %p402 = scmp.le.s32.totalorder 1, %s21
      %p403 = scmp.lt.s32.totalorder %s21, 3
      %p404 = pnand %p402, %p403
      %p405 = pneg %p404
      // Predicated region
      $region65: #{tpu_custom_call.1} parent=5 // pred_check
        _
      $region66: #{tpu_custom_call.1} parent=5 // pred_check_branch
        %407 = sbr.rel (%p404) target = $region68
      $region67: #{tpu_custom_call.1} parent=5 // pred_region
        %s408 = ssub.s32 %s21, 1
        // Predicated region
        $region69: #{tpu_custom_call.1} parent=67 // pred_check
          %p409 = pneg %p42
        $region70: #{tpu_custom_call.1} parent=67 // pred_check_branch
          %411 = sbr.rel (%p409) target = $region72
        $region71: #{tpu_custom_call.1} parent=67 // pred_region
          %412 = dma.done [#allocation6], 16
        $region72: #{tpu_custom_call.1} parent=67 // pred_fallthru
          _
        // Predicated region
        $region73: #{tpu_custom_call.1} parent=67 // pred_check
          %p413 = pneg %p115
        $region74: #{tpu_custom_call.1} parent=67 // pred_check_branch
          %415 = sbr.rel (%p413) target = $region76
        $region75: #{tpu_custom_call.1} parent=67 // pred_region
          %416 = dma.done [#allocation5], 256
        $region76: #{tpu_custom_call.1} parent=67 // pred_fallthru
          _
        // Predicated region
        $region77: #{tpu_custom_call.1} parent=67 // pred_check
          %p417 = pneg %p136
        $region78: #{tpu_custom_call.1} parent=67 // pred_check_branch
          %419 = sbr.rel (%p417) target = $region80
        $region79: #{tpu_custom_call.1} parent=67 // pred_region
          %420 = dma.done [#allocation9], 256
        $region80: #{tpu_custom_call.1} parent=67 // pred_fallthru
          _
        %421 = sfence
        %p422 = pneg %p42
        %p423 = pneg %p39
        %p424 = scmp.lt.s32.totalorder %s26, 1
        %s425 = scalar_select %p424, %s26, 1
        %s426 = smul.addr %s425, 8
        %s427 = smul.addr %s426, 8
        %s428 = scalar_lea.vmem %s1, %s427
        %p429 = pneg %p68
        %p430 = pneg %p65
        %p431 = scmp.lt.s32.totalorder %s26, 1
        %s432 = scalar_select %p431, %s26, 1
        %s433 = smul.addr %s432, 8
        %s434 = smul.addr %s433, 8
        %s435 = scalar_lea.vmem %s2, %s434
        %p436 = pneg %p94
        %p437 = pneg %p91
        %p438 = pneg %p115
        %p439 = pneg %p112
        %p440 = pneg %p136
        %p441 = pneg %p133
        %p442 = pneg %p157
        %p443 = pneg %p154
        %p444 = pneg %p178
        %p445 = pneg %p175
        %p446 = pneg %p199
        %p447 = pneg %p196
        %p448 = pneg %p220
        %p449 = pneg %p217
        %p450 = pneg %p241
        %p451 = pneg %p238
        %p452 = pneg %p262
        %p453 = pneg %p259
        %p454 = pneg %p283
        %p455 = pneg %p280
        %p456 = pneg %p309
        %p457 = pneg %p306
        %p458 = scmp.lt.s32.totalorder %s26, 1
        %s459 = scalar_select %p458, %s26, 1
        %s460 = smul.addr %s459, 8
        %s461 = smul.addr %s460, 8
        %s462 = scalar_lea.vmem %s12, %s461
        %p463 = scmp.lt.s32.totalorder %s26, 1
        %s464 = scalar_select %p463, %s26, 1
        %s465 = smul.addr %s464, 8
        %s466 = smul.addr %s465, 8
        %s467 = scalar_lea.vmem %s1, %s466
        %p468 = scmp.lt.s32.totalorder %s26, 1
        %s469 = scalar_select %p468, %s26, 1
        %s470 = smul.addr %s469, 8
        %s471 = smul.addr %s470, 8
        %s472 = scalar_lea.vmem %s2, %s471
        %p473 = scmp.lt.s32.totalorder %s26, 1
        %s474 = scalar_select %p473, %s26, 1
        %s475 = smul.addr %s474, 8
        %s476 = smul.addr %s475, 8
        %s477 = scalar_lea.vmem %s12, %s476
        %v478 = vld [vmem:[%s467] sm:$0xff]
        %v479 = vld [vmem:[%s467 + $0x8] sm:$0xff]
        %v480 = vld [vmem:[%s467 + $0x10] sm:$0xff]
        %v481 = vld [vmem:[%s467 + $0x18] sm:$0xff]
        %v482 = vld [vmem:[%s467 + $0x20] sm:$0xff]
        %v483 = vld [vmem:[%s467 + $0x28] sm:$0xff]
        %v484 = vld [vmem:[%s467 + $0x30] sm:$0xff]
        %v485 = vld [vmem:[%s467 + $0x38] sm:$0xff]
        %v486 = vld [vmem:[%s472] sm:$0xff]
        %v487 = vld [vmem:[%s472 + $0x8] sm:$0xff]
        %v488 = vld [vmem:[%s472 + $0x10] sm:$0xff]
        %v489 = vld [vmem:[%s472 + $0x18] sm:$0xff]
        %v490 = vld [vmem:[%s472 + $0x20] sm:$0xff]
        %v491 = vld [vmem:[%s472 + $0x28] sm:$0xff]
        %v492 = vld [vmem:[%s472 + $0x30] sm:$0xff]
        %v493 = vld [vmem:[%s472 + $0x38] sm:$0xff]
        %v494 = vmax.f32 %v478, %v479
        %v495 = vmax.f32 %v480, %v481
        %v496 = vmax.f32 %v482, %v483
        %v497 = vmax.f32 %v484, %v485
        %v498 = vmax.f32 %v486, %v487
        %v499 = vmax.f32 %v488, %v489
        %v500 = vmax.f32 %v490, %v491
        %v501 = vmax.f32 %v492, %v493
        %v502 = vmax.f32 %v494, %v498
        %v503 = vmax.f32 %v495, %v499
        %v504 = vmax.f32 %v496, %v500
        %v505 = vmax.f32 %v497, %v501
        %v506 = vadd.f32 %v478, %v479
        %v507 = vadd.f32 %v480, %v481
        %v508 = vadd.f32 %v482, %v483
        %v509 = vadd.f32 %v484, %v485
        %v510 = vadd.f32 %v506, %v486
        %v511 = vadd.f32 %v506, %v487
        %v512 = vadd.f32 %v507, %v488
        %v513 = vadd.f32 %v507, %v489
        %v514 = vadd.f32 %v508, %v490
        %v515 = vadd.f32 %v508, %v491
        %v516 = vadd.f32 %v509, %v492
        %v517 = vadd.f32 %v509, %v493
        %v518 = vadd.f32 %v510, %v487
        %v519 = vadd.f32 %v511, %v486
        %v520 = vadd.f32 %v512, %v489
        %v521 = vadd.f32 %v513, %v488
        %v522 = vadd.f32 %v514, %v491
        %v523 = vadd.f32 %v515, %v490
        %v524 = vadd.f32 %v516, %v493
        %v525 = vadd.f32 %v517, %v492
        %v526 = vmul.f32 %v518, 0.25
        %v527 = vmul.f32 %v519, 0.25
        %v528 = vmul.f32 %v520, 0.25
        %v529 = vmul.f32 %v521, 0.25
        %v530 = vmul.f32 %v522, 0.25
        %v531 = vmul.f32 %v523, 0.25
        %v532 = vmul.f32 %v524, 0.25
        %v533 = vmul.f32 %v525, 0.25
        %s534 = sld [smem:[#allocation4]]
        %s535 = sld [smem:[#allocation4 + $0x1]]
        %v536 = vadd.f32 %v502, %v526
        %v537 = vadd.f32 %v502, %v527
        %v538 = vadd.f32 %v503, %v528
        %v539 = vadd.f32 %v503, %v529
        %v540 = vadd.f32 %v504, %v530
        %v541 = vadd.f32 %v504, %v531
        %v542 = vadd.f32 %v505, %v532
        %v543 = vadd.f32 %v505, %v533
        %v544 = vstv %s534
        %v545 = vmul.f32 %v544, %v536
        %v546 = vmul.f32 %v544, %v537
        %v547 = vmul.f32 %v544, %v538
        %v548 = vmul.f32 %v544, %v539
        %v549 = vmul.f32 %v544, %v540
        %v550 = vmul.f32 %v544, %v541
        %v551 = vmul.f32 %v544, %v542
        %v552 = vmul.f32 %v544, %v543
        %s553 = smul.f32 %s535, 2.0
        %v554 = vstv %s553
        %v555 = vadd.f32 %v545, %v554
        %v556 = vadd.f32 %v546, %v554
        %v557 = vadd.f32 %v547, %v554
        %v558 = vadd.f32 %v548, %v554
        %v559 = vadd.f32 %v549, %v554
        %v560 = vadd.f32 %v550, %v554
        %v561 = vadd.f32 %v551, %v554
        %v562 = vadd.f32 %v552, %v554
        %v563 = vxor.u32 %v555, 2147483648
        %v564 = vxor.u32 %v556, 2147483648
        %v565 = vxor.u32 %v557, 2147483648
        %v566 = vxor.u32 %v558, 2147483648
        %v567 = vxor.u32 %v559, 2147483648
        %v568 = vxor.u32 %v560, 2147483648
        %v569 = vxor.u32 %v561, 2147483648
        %v570 = vxor.u32 %v562, 2147483648
        %v571 = vmul.f32 %v563, 1.442695
        %v572 = vpow.pop %v571
        %v573 = vmul.f32 %v564, 1.442695
        %v574 = vpow.pop %v573
        %v575 = vmul.f32 %v565, 1.442695
        %v576 = vpow.pop %v575
        %v577 = vmul.f32 %v566, 1.442695
        %v578 = vpow.pop %v577
        %v579 = vmul.f32 %v567, 1.442695
        %v580 = vpow.pop %v579
        %v581 = vmul.f32 %v568, 1.442695
        %v582 = vpow.pop %v581
        %v583 = vmul.f32 %v569, 1.442695
        %v584 = vpow.pop %v583
        %v585 = vmul.f32 %v570, 1.442695
        %v586 = vpow.pop %v585
        %v587 = vadd.f32 %v572, 1.0
        %v588 = vadd.f32 %v574, 1.0
        %v589 = vadd.f32 %v576, 1.0
        %v590 = vadd.f32 %v578, 1.0
        %v591 = vadd.f32 %v580, 1.0
        %v592 = vadd.f32 %v582, 1.0
        %v593 = vadd.f32 %v584, 1.0
        %v594 = vadd.f32 %v586, 1.0
        %v595 = vrcp.pop %v587
        %v596 = vmul.f32 1.0, %v595
        %v597 = vrcp.pop %v588
        %v598 = vmul.f32 1.0, %v597
        %v599 = vrcp.pop %v589
        %v600 = vmul.f32 1.0, %v599
        %v601 = vrcp.pop %v590
        %v602 = vmul.f32 1.0, %v601
        %v603 = vrcp.pop %v591
        %v604 = vmul.f32 1.0, %v603
        %v605 = vrcp.pop %v592
        %v606 = vmul.f32 1.0, %v605
        %v607 = vrcp.pop %v593
        %v608 = vmul.f32 1.0, %v607
        %v609 = vrcp.pop %v594
        %v610 = vmul.f32 1.0, %v609
        %v611 = vmul.f32 %v478, %v596
        %v612 = vmul.f32 %v479, %v598
        %v613 = vmul.f32 %v480, %v600
        %v614 = vmul.f32 %v481, %v602
        %v615 = vmul.f32 %v482, %v604
        %v616 = vmul.f32 %v483, %v606
        %v617 = vmul.f32 %v484, %v608
        %v618 = vmul.f32 %v485, %v610
        %v619 = vld [vmem:[#allocation7] sm:$0xff]
        %v620 = vld [vmem:[#allocation7 + $0x8] sm:$0xff]
        %v621 = vld [vmem:[#allocation8] sm:$0xff]
        %v622 = vld [vmem:[#allocation8 + $0x8] sm:$0xff]
        %vm623 = vcmask 130048
        %v625 = vsel %vm623, %v478, 0
        %v628 = vsel %vm623, %v479, 0
        %v631 = vsel %vm623, %v480, 0
        %v634 = vsel %vm623, %v481, 0
        %v637 = vsel %vm623, %v482, 0
        %v640 = vsel %vm623, %v483, 0
        %v643 = vsel %vm623, %v484, 0
        %v646 = vsel %vm623, %v485, 0
        %648 = vmatprep.subr.mxu0 0.0
        %649 = vmatpush1.msra.mxu0 %v621
        %650 = vmatprep.subr.mxu0 0.0
        %651 = vmatpush1.msra.mxu0 %v622
        %652 = vmatprep.subr.mxu0 0.0
        %653 = vmatpush1.msra.mxu0 0.0
        %654 = vmatprep.subr.mxu0 0.0
        %655 = vmatpush1.msra.mxu0 0.0
        %656 = vmatprep.subr.mxu0 0.0
        %657 = vmatpush1.msra.mxu0 0.0
        %658 = vmatprep.subr.mxu0 0.0
        %659 = vmatpush1.msra.mxu0 0.0
        %660 = vmatprep.subr.mxu0 0.0
        %661 = vmatpush1.msra.mxu0 0.0
        %662 = vmatprep.subr.mxu0 0.0
        %663 = vmatpush1.msra.mxu0 0.0
        %664 = vmatprep.subr.mxu0 0.0
        %665 = vmatpush1.msra.mxu0 0.0
        %666 = vmatprep.subr.mxu0 0.0
        %667 = vmatpush1.msra.mxu0 0.0
        %668 = vmatprep.subr.mxu0 0.0
        %669 = vmatpush1.msra.mxu0 0.0
        %670 = vmatprep.subr.mxu0 0.0
        %671 = vmatpush1.msra.mxu0 0.0
        %672 = vmatprep.subr.mxu0 0.0
        %673 = vmatpush1.msra.mxu0 0.0
        %674 = vmatprep.subr.mxu0 0.0
        %675 = vmatpush1.msra.mxu0 0.0
        %676 = vmatprep.subr.mxu0 0.0
        %677 = vmatpush1.msra.mxu0 0.0
        %678 = vmatprep.subr.mxu0 0.0
        %679 = vmatpush1.msra.mxu0 0.0
        %680 = vmatprep.subr.mxu0 0.0
        %681 = vmatpush1.msra.mxu0 0.0
        %682 = vmatprep.subr.mxu0 0.0
        %683 = vmatpush1.msra.mxu0 0.0
        %684 = vmatprep.subr.mxu0 0.0
        %685 = vmatpush1.msra.mxu0 0.0
        %686 = vmatprep.subr.mxu0 0.0
        %687 = vmatpush1.msra.mxu0 0.0
        %688 = vmatprep.subr.mxu0 0.0
        %689 = vmatpush1.msra.mxu0 0.0
        %690 = vmatprep.subr.mxu0 0.0
        %691 = vmatpush1.msra.mxu0 0.0
        %692 = vmatprep.subr.mxu0 0.0
        %693 = vmatpush1.msra.mxu0 0.0
        %694 = vmatprep.subr.mxu0 0.0
        %695 = vmatpush1.msra.mxu0 0.0
        %696 = vmatprep.subr.mxu0 0.0
        %697 = vmatpush1.msra.mxu0 0.0
        %698 = vmatprep.subr.mxu0 0.0
        %699 = vmatpush1.msra.mxu0 0.0
        %700 = vmatprep.subr.mxu0 0.0
        %701 = vmatpush1.msra.mxu0 0.0
        %702 = vmatprep.subr.mxu0 0.0
        %703 = vmatpush1.msra.mxu0 0.0
        %704 = vmatprep.subr.mxu0 0.0
        %705 = vmatpush1.msra.mxu0 0.0
        %706 = vmatprep.subr.mxu0 0.0
        %707 = vmatpush1.msra.mxu0 0.0
        %708 = vmatprep.subr.mxu0 0.0
        %709 = vmatpush1.msra.mxu0 0.0
        %710 = vmatprep.subr.mxu0 0.0
        %711 = vmatpush1.msra.mxu0 0.0
        %712 = vmatprep.mubr.f32.mxu0 0.0
        %713 = vmatmul.mubr.f32.gmra.mrb[0].mxu0 %v625
        %v714 = vpop.f32.mrb[0].mxu0
        %v715 = vadd.f32 0.0, %v714
        %v716 = vpop.f32.mrb[0].mxu0
        %717 = vmatprep.mubr.f32.mxu0 0.0
        %718 = vmatmul.mubr.f32.gmra.mrb[0].mxu0 %v628
        %v719 = vpop.f32.mrb[0].mxu0
        %v720 = vadd.f32 0.0, %v719
        %v721 = vpop.f32.mrb[0].mxu0
        %722 = vmatprep.mubr.f32.mxu0 0.0
        %723 = vmatmul.mubr.f32.gmra.mrb[0].mxu0 %v631
        %v724 = vpop.f32.mrb[0].mxu0
        %v725 = vadd.f32 0.0, %v724
        %v726 = vpop.f32.mrb[0].mxu0
        %727 = vmatprep.mubr.f32.mxu0 0.0
        %728 = vmatmul.mubr.f32.gmra.mrb[0].mxu0 %v634
        %v729 = vpop.f32.mrb[0].mxu0
        %v730 = vadd.f32 0.0, %v729
        %v731 = vpop.f32.mrb[0].mxu0
        %732 = vmatprep.mubr.f32.mxu0 0.0
        %733 = vmatmul.mubr.f32.gmra.mrb[0].mxu0 %v637
        %v734 = vpop.f32.mrb[0].mxu0
        %v735 = vadd.f32 0.0, %v734
        %v736 = vpop.f32.mrb[0].mxu0
        %737 = vmatprep.mubr.f32.mxu0 0.0
        %738 = vmatmul.mubr.f32.gmra.mrb[0].mxu0 %v640
        %v739 = vpop.f32.mrb[0].mxu0
        %v740 = vadd.f32 0.0, %v739
        %v741 = vpop.f32.mrb[0].mxu0
        %742 = vmatprep.mubr.f32.mxu0 0.0
        %743 = vmatmul.mubr.f32.gmra.mrb[0].mxu0 %v643
        %v744 = vpop.f32.mrb[0].mxu0
        %v745 = vadd.f32 0.0, %v744
        %v746 = vpop.f32.mrb[0].mxu0
        %747 = vmatprep.mubr.f32.mxu0 0.0
        %748 = vmatmul.mubr.f32.gmra.mrb[0].mxu0 %v646
        %v749 = vpop.f32.mrb[0].mxu0
        %v750 = vadd.f32 0.0, %v749
        %v751 = vpop.f32.mrb[0].mxu0
        %752 = vdwg.mxu0
        %v754 = vsel %vm623, %v611, 0
        %v757 = vsel %vm623, %v612, 0
        %v760 = vsel %vm623, %v613, 0
        %v763 = vsel %vm623, %v614, 0
        %v766 = vsel %vm623, %v615, 0
        %v769 = vsel %vm623, %v616, 0
        %v772 = vsel %vm623, %v617, 0
        %v775 = vsel %vm623, %v618, 0
        %777 = vmatprep.subr.mxu0 0.0
        %778 = vmatpush1.msra.mxu0 %v619
        %779 = vmatprep.subr.mxu0 0.0
        %780 = vmatpush1.msra.mxu0 %v620
        %781 = vmatprep.subr.mxu0 0.0
        %782 = vmatpush1.msra.mxu0 0.0
        %783 = vmatprep.subr.mxu0 0.0
        %784 = vmatpush1.msra.mxu0 0.0
        %785 = vmatprep.subr.mxu0 0.0
        %786 = vmatpush1.msra.mxu0 0.0
        %787 = vmatprep.subr.mxu0 0.0
        %788 = vmatpush1.msra.mxu0 0.0
        %789 = vmatprep.subr.mxu0 0.0
        %790 = vmatpush1.msra.mxu0 0.0
        %791 = vmatprep.subr.mxu0 0.0
        %792 = vmatpush1.msra.mxu0 0.0
        %793 = vmatprep.subr.mxu0 0.0
        %794 = vmatpush1.msra.mxu0 0.0
        %795 = vmatprep.subr.mxu0 0.0
        %796 = vmatpush1.msra.mxu0 0.0
        %797 = vmatprep.subr.mxu0 0.0
        %798 = vmatpush1.msra.mxu0 0.0
        %799 = vmatprep.subr.mxu0 0.0
        %800 = vmatpush1.msra.mxu0 0.0
        %801 = vmatprep.subr.mxu0 0.0
        %802 = vmatpush1.msra.mxu0 0.0
        %803 = vmatprep.subr.mxu0 0.0
        %804 = vmatpush1.msra.mxu0 0.0
        %805 = vmatprep.subr.mxu0 0.0
        %806 = vmatpush1.msra.mxu0 0.0
        %807 = vmatprep.subr.mxu0 0.0
        %808 = vmatpush1.msra.mxu0 0.0
        %809 = vmatprep.subr.mxu0 0.0
        %810 = vmatpush1.msra.mxu0 0.0
        %811 = vmatprep.subr.mxu0 0.0
        %812 = vmatpush1.msra.mxu0 0.0
        %813 = vmatprep.subr.mxu0 0.0
        %814 = vmatpush1.msra.mxu0 0.0
        %815 = vmatprep.subr.mxu0 0.0
        %816 = vmatpush1.msra.mxu0 0.0
        %817 = vmatprep.subr.mxu0 0.0
        %818 = vmatpush1.msra.mxu0 0.0
        %819 = vmatprep.subr.mxu0 0.0
        %820 = vmatpush1.msra.mxu0 0.0
        %821 = vmatprep.subr.mxu0 0.0
        %822 = vmatpush1.msra.mxu0 0.0
        %823 = vmatprep.subr.mxu0 0.0
        %824 = vmatpush1.msra.mxu0 0.0
        %825 = vmatprep.subr.mxu0 0.0
        %826 = vmatpush1.msra.mxu0 0.0
        %827 = vmatprep.subr.mxu0 0.0
        %828 = vmatpush1.msra.mxu0 0.0
        %829 = vmatprep.subr.mxu0 0.0
        %830 = vmatpush1.msra.mxu0 0.0
        %831 = vmatprep.subr.mxu0 0.0
        %832 = vmatpush1.msra.mxu0 0.0
        %833 = vmatprep.subr.mxu0 0.0
        %834 = vmatpush1.msra.mxu0 0.0
        %835 = vmatprep.subr.mxu0 0.0
        %836 = vmatpush1.msra.mxu0 0.0
        %837 = vmatprep.subr.mxu0 0.0
        %838 = vmatpush1.msra.mxu0 0.0
        %839 = vmatprep.subr.mxu0 0.0
        %840 = vmatpush1.msra.mxu0 0.0
        %841 = vmatprep.mubr.f32.mxu0 0.0
        %842 = vmatmul.mubr.f32.gmra.mrb[0].mxu0 %v754
        %v843 = vpop.f32.mrb[0].mxu0
        %v844 = vadd.f32 %v715, %v843
        %v845 = vpop.f32.mrb[0].mxu0
        %846 = vmatprep.mubr.f32.mxu0 0.0
        %847 = vmatmul.mubr.f32.gmra.mrb[0].mxu0 %v757
        %v848 = vpop.f32.mrb[0].mxu0
        %v849 = vadd.f32 %v720, %v848
        %v850 = vpop.f32.mrb[0].mxu0
        %851 = vmatprep.mubr.f32.mxu0 0.0
        %852 = vmatmul.mubr.f32.gmra.mrb[0].mxu0 %v760
        %v853 = vpop.f32.mrb[0].mxu0
        %v854 = vadd.f32 %v725, %v853
        %v855 = vpop.f32.mrb[0].mxu0
        %856 = vmatprep.mubr.f32.mxu0 0.0
        %857 = vmatmul.mubr.f32.gmra.mrb[0].mxu0 %v763
        %v858 = vpop.f32.mrb[0].mxu0
        %v859 = vadd.f32 %v730, %v858
        %v860 = vpop.f32.mrb[0].mxu0
        %861 = vmatprep.mubr.f32.mxu0 0.0
        %862 = vmatmul.mubr.f32.gmra.mrb[0].mxu0 %v766
        %v863 = vpop.f32.mrb[0].mxu0
        %v864 = vadd.f32 %v735, %v863
        %v865 = vpop.f32.mrb[0].mxu0
        %866 = vmatprep.mubr.f32.mxu0 0.0
        %867 = vmatmul.mubr.f32.gmra.mrb[0].mxu0 %v769
        %v868 = vpop.f32.mrb[0].mxu0
        %v869 = vadd.f32 %v740, %v868
        %v870 = vpop.f32.mrb[0].mxu0
        %871 = vmatprep.mubr.f32.mxu0 0.0
        %872 = vmatmul.mubr.f32.gmra.mrb[0].mxu0 %v772
        %v873 = vpop.f32.mrb[0].mxu0
        %v874 = vadd.f32 %v745, %v873
        %v875 = vpop.f32.mrb[0].mxu0
        %876 = vmatprep.mubr.f32.mxu0 0.0
        %877 = vmatmul.mubr.f32.gmra.mrb[0].mxu0 %v775
        %v878 = vpop.f32.mrb[0].mxu0
        %v879 = vadd.f32 %v750, %v878
        %v880 = vpop.f32.mrb[0].mxu0
        %881 = vdwg.mxu0
        %v882 = vld [vmem:[%s5] sm:$0x1]
        %v884 = vlaneseq
        %v885 = vshrl.u32 %v884, 7
        %v886 = vsub.s32 0, %v885
        %v887 = vrot.slane %v882, %v886
        %v889 = vadd.f32 %v844, %v887
        %v890 = vadd.f32 %v849, %v887
        %v891 = vadd.f32 %v854, %v887
        %v892 = vadd.f32 %v859, %v887
        %v893 = vadd.f32 %v864, %v887
        %v894 = vadd.f32 %v869, %v887
        %v895 = vadd.f32 %v874, %v887
        %v896 = vadd.f32 %v879, %v887
        %v897 = vsel %vm623, %v889, -inf
        %898 = vmax.xlane.f32.xlu0 %v897
        %v899 = vpop.xlane.xlu0 %898
        %v900 = vsel %vm623, %v890, -inf
        %901 = vmax.xlane.f32.xlu0 %v900
        %v902 = vpop.xlane.xlu0 %901
        %v903 = vsel %vm623, %v891, -inf
        %904 = vmax.xlane.f32.xlu0 %v903
        %v905 = vpop.xlane.xlu0 %904
        %v906 = vsel %vm623, %v892, -inf
        %907 = vmax.xlane.f32.xlu0 %v906
        %v908 = vpop.xlane.xlu0 %907
        %v909 = vsel %vm623, %v893, -inf
        %910 = vmax.xlane.f32.xlu0 %v909
        %v911 = vpop.xlane.xlu0 %910
        %v912 = vsel %vm623, %v894, -inf
        %913 = vmax.xlane.f32.xlu0 %v912
        %v914 = vpop.xlane.xlu0 %913
        %v915 = vsel %vm623, %v895, -inf
        %916 = vmax.xlane.f32.xlu0 %v915
        %v917 = vpop.xlane.xlu0 %916
        %v918 = vsel %vm623, %v896, -inf
        %919 = vmax.xlane.f32.xlu0 %v918
        %v920 = vpop.xlane.xlu0 %919
        %v921 = vsel %vm623, %v889, 0.0
        %922 = vadd.xlane.f32.xlu0 %v921
        %v923 = vpop.xlane.xlu0 %922
        %v924 = vsel %vm623, %v890, 0.0
        %925 = vadd.xlane.f32.xlu0 %v924
        %v926 = vpop.xlane.xlu0 %925
        %v927 = vsel %vm623, %v891, 0.0
        %928 = vadd.xlane.f32.xlu0 %v927
        %v929 = vpop.xlane.xlu0 %928
        %v930 = vsel %vm623, %v892, 0.0
        %931 = vadd.xlane.f32.xlu0 %v930
        %v932 = vpop.xlane.xlu0 %931
        %v933 = vsel %vm623, %v893, 0.0
        %934 = vadd.xlane.f32.xlu0 %v933
        %v935 = vpop.xlane.xlu0 %934
        %v936 = vsel %vm623, %v894, 0.0
        %937 = vadd.xlane.f32.xlu0 %v936
        %v938 = vpop.xlane.xlu0 %937
        %v939 = vsel %vm623, %v895, 0.0
        %940 = vadd.xlane.f32.xlu0 %v939
        %v941 = vpop.xlane.xlu0 %940
        %v942 = vsel %vm623, %v896, 0.0
        %943 = vadd.xlane.f32.xlu0 %v942
        %v944 = vpop.xlane.xlu0 %943
        %v945 = vrcp.pop 16.0
        %v946 = vmul.f32 %v923, %v945
        %v947 = vmul.f32 %v926, %v945
        %v948 = vmul.f32 %v929, %v945
        %v949 = vmul.f32 %v932, %v945
        %v950 = vmul.f32 %v935, %v945
        %v951 = vmul.f32 %v938, %v945
        %v952 = vmul.f32 %v941, %v945
        %v953 = vmul.f32 %v944, %v945
        %vm954 = vcmask 15360
        %955 = vst.msk [vmem:[#allocation2] sm:$0xff] %vm954, 0.0
        %956 = vst.msk [vmem:[#allocation2 + $0x8] sm:$0xff] %vm954, 0.0
        %vm957 = vcmask 10240
        %958 = vst.msk [vmem:[#allocation2 + $0x10] sm:$0x7] %vm957, 0.0
        %959 = vst.msk [vmem:[#allocation2 + $0x18] sm:$0xff] %vm954, 0.0
        %960 = vst.msk [vmem:[#allocation2 + $0x20] sm:$0xff] %vm954, 0.0
        %961 = vst.msk [vmem:[#allocation2 + $0x28] sm:$0x7] %vm957, 0.0
        %962 = vst.msk [vmem:[#allocation2 + $0x30] sm:$0xff] %vm954, 0.0
        %963 = vst.msk [vmem:[#allocation2 + $0x38] sm:$0xff] %vm954, 0.0
        %964 = vst.msk [vmem:[#allocation2 + $0x40] sm:$0x7] %vm957, 0.0
        %965 = vst.msk [vmem:[#allocation2 + $0x48] sm:$0xff] %vm954, 0.0
        %966 = vst.msk [vmem:[#allocation2 + $0x50] sm:$0xff] %vm954, 0.0
        %967 = vst.msk [vmem:[#allocation2 + $0x58] sm:$0x7] %vm957, 0.0
        %968 = vst.msk [vmem:[#allocation2 + $0x60] sm:$0xff] %vm954, 0.0
        %969 = vst.msk [vmem:[#allocation2 + $0x68] sm:$0xff] %vm954, 0.0
        %970 = vst.msk [vmem:[#allocation2 + $0x70] sm:$0x7] %vm957, 0.0
        %971 = vst.msk [vmem:[#allocation2 + $0x78] sm:$0xff] %vm954, 0.0
        %972 = vst.msk [vmem:[#allocation2 + $0x80] sm:$0xff] %vm954, 0.0
        %973 = vst.msk [vmem:[#allocation2 + $0x88] sm:$0x7] %vm957, 0.0
        %974 = vst.msk [vmem:[#allocation2 + $0x90] sm:$0xff] %vm954, 0.0
        %975 = vst.msk [vmem:[#allocation2 + $0x98] sm:$0xff] %vm954, 0.0
        %976 = vst.msk [vmem:[#allocation2 + $0xa0] sm:$0x7] %vm957, 0.0
        %977 = vst.msk [vmem:[#allocation2 + $0xa8] sm:$0xff] %vm954, 0.0
        %978 = vst.msk [vmem:[#allocation2 + $0xb0] sm:$0xff] %vm954, 0.0
        %979 = vst.msk [vmem:[#allocation2 + $0xb8] sm:$0x7] %vm957, 0.0
        %980 = vst.msk [vmem:[#allocation2 + $0xc0] sm:$0xff] %vm954, 0.0
        %981 = vst.msk [vmem:[#allocation2 + $0xc8] sm:$0xff] %vm954, 0.0
        %982 = vst.msk [vmem:[#allocation2 + $0xd0] sm:$0x7] %vm957, 0.0
        %983 = vst.msk [vmem:[#allocation2 + $0xd8] sm:$0xff] %vm954, 0.0
        %984 = vst.msk [vmem:[#allocation2 + $0xe0] sm:$0xff] %vm954, 0.0
        %985 = vst.msk [vmem:[#allocation2 + $0xe8] sm:$0x7] %vm957, 0.0
        %986 = vst.msk [vmem:[#allocation2 + $0xf0] sm:$0xff] %vm954, 0.0
        %987 = vst.msk [vmem:[#allocation2 + $0xf8] sm:$0xff] %vm954, 0.0
        %988 = vst.msk [vmem:[#allocation2 + $0x100] sm:$0x7] %vm957, 0.0
        %989 = vst.msk [vmem:[#allocation2 + $0x108] sm:$0xff] %vm954, 0.0
        %990 = vst.msk [vmem:[#allocation2 + $0x110] sm:$0xff] %vm954, 0.0
        %991 = vst.msk [vmem:[#allocation2 + $0x118] sm:$0x7] %vm957, 0.0
        %992 = vst.msk [vmem:[#allocation2 + $0x120] sm:$0xff] %vm954, 0.0
        %993 = vst.msk [vmem:[#allocation2 + $0x128] sm:$0xff] %vm954, 0.0
        %994 = vst.msk [vmem:[#allocation2 + $0x130] sm:$0x7] %vm957, 0.0
        %995 = vst.msk [vmem:[#allocation2 + $0x138] sm:$0xff] %vm954, 0.0
        %996 = vst.msk [vmem:[#allocation2 + $0x140] sm:$0xff] %vm954, 0.0
        %997 = vst.msk [vmem:[#allocation2 + $0x148] sm:$0x7] %vm957, 0.0
        %s998 = scalar_lea.vmem [#allocation2], 72
        %vm999 = vcmask 7168
        %1000 = vst.msk [vmem:[%s998 + $0x8] sm:$0xff] %vm999, %v899
        %1001 = vst.msk [vmem:[%s998 + $0x20] sm:$0xff] %vm999, %v902
        %1002 = vst.msk [vmem:[%s998 + $0x38] sm:$0xff] %vm999, %v905
        %1003 = vst.msk [vmem:[%s998 + $0x50] sm:$0xff] %vm999, %v908
        %1004 = vst.msk [vmem:[%s998 + $0x68] sm:$0xff] %vm999, %v911
        %1005 = vst.msk [vmem:[%s998 + $0x80] sm:$0xff] %vm999, %v914
        %1006 = vst.msk [vmem:[%s998 + $0x98] sm:$0xff] %vm999, %v917
        %1007 = vst.msk [vmem:[%s998 + $0xb0] sm:$0xff] %vm999, %v920
        %vm1008 = vcmask 15368
        %1009 = vst.msk [vmem:[%s998 + $0x8] sm:$0xff] %vm1008, %v946
        %1010 = vst.msk [vmem:[%s998 + $0x20] sm:$0xff] %vm1008, %v947
        %1011 = vst.msk [vmem:[%s998 + $0x38] sm:$0xff] %vm1008, %v948
        %1012 = vst.msk [vmem:[%s998 + $0x50] sm:$0xff] %vm1008, %v949
        %1013 = vst.msk [vmem:[%s998 + $0x68] sm:$0xff] %vm1008, %v950
        %1014 = vst.msk [vmem:[%s998 + $0x80] sm:$0xff] %vm1008, %v951
        %1015 = vst.msk [vmem:[%s998 + $0x98] sm:$0xff] %vm1008, %v952
        %1016 = vst.msk [vmem:[%s998 + $0xb0] sm:$0xff] %vm1008, %v953
        %v1017 = vld [vmem:[#allocation2 + $0x5] sm:$0xff]
        %v1018 = vld [vmem:[#allocation2 + $0x1d] sm:$0xff]
        %v1019 = vld [vmem:[#allocation2 + $0x35] sm:$0xff]
        %v1020 = vld [vmem:[#allocation2 + $0x4d] sm:$0xff]
        %v1021 = vld [vmem:[#allocation2 + $0x65] sm:$0xff]
        %v1022 = vld [vmem:[#allocation2 + $0x7d] sm:$0xff]
        %v1023 = vld [vmem:[#allocation2 + $0x95] sm:$0xff]
        %v1024 = vld [vmem:[#allocation2 + $0xad] sm:$0xff]
        %1025 = vst.msk [vmem:[#allocation3] sm:$0xff] %vm954, %v1017
        %1026 = vst.msk [vmem:[#allocation3 + $0x8] sm:$0xff] %vm954, %v1018
        %1027 = vst.msk [vmem:[#allocation3 + $0x10] sm:$0xff] %vm954, %v1019
        %1028 = vst.msk [vmem:[#allocation3 + $0x18] sm:$0xff] %vm954, %v1020
        %1029 = vst.msk [vmem:[#allocation3 + $0x20] sm:$0xff] %vm954, %v1021
        %1030 = vst.msk [vmem:[#allocation3 + $0x28] sm:$0xff] %vm954, %v1022
        %1031 = vst.msk [vmem:[#allocation3 + $0x30] sm:$0xff] %vm954, %v1023
        %1032 = vst.msk [vmem:[#allocation3 + $0x38] sm:$0xff] %vm954, %v1024
        %v1033 = vld [vmem:[#allocation2 + $0x6] sm:$0xff]
        %v1034 = vld [vmem:[#allocation2 + $0x1e] sm:$0xff]
        %v1035 = vld [vmem:[#allocation2 + $0x36] sm:$0xff]
        %v1036 = vld [vmem:[#allocation2 + $0x4e] sm:$0xff]
        %v1037 = vld [vmem:[#allocation2 + $0x66] sm:$0xff]
        %v1038 = vld [vmem:[#allocation2 + $0x7e] sm:$0xff]
        %v1039 = vld [vmem:[#allocation2 + $0x96] sm:$0xff]
        %v1040 = vld [vmem:[#allocation2 + $0xae] sm:$0xff]
        %1049 = vrot.lane.b32.xlu0 %v1033, 2
        %v1050 = vpop.permute.xlu0 %1049
        %1051 = vrot.lane.b32.xlu0 %v1034, 2
        %v1052 = vpop.permute.xlu0 %1051
        %1053 = vrot.lane.b32.xlu0 %v1035, 2
        %v1054 = vpop.permute.xlu0 %1053
        %1055 = vrot.lane.b32.xlu0 %v1036, 2
        %v1056 = vpop.permute.xlu0 %1055
        %1057 = vrot.lane.b32.xlu0 %v1037, 2
        %v1058 = vpop.permute.xlu0 %1057
        %1059 = vrot.lane.b32.xlu0 %v1038, 2
        %v1060 = vpop.permute.xlu0 %1059
        %1061 = vrot.lane.b32.xlu0 %v1039, 2
        %v1062 = vpop.permute.xlu0 %1061
        %1063 = vrot.lane.b32.xlu0 %v1040, 2
        %v1064 = vpop.permute.xlu0 %1063
        %vm1073 = vcmask 31760
        %1074 = vst.msk [vmem:[#allocation3] sm:$0xff] %vm1073, %v1050
        %1075 = vst.msk [vmem:[#allocation3 + $0x8] sm:$0xff] %vm1073, %v1052
        %1076 = vst.msk [vmem:[#allocation3 + $0x10] sm:$0xff] %vm1073, %v1054
        %1077 = vst.msk [vmem:[#allocation3 + $0x18] sm:$0xff] %vm1073, %v1056
        %1078 = vst.msk [vmem:[#allocation3 + $0x20] sm:$0xff] %vm1073, %v1058
        %1079 = vst.msk [vmem:[#allocation3 + $0x28] sm:$0xff] %vm1073, %v1060
        %1080 = vst.msk [vmem:[#allocation3 + $0x30] sm:$0xff] %vm1073, %v1062
        %1081 = vst.msk [vmem:[#allocation3 + $0x38] sm:$0xff] %vm1073, %v1064
        %v1082 = vld [vmem:[#allocation2 + $0x7] sm:$0xff]
        %v1083 = vld [vmem:[#allocation2 + $0x1f] sm:$0xff]
        %v1084 = vld [vmem:[#allocation2 + $0x37] sm:$0xff]
        %v1085 = vld [vmem:[#allocation2 + $0x4f] sm:$0xff]
        %v1086 = vld [vmem:[#allocation2 + $0x67] sm:$0xff]
        %v1087 = vld [vmem:[#allocation2 + $0x7f] sm:$0xff]
        %v1088 = vld [vmem:[#allocation2 + $0x97] sm:$0xff]
        %v1089 = vld [vmem:[#allocation2 + $0xaf] sm:$0xff]
        %1098 = vrot.lane.b32.xlu0 %v1082, 4
        %v1099 = vpop.permute.xlu0 %1098
        %1100 = vrot.lane.b32.xlu0 %v1083, 4
        %v1101 = vpop.permute.xlu0 %1100
        %1102 = vrot.lane.b32.xlu0 %v1084, 4
        %v1103 = vpop.permute.xlu0 %1102
        %1104 = vrot.lane.b32.xlu0 %v1085, 4
        %v1105 = vpop.permute.xlu0 %1104
        %1106 = vrot.lane.b32.xlu0 %v1086, 4
        %v1107 = vpop.permute.xlu0 %1106
        %1108 = vrot.lane.b32.xlu0 %v1087, 4
        %v1109 = vpop.permute.xlu0 %1108
        %1110 = vrot.lane.b32.xlu0 %v1088, 4
        %v1111 = vpop.permute.xlu0 %1110
        %1112 = vrot.lane.b32.xlu0 %v1089, 4
        %v1113 = vpop.permute.xlu0 %1112
        %vm1122 = vcmask 48160
        %1123 = vst.msk [vmem:[#allocation3] sm:$0xff] %vm1122, %v1099
        %1124 = vst.msk [vmem:[#allocation3 + $0x8] sm:$0xff] %vm1122, %v1101
        %1125 = vst.msk [vmem:[#allocation3 + $0x10] sm:$0xff] %vm1122, %v1103
        %1126 = vst.msk [vmem:[#allocation3 + $0x18] sm:$0xff] %vm1122, %v1105
        %1127 = vst.msk [vmem:[#allocation3 + $0x20] sm:$0xff] %vm1122, %v1107
        %1128 = vst.msk [vmem:[#allocation3 + $0x28] sm:$0xff] %vm1122, %v1109
        %1129 = vst.msk [vmem:[#allocation3 + $0x30] sm:$0xff] %vm1122, %v1111
        %1130 = vst.msk [vmem:[#allocation3 + $0x38] sm:$0xff] %vm1122, %v1113
        %v1131 = vld [vmem:[#allocation2 + $0x8] sm:$0xff]
        %v1132 = vld [vmem:[#allocation2 + $0x20] sm:$0xff]
        %v1133 = vld [vmem:[#allocation2 + $0x38] sm:$0xff]
        %v1134 = vld [vmem:[#allocation2 + $0x50] sm:$0xff]
        %v1135 = vld [vmem:[#allocation2 + $0x68] sm:$0xff]
        %v1136 = vld [vmem:[#allocation2 + $0x80] sm:$0xff]
        %v1137 = vld [vmem:[#allocation2 + $0x98] sm:$0xff]
        %v1138 = vld [vmem:[#allocation2 + $0xb0] sm:$0xff]
        %1147 = vrot.lane.b32.xlu0 %v1131, 6
        %v1148 = vpop.permute.xlu0 %1147
        %1149 = vrot.lane.b32.xlu0 %v1132, 6
        %v1150 = vpop.permute.xlu0 %1149
        %1151 = vrot.lane.b32.xlu0 %v1133, 6
        %v1152 = vpop.permute.xlu0 %1151
        %1153 = vrot.lane.b32.xlu0 %v1134, 6
        %v1154 = vpop.permute.xlu0 %1153
        %1155 = vrot.lane.b32.xlu0 %v1135, 6
        %v1156 = vpop.permute.xlu0 %1155
        %1157 = vrot.lane.b32.xlu0 %v1136, 6
        %v1158 = vpop.permute.xlu0 %1157
        %1159 = vrot.lane.b32.xlu0 %v1137, 6
        %v1160 = vpop.permute.xlu0 %1159
        %1161 = vrot.lane.b32.xlu0 %v1138, 6
        %v1162 = vpop.permute.xlu0 %1161
        %vm1171 = vcmask 64560
        %1172 = vst.msk [vmem:[#allocation3] sm:$0xff] %vm1171, %v1148
        %1173 = vst.msk [vmem:[#allocation3 + $0x8] sm:$0xff] %vm1171, %v1150
        %1174 = vst.msk [vmem:[#allocation3 + $0x10] sm:$0xff] %vm1171, %v1152
        %1175 = vst.msk [vmem:[#allocation3 + $0x18] sm:$0xff] %vm1171, %v1154
        %1176 = vst.msk [vmem:[#allocation3 + $0x20] sm:$0xff] %vm1171, %v1156
        %1177 = vst.msk [vmem:[#allocation3 + $0x28] sm:$0xff] %vm1171, %v1158
        %1178 = vst.msk [vmem:[#allocation3 + $0x30] sm:$0xff] %vm1171, %v1160
        %1179 = vst.msk [vmem:[#allocation3 + $0x38] sm:$0xff] %vm1171, %v1162
        %v1180 = vld [vmem:[#allocation2 + $0x9] sm:$0xff]
        %v1181 = vld [vmem:[#allocation2 + $0x21] sm:$0xff]
        %v1182 = vld [vmem:[#allocation2 + $0x39] sm:$0xff]
        %v1183 = vld [vmem:[#allocation2 + $0x51] sm:$0xff]
        %v1184 = vld [vmem:[#allocation2 + $0x69] sm:$0xff]
        %v1185 = vld [vmem:[#allocation2 + $0x81] sm:$0xff]
        %v1186 = vld [vmem:[#allocation2 + $0x99] sm:$0xff]
        %v1187 = vld [vmem:[#allocation2 + $0xb1] sm:$0xff]
        %1196 = vrot.lane.b32.xlu0 %v1180, 8
        %v1197 = vpop.permute.xlu0 %1196
        %1198 = vrot.lane.b32.xlu0 %v1181, 8
        %v1199 = vpop.permute.xlu0 %1198
        %1200 = vrot.lane.b32.xlu0 %v1182, 8
        %v1201 = vpop.permute.xlu0 %1200
        %1202 = vrot.lane.b32.xlu0 %v1183, 8
        %v1203 = vpop.permute.xlu0 %1202
        %1204 = vrot.lane.b32.xlu0 %v1184, 8
        %v1205 = vpop.permute.xlu0 %1204
        %1206 = vrot.lane.b32.xlu0 %v1185, 8
        %v1207 = vpop.permute.xlu0 %1206
        %1208 = vrot.lane.b32.xlu0 %v1186, 8
        %v1209 = vpop.permute.xlu0 %1208
        %1210 = vrot.lane.b32.xlu0 %v1187, 8
        %v1211 = vpop.permute.xlu0 %1210
        %vm1220 = vcmask 80960
        %1221 = vst.msk [vmem:[#allocation3] sm:$0xff] %vm1220, %v1197
        %1222 = vst.msk [vmem:[#allocation3 + $0x8] sm:$0xff] %vm1220, %v1199
        %1223 = vst.msk [vmem:[#allocation3 + $0x10] sm:$0xff] %vm1220, %v1201
        %1224 = vst.msk [vmem:[#allocation3 + $0x18] sm:$0xff] %vm1220, %v1203
        %1225 = vst.msk [vmem:[#allocation3 + $0x20] sm:$0xff] %vm1220, %v1205
        %1226 = vst.msk [vmem:[#allocation3 + $0x28] sm:$0xff] %vm1220, %v1207
        %1227 = vst.msk [vmem:[#allocation3 + $0x30] sm:$0xff] %vm1220, %v1209
        %1228 = vst.msk [vmem:[#allocation3 + $0x38] sm:$0xff] %vm1220, %v1211
        %v1229 = vld [vmem:[#allocation2 + $0xa] sm:$0xff]
        %v1230 = vld [vmem:[#allocation2 + $0x22] sm:$0xff]
        %v1231 = vld [vmem:[#allocation2 + $0x3a] sm:$0xff]
        %v1232 = vld [vmem:[#allocation2 + $0x52] sm:$0xff]
        %v1233 = vld [vmem:[#allocation2 + $0x6a] sm:$0xff]
        %v1234 = vld [vmem:[#allocation2 + $0x82] sm:$0xff]
        %v1235 = vld [vmem:[#allocation2 + $0x9a] sm:$0xff]
        %v1236 = vld [vmem:[#allocation2 + $0xb2] sm:$0xff]
        %1245 = vrot.lane.b32.xlu0 %v1229, 10
        %v1246 = vpop.permute.xlu0 %1245
        %1247 = vrot.lane.b32.xlu0 %v1230, 10
        %v1248 = vpop.permute.xlu0 %1247
        %1249 = vrot.lane.b32.xlu0 %v1231, 10
        %v1250 = vpop.permute.xlu0 %1249
        %1251 = vrot.lane.b32.xlu0 %v1232, 10
        %v1252 = vpop.permute.xlu0 %1251
        %1253 = vrot.lane.b32.xlu0 %v1233, 10
        %v1254 = vpop.permute.xlu0 %1253
        %1255 = vrot.lane.b32.xlu0 %v1234, 10
        %v1256 = vpop.permute.xlu0 %1255
        %1257 = vrot.lane.b32.xlu0 %v1235, 10
        %v1258 = vpop.permute.xlu0 %1257
        %1259 = vrot.lane.b32.xlu0 %v1236, 10
        %v1260 = vpop.permute.xlu0 %1259
        %vm1269 = vcmask 97360
        %1270 = vst.msk [vmem:[#allocation3] sm:$0xff] %vm1269, %v1246
        %1271 = vst.msk [vmem:[#allocation3 + $0x8] sm:$0xff] %vm1269, %v1248
        %1272 = vst.msk [vmem:[#allocation3 + $0x10] sm:$0xff] %vm1269, %v1250
        %1273 = vst.msk [vmem:[#allocation3 + $0x18] sm:$0xff] %vm1269, %v1252
        %1274 = vst.msk [vmem:[#allocation3 + $0x20] sm:$0xff] %vm1269, %v1254
        %1275 = vst.msk [vmem:[#allocation3 + $0x28] sm:$0xff] %vm1269, %v1256
        %1276 = vst.msk [vmem:[#allocation3 + $0x30] sm:$0xff] %vm1269, %v1258
        %1277 = vst.msk [vmem:[#allocation3 + $0x38] sm:$0xff] %vm1269, %v1260
        %v1278 = vld [vmem:[#allocation2 + $0xb] sm:$0xff]
        %v1279 = vld [vmem:[#allocation2 + $0x23] sm:$0xff]
        %v1280 = vld [vmem:[#allocation2 + $0x3b] sm:$0xff]
        %v1281 = vld [vmem:[#allocation2 + $0x53] sm:$0xff]
        %v1282 = vld [vmem:[#allocation2 + $0x6b] sm:$0xff]
        %v1283 = vld [vmem:[#allocation2 + $0x83] sm:$0xff]
        %v1284 = vld [vmem:[#allocation2 + $0x9b] sm:$0xff]
        %v1285 = vld [vmem:[#allocation2 + $0xb3] sm:$0xff]
        %1294 = vrot.lane.b32.xlu0 %v1278, 12
        %v1295 = vpop.permute.xlu0 %1294
        %1296 = vrot.lane.b32.xlu0 %v1279, 12
        %v1297 = vpop.permute.xlu0 %1296
        %1298 = vrot.lane.b32.xlu0 %v1280, 12
        %v1299 = vpop.permute.xlu0 %1298
        %1300 = vrot.lane.b32.xlu0 %v1281, 12
        %v1301 = vpop.permute.xlu0 %1300
        %1302 = vrot.lane.b32.xlu0 %v1282, 12
        %v1303 = vpop.permute.xlu0 %1302
        %1304 = vrot.lane.b32.xlu0 %v1283, 12
        %v1305 = vpop.permute.xlu0 %1304
        %1306 = vrot.lane.b32.xlu0 %v1284, 12
        %v1307 = vpop.permute.xlu0 %1306
        %1308 = vrot.lane.b32.xlu0 %v1285, 12
        %v1309 = vpop.permute.xlu0 %1308
        %vm1318 = vcmask 113760
        %1319 = vst.msk [vmem:[#allocation3] sm:$0xff] %vm1318, %v1295
        %1320 = vst.msk [vmem:[#allocation3 + $0x8] sm:$0xff] %vm1318, %v1297
        %1321 = vst.msk [vmem:[#allocation3 + $0x10] sm:$0xff] %vm1318, %v1299
        %1322 = vst.msk [vmem:[#allocation3 + $0x18] sm:$0xff] %vm1318, %v1301
        %1323 = vst.msk [vmem:[#allocation3 + $0x20] sm:$0xff] %vm1318, %v1303
        %1324 = vst.msk [vmem:[#allocation3 + $0x28] sm:$0xff] %vm1318, %v1305
        %1325 = vst.msk [vmem:[#allocation3 + $0x30] sm:$0xff] %vm1318, %v1307
        %1326 = vst.msk [vmem:[#allocation3 + $0x38] sm:$0xff] %vm1318, %v1309
        %s1327 = scalar_lea.vmem [#allocation2], 24
        %v1328 = vld [vmem:[%s1327 + $0x5] sm:$0xff]
        %v1329 = vld [vmem:[%s1327 + $0x1d] sm:$0xff]
        %v1330 = vld [vmem:[%s1327 + $0x35] sm:$0xff]
        %v1331 = vld [vmem:[%s1327 + $0x4d] sm:$0xff]
        %v1332 = vld [vmem:[%s1327 + $0x65] sm:$0xff]
        %v1333 = vld [vmem:[%s1327 + $0x7d] sm:$0xff]
        %v1334 = vld [vmem:[%s1327 + $0x95] sm:$0xff]
        %v1335 = vld [vmem:[%s1327 + $0xad] sm:$0xff]
        %1344 = vrot.lane.b32.xlu0 %v1328, 14
        %v1345 = vpop.permute.xlu0 %1344
        %1346 = vrot.lane.b32.xlu0 %v1329, 14
        %v1347 = vpop.permute.xlu0 %1346
        %1348 = vrot.lane.b32.xlu0 %v1330, 14
        %v1349 = vpop.permute.xlu0 %1348
        %1350 = vrot.lane.b32.xlu0 %v1331, 14
        %v1351 = vpop.permute.xlu0 %1350
        %1352 = vrot.lane.b32.xlu0 %v1332, 14
        %v1353 = vpop.permute.xlu0 %1352
        %1354 = vrot.lane.b32.xlu0 %v1333, 14
        %v1355 = vpop.permute.xlu0 %1354
        %1356 = vrot.lane.b32.xlu0 %v1334, 14
        %v1357 = vpop.permute.xlu0 %1356
        %1358 = vrot.lane.b32.xlu0 %v1335, 14
        %v1359 = vpop.permute.xlu0 %1358
        %vm1368 = vcmask 130160
        %1369 = vst.msk [vmem:[#allocation3] sm:$0xff] %vm1368, %v1345
        %1370 = vst.msk [vmem:[#allocation3 + $0x8] sm:$0xff] %vm1368, %v1347
        %1371 = vst.msk [vmem:[#allocation3 + $0x10] sm:$0xff] %vm1368, %v1349
        %1372 = vst.msk [vmem:[#allocation3 + $0x18] sm:$0xff] %vm1368, %v1351
        %1373 = vst.msk [vmem:[#allocation3 + $0x20] sm:$0xff] %vm1368, %v1353
        %1374 = vst.msk [vmem:[#allocation3 + $0x28] sm:$0xff] %vm1368, %v1355
        %1375 = vst.msk [vmem:[#allocation3 + $0x30] sm:$0xff] %vm1368, %v1357
        %1376 = vst.msk [vmem:[#allocation3 + $0x38] sm:$0xff] %vm1368, %v1359
        %v1377 = vld [vmem:[%s1327 + $0x6] sm:$0xff]
        %v1378 = vld [vmem:[%s1327 + $0x1e] sm:$0xff]
        %v1379 = vld [vmem:[%s1327 + $0x36] sm:$0xff]
        %v1380 = vld [vmem:[%s1327 + $0x4e] sm:$0xff]
        %v1381 = vld [vmem:[%s1327 + $0x66] sm:$0xff]
        %v1382 = vld [vmem:[%s1327 + $0x7e] sm:$0xff]
        %v1383 = vld [vmem:[%s1327 + $0x96] sm:$0xff]
        %v1384 = vld [vmem:[%s1327 + $0xae] sm:$0xff]
        %1393 = vrot.lane.b32.xlu0 %v1377, 16
        %v1394 = vpop.permute.xlu0 %1393
        %1395 = vrot.lane.b32.xlu0 %v1378, 16
        %v1396 = vpop.permute.xlu0 %1395
        %1397 = vrot.lane.b32.xlu0 %v1379, 16
        %v1398 = vpop.permute.xlu0 %1397
        %1399 = vrot.lane.b32.xlu0 %v1380, 16
        %v1400 = vpop.permute.xlu0 %1399
        %1401 = vrot.lane.b32.xlu0 %v1381, 16
        %v1402 = vpop.permute.xlu0 %1401
        %1403 = vrot.lane.b32.xlu0 %v1382, 16
        %v1404 = vpop.permute.xlu0 %1403
        %1405 = vrot.lane.b32.xlu0 %v1383, 16
        %v1406 = vpop.permute.xlu0 %1405
        %1407 = vrot.lane.b32.xlu0 %v1384, 16
        %v1408 = vpop.permute.xlu0 %1407
        %vm1417 = vcmask 146560
        %1418 = vst.msk [vmem:[#allocation3] sm:$0xff] %vm1417, %v1394
        %1419 = vst.msk [vmem:[#allocation3 + $0x8] sm:$0xff] %vm1417, %v1396
        %1420 = vst.msk [vmem:[#allocation3 + $0x10] sm:$0xff] %vm1417, %v1398
        %1421 = vst.msk [vmem:[#allocation3 + $0x18] sm:$0xff] %vm1417, %v1400
        %1422 = vst.msk [vmem:[#allocation3 + $0x20] sm:$0xff] %vm1417, %v1402
        %1423 = vst.msk [vmem:[#allocation3 + $0x28] sm:$0xff] %vm1417, %v1404
        %1424 = vst.msk [vmem:[#allocation3 + $0x30] sm:$0xff] %vm1417, %v1406
        %1425 = vst.msk [vmem:[#allocation3 + $0x38] sm:$0xff] %vm1417, %v1408
        %v1426 = vld [vmem:[%s1327 + $0x7] sm:$0xff]
        %v1427 = vld [vmem:[%s1327 + $0x1f] sm:$0xff]
        %v1428 = vld [vmem:[%s1327 + $0x37] sm:$0xff]
        %v1429 = vld [vmem:[%s1327 + $0x4f] sm:$0xff]
        %v1430 = vld [vmem:[%s1327 + $0x67] sm:$0xff]
        %v1431 = vld [vmem:[%s1327 + $0x7f] sm:$0xff]
        %v1432 = vld [vmem:[%s1327 + $0x97] sm:$0xff]
        %v1433 = vld [vmem:[%s1327 + $0xaf] sm:$0xff]
        %1442 = vrot.lane.b32.xlu0 %v1426, 18
        %v1443 = vpop.permute.xlu0 %1442
        %1444 = vrot.lane.b32.xlu0 %v1427, 18
        %v1445 = vpop.permute.xlu0 %1444
        %1446 = vrot.lane.b32.xlu0 %v1428, 18
        %v1447 = vpop.permute.xlu0 %1446
        %1448 = vrot.lane.b32.xlu0 %v1429, 18
        %v1449 = vpop.permute.xlu0 %1448
        %1450 = vrot.lane.b32.xlu0 %v1430, 18
        %v1451 = vpop.permute.xlu0 %1450
        %1452 = vrot.lane.b32.xlu0 %v1431, 18
        %v1453 = vpop.permute.xlu0 %1452
        %1454 = vrot.lane.b32.xlu0 %v1432, 18
        %v1455 = vpop.permute.xlu0 %1454
        %1456 = vrot.lane.b32.xlu0 %v1433, 18
        %v1457 = vpop.permute.xlu0 %1456
        %vm1466 = vcmask 162960
        %1467 = vst.msk [vmem:[#allocation3] sm:$0xff] %vm1466, %v1443
        %1468 = vst.msk [vmem:[#allocation3 + $0x8] sm:$0xff] %vm1466, %v1445
        %1469 = vst.msk [vmem:[#allocation3 + $0x10] sm:$0xff] %vm1466, %v1447
        %1470 = vst.msk [vmem:[#allocation3 + $0x18] sm:$0xff] %vm1466, %v1449
        %1471 = vst.msk [vmem:[#allocation3 + $0x20] sm:$0xff] %vm1466, %v1451
        %1472 = vst.msk [vmem:[#allocation3 + $0x28] sm:$0xff] %vm1466, %v1453
        %1473 = vst.msk [vmem:[#allocation3 + $0x30] sm:$0xff] %vm1466, %v1455
        %1474 = vst.msk [vmem:[#allocation3 + $0x38] sm:$0xff] %vm1466, %v1457
        %v1475 = vld [vmem:[%s1327 + $0x8] sm:$0xff]
        %v1476 = vld [vmem:[%s1327 + $0x20] sm:$0xff]
        %v1477 = vld [vmem:[%s1327 + $0x38] sm:$0xff]
        %v1478 = vld [vmem:[%s1327 + $0x50] sm:$0xff]
        %v1479 = vld [vmem:[%s1327 + $0x68] sm:$0xff]
        %v1480 = vld [vmem:[%s1327 + $0x80] sm:$0xff]
        %v1481 = vld [vmem:[%s1327 + $0x98] sm:$0xff]
        %v1482 = vld [vmem:[%s1327 + $0xb0] sm:$0xff]
        %1491 = vrot.lane.b32.xlu0 %v1475, 20
        %v1492 = vpop.permute.xlu0 %1491
        %1493 = vrot.lane.b32.xlu0 %v1476, 20
        %v1494 = vpop.permute.xlu0 %1493
        %1495 = vrot.lane.b32.xlu0 %v1477, 20
        %v1496 = vpop.permute.xlu0 %1495
        %1497 = vrot.lane.b32.xlu0 %v1478, 20
        %v1498 = vpop.permute.xlu0 %1497
        %1499 = vrot.lane.b32.xlu0 %v1479, 20
        %v1500 = vpop.permute.xlu0 %1499
        %1501 = vrot.lane.b32.xlu0 %v1480, 20
        %v1502 = vpop.permute.xlu0 %1501
        %1503 = vrot.lane.b32.xlu0 %v1481, 20
        %v1504 = vpop.permute.xlu0 %1503
        %1505 = vrot.lane.b32.xlu0 %v1482, 20
        %v1506 = vpop.permute.xlu0 %1505
        %vm1515 = vcmask 179360
        %1516 = vst.msk [vmem:[#allocation3] sm:$0xff] %vm1515, %v1492
        %1517 = vst.msk [vmem:[#allocation3 + $0x8] sm:$0xff] %vm1515, %v1494
        %1518 = vst.msk [vmem:[#allocation3 + $0x10] sm:$0xff] %vm1515, %v1496
        %1519 = vst.msk [vmem:[#allocation3 + $0x18] sm:$0xff] %vm1515, %v1498
        %1520 = vst.msk [vmem:[#allocation3 + $0x20] sm:$0xff] %vm1515, %v1500
        %1521 = vst.msk [vmem:[#allocation3 + $0x28] sm:$0xff] %vm1515, %v1502
        %1522 = vst.msk [vmem:[#allocation3 + $0x30] sm:$0xff] %vm1515, %v1504
        %1523 = vst.msk [vmem:[#allocation3 + $0x38] sm:$0xff] %vm1515, %v1506
        %v1524 = vld [vmem:[%s1327 + $0x9] sm:$0xff]
        %v1525 = vld [vmem:[%s1327 + $0x21] sm:$0xff]
        %v1526 = vld [vmem:[%s1327 + $0x39] sm:$0xff]
        %v1527 = vld [vmem:[%s1327 + $0x51] sm:$0xff]
        %v1528 = vld [vmem:[%s1327 + $0x69] sm:$0xff]
        %v1529 = vld [vmem:[%s1327 + $0x81] sm:$0xff]
        %v1530 = vld [vmem:[%s1327 + $0x99] sm:$0xff]
        %v1531 = vld [vmem:[%s1327 + $0xb1] sm:$0xff]
        %1540 = vrot.lane.b32.xlu0 %v1524, 22
        %v1541 = vpop.permute.xlu0 %1540
        %1542 = vrot.lane.b32.xlu0 %v1525, 22
        %v1543 = vpop.permute.xlu0 %1542
        %1544 = vrot.lane.b32.xlu0 %v1526, 22
        %v1545 = vpop.permute.xlu0 %1544
        %1546 = vrot.lane.b32.xlu0 %v1527, 22
        %v1547 = vpop.permute.xlu0 %1546
        %1548 = vrot.lane.b32.xlu0 %v1528, 22
        %v1549 = vpop.permute.xlu0 %1548
        %1550 = vrot.lane.b32.xlu0 %v1529, 22
        %v1551 = vpop.permute.xlu0 %1550
        %1552 = vrot.lane.b32.xlu0 %v1530, 22
        %v1553 = vpop.permute.xlu0 %1552
        %1554 = vrot.lane.b32.xlu0 %v1531, 22
        %v1555 = vpop.permute.xlu0 %1554
        %vm1564 = vcmask 195760
        %1565 = vst.msk [vmem:[#allocation3] sm:$0xff] %vm1564, %v1541
        %1566 = vst.msk [vmem:[#allocation3 + $0x8] sm:$0xff] %vm1564, %v1543
        %1567 = vst.msk [vmem:[#allocation3 + $0x10] sm:$0xff] %vm1564, %v1545
        %1568 = vst.msk [vmem:[#allocation3 + $0x18] sm:$0xff] %vm1564, %v1547
        %1569 = vst.msk [vmem:[#allocation3 + $0x20] sm:$0xff] %vm1564, %v1549
        %1570 = vst.msk [vmem:[#allocation3 + $0x28] sm:$0xff] %vm1564, %v1551
        %1571 = vst.msk [vmem:[#allocation3 + $0x30] sm:$0xff] %vm1564, %v1553
        %1572 = vst.msk [vmem:[#allocation3 + $0x38] sm:$0xff] %vm1564, %v1555
        %v1573 = vld [vmem:[%s1327 + $0xa] sm:$0xff]
        %v1574 = vld [vmem:[%s1327 + $0x22] sm:$0xff]
        %v1575 = vld [vmem:[%s1327 + $0x3a] sm:$0xff]
        %v1576 = vld [vmem:[%s1327 + $0x52] sm:$0xff]
        %v1577 = vld [vmem:[%s1327 + $0x6a] sm:$0xff]
        %v1578 = vld [vmem:[%s1327 + $0x82] sm:$0xff]
        %v1579 = vld [vmem:[%s1327 + $0x9a] sm:$0xff]
        %v1580 = vld [vmem:[%s1327 + $0xb2] sm:$0xff]
        %1589 = vrot.lane.b32.xlu0 %v1573, 24
        %v1590 = vpop.permute.xlu0 %1589
        %1591 = vrot.lane.b32.xlu0 %v1574, 24
        %v1592 = vpop.permute.xlu0 %1591
        %1593 = vrot.lane.b32.xlu0 %v1575, 24
        %v1594 = vpop.permute.xlu0 %1593
        %1595 = vrot.lane.b32.xlu0 %v1576, 24
        %v1596 = vpop.permute.xlu0 %1595
        %1597 = vrot.lane.b32.xlu0 %v1577, 24
        %v1598 = vpop.permute.xlu0 %1597
        %1599 = vrot.lane.b32.xlu0 %v1578, 24
        %v1600 = vpop.permute.xlu0 %1599
        %1601 = vrot.lane.b32.xlu0 %v1579, 24
        %v1602 = vpop.permute.xlu0 %1601
        %1603 = vrot.lane.b32.xlu0 %v1580, 24
        %v1604 = vpop.permute.xlu0 %1603
        %vm1613 = vcmask 212160
        %1614 = vst.msk [vmem:[#allocation3] sm:$0xff] %vm1613, %v1590
        %1615 = vst.msk [vmem:[#allocation3 + $0x8] sm:$0xff] %vm1613, %v1592
        %1616 = vst.msk [vmem:[#allocation3 + $0x10] sm:$0xff] %vm1613, %v1594
        %1617 = vst.msk [vmem:[#allocation3 + $0x18] sm:$0xff] %vm1613, %v1596
        %1618 = vst.msk [vmem:[#allocation3 + $0x20] sm:$0xff] %vm1613, %v1598
        %1619 = vst.msk [vmem:[#allocation3 + $0x28] sm:$0xff] %vm1613, %v1600
        %1620 = vst.msk [vmem:[#allocation3 + $0x30] sm:$0xff] %vm1613, %v1602
        %1621 = vst.msk [vmem:[#allocation3 + $0x38] sm:$0xff] %vm1613, %v1604
        %v1622 = vld [vmem:[%s1327 + $0xb] sm:$0xff]
        %v1623 = vld [vmem:[%s1327 + $0x23] sm:$0xff]
        %v1624 = vld [vmem:[%s1327 + $0x3b] sm:$0xff]
        %v1625 = vld [vmem:[%s1327 + $0x53] sm:$0xff]
        %v1626 = vld [vmem:[%s1327 + $0x6b] sm:$0xff]
        %v1627 = vld [vmem:[%s1327 + $0x83] sm:$0xff]
        %v1628 = vld [vmem:[%s1327 + $0x9b] sm:$0xff]
        %v1629 = vld [vmem:[%s1327 + $0xb3] sm:$0xff]
        %1638 = vrot.lane.b32.xlu0 %v1622, 26
        %v1639 = vpop.permute.xlu0 %1638
        %1640 = vrot.lane.b32.xlu0 %v1623, 26
        %v1641 = vpop.permute.xlu0 %1640
        %1642 = vrot.lane.b32.xlu0 %v1624, 26
        %v1643 = vpop.permute.xlu0 %1642
        %1644 = vrot.lane.b32.xlu0 %v1625, 26
        %v1645 = vpop.permute.xlu0 %1644
        %1646 = vrot.lane.b32.xlu0 %v1626, 26
        %v1647 = vpop.permute.xlu0 %1646
        %1648 = vrot.lane.b32.xlu0 %v1627, 26
        %v1649 = vpop.permute.xlu0 %1648
        %1650 = vrot.lane.b32.xlu0 %v1628, 26
        %v1651 = vpop.permute.xlu0 %1650
        %1652 = vrot.lane.b32.xlu0 %v1629, 26
        %v1653 = vpop.permute.xlu0 %1652
        %vm1662 = vcmask 228560
        %1663 = vst.msk [vmem:[#allocation3] sm:$0xff] %vm1662, %v1639
        %1664 = vst.msk [vmem:[#allocation3 + $0x8] sm:$0xff] %vm1662, %v1641
        %1665 = vst.msk [vmem:[#allocation3 + $0x10] sm:$0xff] %vm1662, %v1643
        %1666 = vst.msk [vmem:[#allocation3 + $0x18] sm:$0xff] %vm1662, %v1645
        %1667 = vst.msk [vmem:[#allocation3 + $0x20] sm:$0xff] %vm1662, %v1647
        %1668 = vst.msk [vmem:[#allocation3 + $0x28] sm:$0xff] %vm1662, %v1649
        %1669 = vst.msk [vmem:[#allocation3 + $0x30] sm:$0xff] %vm1662, %v1651
        %1670 = vst.msk [vmem:[#allocation3 + $0x38] sm:$0xff] %vm1662, %v1653
        %s1671 = scalar_lea.vmem [#allocation2], 48
        %v1672 = vld [vmem:[%s1671 + $0x5] sm:$0xff]
        %v1673 = vld [vmem:[%s1671 + $0x1d] sm:$0xff]
        %v1674 = vld [vmem:[%s1671 + $0x35] sm:$0xff]
        %v1675 = vld [vmem:[%s1671 + $0x4d] sm:$0xff]
        %v1676 = vld [vmem:[%s1671 + $0x65] sm:$0xff]
        %v1677 = vld [vmem:[%s1671 + $0x7d] sm:$0xff]
        %v1678 = vld [vmem:[%s1671 + $0x95] sm:$0xff]
        %v1679 = vld [vmem:[%s1671 + $0xad] sm:$0xff]
        %1688 = vrot.lane.b32.xlu0 %v1672, 28
        %v1689 = vpop.permute.xlu0 %1688
        %1690 = vrot.lane.b32.xlu0 %v1673, 28
        %v1691 = vpop.permute.xlu0 %1690
        %1692 = vrot.lane.b32.xlu0 %v1674, 28
        %v1693 = vpop.permute.xlu0 %1692
        %1694 = vrot.lane.b32.xlu0 %v1675, 28
        %v1695 = vpop.permute.xlu0 %1694
        %1696 = vrot.lane.b32.xlu0 %v1676, 28
        %v1697 = vpop.permute.xlu0 %1696
        %1698 = vrot.lane.b32.xlu0 %v1677, 28
        %v1699 = vpop.permute.xlu0 %1698
        %1700 = vrot.lane.b32.xlu0 %v1678, 28
        %v1701 = vpop.permute.xlu0 %1700
        %1702 = vrot.lane.b32.xlu0 %v1679, 28
        %v1703 = vpop.permute.xlu0 %1702
        %vm1712 = vcmask 244960
        %1713 = vst.msk [vmem:[#allocation3] sm:$0xff] %vm1712, %v1689
        %1714 = vst.msk [vmem:[#allocation3 + $0x8] sm:$0xff] %vm1712, %v1691
        %1715 = vst.msk [vmem:[#allocation3 + $0x10] sm:$0xff] %vm1712, %v1693
        %1716 = vst.msk [vmem:[#allocation3 + $0x18] sm:$0xff] %vm1712, %v1695
        %1717 = vst.msk [vmem:[#allocation3 + $0x20] sm:$0xff] %vm1712, %v1697
        %1718 = vst.msk [vmem:[#allocation3 + $0x28] sm:$0xff] %vm1712, %v1699
        %1719 = vst.msk [vmem:[#allocation3 + $0x30] sm:$0xff] %vm1712, %v1701
        %1720 = vst.msk [vmem:[#allocation3 + $0x38] sm:$0xff] %vm1712, %v1703
        %v1721 = vld [vmem:[%s1671 + $0x6] sm:$0xff]
        %v1722 = vld [vmem:[%s1671 + $0x1e] sm:$0xff]
        %v1723 = vld [vmem:[%s1671 + $0x36] sm:$0xff]
        %v1724 = vld [vmem:[%s1671 + $0x4e] sm:$0xff]
        %v1725 = vld [vmem:[%s1671 + $0x66] sm:$0xff]
        %v1726 = vld [vmem:[%s1671 + $0x7e] sm:$0xff]
        %v1727 = vld [vmem:[%s1671 + $0x96] sm:$0xff]
        %v1728 = vld [vmem:[%s1671 + $0xae] sm:$0xff]
        %1737 = vrot.lane.b32.xlu0 %v1721, 30
        %v1738 = vpop.permute.xlu0 %1737
        %1739 = vrot.lane.b32.xlu0 %v1722, 30
        %v1740 = vpop.permute.xlu0 %1739
        %1741 = vrot.lane.b32.xlu0 %v1723, 30
        %v1742 = vpop.permute.xlu0 %1741
        %1743 = vrot.lane.b32.xlu0 %v1724, 30
        %v1744 = vpop.permute.xlu0 %1743
        %1745 = vrot.lane.b32.xlu0 %v1725, 30
        %v1746 = vpop.permute.xlu0 %1745
        %1747 = vrot.lane.b32.xlu0 %v1726, 30
        %v1748 = vpop.permute.xlu0 %1747
        %1749 = vrot.lane.b32.xlu0 %v1727, 30
        %v1750 = vpop.permute.xlu0 %1749
        %1751 = vrot.lane.b32.xlu0 %v1728, 30
        %v1752 = vpop.permute.xlu0 %1751
        %vm1761 = vcmask 261360
        %1762 = vst.msk [vmem:[#allocation3] sm:$0xff] %vm1761, %v1738
        %1763 = vst.msk [vmem:[#allocation3 + $0x8] sm:$0xff] %vm1761, %v1740
        %1764 = vst.msk [vmem:[#allocation3 + $0x10] sm:$0xff] %vm1761, %v1742
        %1765 = vst.msk [vmem:[#allocation3 + $0x18] sm:$0xff] %vm1761, %v1744
        %1766 = vst.msk [vmem:[#allocation3 + $0x20] sm:$0xff] %vm1761, %v1746
        %1767 = vst.msk [vmem:[#allocation3 + $0x28] sm:$0xff] %vm1761, %v1748
        %1768 = vst.msk [vmem:[#allocation3 + $0x30] sm:$0xff] %vm1761, %v1750
        %1769 = vst.msk [vmem:[#allocation3 + $0x38] sm:$0xff] %vm1761, %v1752
        %v1770 = vld [vmem:[%s1671 + $0x7] sm:$0xff]
        %v1771 = vld [vmem:[%s1671 + $0x1f] sm:$0xff]
        %v1772 = vld [vmem:[%s1671 + $0x37] sm:$0xff]
        %v1773 = vld [vmem:[%s1671 + $0x4f] sm:$0xff]
        %v1774 = vld [vmem:[%s1671 + $0x67] sm:$0xff]
        %v1775 = vld [vmem:[%s1671 + $0x7f] sm:$0xff]
        %v1776 = vld [vmem:[%s1671 + $0x97] sm:$0xff]
        %v1777 = vld [vmem:[%s1671 + $0xaf] sm:$0xff]
        %1786 = vrot.lane.b32.xlu0 %v1770, 32
        %v1787 = vpop.permute.xlu0 %1786
        %1788 = vrot.lane.b32.xlu0 %v1771, 32
        %v1789 = vpop.permute.xlu0 %1788
        %1790 = vrot.lane.b32.xlu0 %v1772, 32
        %v1791 = vpop.permute.xlu0 %1790
        %1792 = vrot.lane.b32.xlu0 %v1773, 32
        %v1793 = vpop.permute.xlu0 %1792
        %1794 = vrot.lane.b32.xlu0 %v1774, 32
        %v1795 = vpop.permute.xlu0 %1794
        %1796 = vrot.lane.b32.xlu0 %v1775, 32
        %v1797 = vpop.permute.xlu0 %1796
        %1798 = vrot.lane.b32.xlu0 %v1776, 32
        %v1799 = vpop.permute.xlu0 %1798
        %1800 = vrot.lane.b32.xlu0 %v1777, 32
        %v1801 = vpop.permute.xlu0 %1800
        %vm1810 = vcmask 277760
        %1811 = vst.msk [vmem:[#allocation3] sm:$0xff] %vm1810, %v1787
        %1812 = vst.msk [vmem:[#allocation3 + $0x8] sm:$0xff] %vm1810, %v1789
        %1813 = vst.msk [vmem:[#allocation3 + $0x10] sm:$0xff] %vm1810, %v1791
        %1814 = vst.msk [vmem:[#allocation3 + $0x18] sm:$0xff] %vm1810, %v1793
        %1815 = vst.msk [vmem:[#allocation3 + $0x20] sm:$0xff] %vm1810, %v1795
        %1816 = vst.msk [vmem:[#allocation3 + $0x28] sm:$0xff] %vm1810, %v1797
        %1817 = vst.msk [vmem:[#allocation3 + $0x30] sm:$0xff] %vm1810, %v1799
        %1818 = vst.msk [vmem:[#allocation3 + $0x38] sm:$0xff] %vm1810, %v1801
        %v1819 = vld [vmem:[%s1671 + $0x8] sm:$0xff]
        %v1820 = vld [vmem:[%s1671 + $0x20] sm:$0xff]
        %v1821 = vld [vmem:[%s1671 + $0x38] sm:$0xff]
        %v1822 = vld [vmem:[%s1671 + $0x50] sm:$0xff]
        %v1823 = vld [vmem:[%s1671 + $0x68] sm:$0xff]
        %v1824 = vld [vmem:[%s1671 + $0x80] sm:$0xff]
        %v1825 = vld [vmem:[%s1671 + $0x98] sm:$0xff]
        %v1826 = vld [vmem:[%s1671 + $0xb0] sm:$0xff]
        %1835 = vrot.lane.b32.xlu0 %v1819, 34
        %v1836 = vpop.permute.xlu0 %1835
        %1837 = vrot.lane.b32.xlu0 %v1820, 34
        %v1838 = vpop.permute.xlu0 %1837
        %1839 = vrot.lane.b32.xlu0 %v1821, 34
        %v1840 = vpop.permute.xlu0 %1839
        %1841 = vrot.lane.b32.xlu0 %v1822, 34
        %v1842 = vpop.permute.xlu0 %1841
        %1843 = vrot.lane.b32.xlu0 %v1823, 34
        %v1844 = vpop.permute.xlu0 %1843
        %1845 = vrot.lane.b32.xlu0 %v1824, 34
        %v1846 = vpop.permute.xlu0 %1845
        %1847 = vrot.lane.b32.xlu0 %v1825, 34
        %v1848 = vpop.permute.xlu0 %1847
        %1849 = vrot.lane.b32.xlu0 %v1826, 34
        %v1850 = vpop.permute.xlu0 %1849
        %vm1859 = vcmask 294160
        %1860 = vst.msk [vmem:[#allocation3] sm:$0xff] %vm1859, %v1836
        %1861 = vst.msk [vmem:[#allocation3 + $0x8] sm:$0xff] %vm1859, %v1838
        %1862 = vst.msk [vmem:[#allocation3 + $0x10] sm:$0xff] %vm1859, %v1840
        %1863 = vst.msk [vmem:[#allocation3 + $0x18] sm:$0xff] %vm1859, %v1842
        %1864 = vst.msk [vmem:[#allocation3 + $0x20] sm:$0xff] %vm1859, %v1844
        %1865 = vst.msk [vmem:[#allocation3 + $0x28] sm:$0xff] %vm1859, %v1846
        %1866 = vst.msk [vmem:[#allocation3 + $0x30] sm:$0xff] %vm1859, %v1848
        %1867 = vst.msk [vmem:[#allocation3 + $0x38] sm:$0xff] %vm1859, %v1850
        %v1868 = vld [vmem:[%s1671 + $0x9] sm:$0xff]
        %v1869 = vld [vmem:[%s1671 + $0x21] sm:$0xff]
        %v1870 = vld [vmem:[%s1671 + $0x39] sm:$0xff]
        %v1871 = vld [vmem:[%s1671 + $0x51] sm:$0xff]
        %v1872 = vld [vmem:[%s1671 + $0x69] sm:$0xff]
        %v1873 = vld [vmem:[%s1671 + $0x81] sm:$0xff]
        %v1874 = vld [vmem:[%s1671 + $0x99] sm:$0xff]
        %v1875 = vld [vmem:[%s1671 + $0xb1] sm:$0xff]
        %1884 = vrot.lane.b32.xlu0 %v1868, 36
        %v1885 = vpop.permute.xlu0 %1884
        %1886 = vrot.lane.b32.xlu0 %v1869, 36
        %v1887 = vpop.permute.xlu0 %1886
        %1888 = vrot.lane.b32.xlu0 %v1870, 36
        %v1889 = vpop.permute.xlu0 %1888
        %1890 = vrot.lane.b32.xlu0 %v1871, 36
        %v1891 = vpop.permute.xlu0 %1890
        %1892 = vrot.lane.b32.xlu0 %v1872, 36
        %v1893 = vpop.permute.xlu0 %1892
        %1894 = vrot.lane.b32.xlu0 %v1873, 36
        %v1895 = vpop.permute.xlu0 %1894
        %1896 = vrot.lane.b32.xlu0 %v1874, 36
        %v1897 = vpop.permute.xlu0 %1896
        %1898 = vrot.lane.b32.xlu0 %v1875, 36
        %v1899 = vpop.permute.xlu0 %1898
        %vm1908 = vcmask 310560
        %1909 = vst.msk [vmem:[#allocation3] sm:$0xff] %vm1908, %v1885
        %1910 = vst.msk [vmem:[#allocation3 + $0x8] sm:$0xff] %vm1908, %v1887
        %1911 = vst.msk [vmem:[#allocation3 + $0x10] sm:$0xff] %vm1908, %v1889
        %1912 = vst.msk [vmem:[#allocation3 + $0x18] sm:$0xff] %vm1908, %v1891
        %1913 = vst.msk [vmem:[#allocation3 + $0x20] sm:$0xff] %vm1908, %v1893
        %1914 = vst.msk [vmem:[#allocation3 + $0x28] sm:$0xff] %vm1908, %v1895
        %1915 = vst.msk [vmem:[#allocation3 + $0x30] sm:$0xff] %vm1908, %v1897
        %1916 = vst.msk [vmem:[#allocation3 + $0x38] sm:$0xff] %vm1908, %v1899
        %v1917 = vld [vmem:[%s1671 + $0xa] sm:$0xff]
        %v1918 = vld [vmem:[%s1671 + $0x22] sm:$0xff]
        %v1919 = vld [vmem:[%s1671 + $0x3a] sm:$0xff]
        %v1920 = vld [vmem:[%s1671 + $0x52] sm:$0xff]
        %v1921 = vld [vmem:[%s1671 + $0x6a] sm:$0xff]
        %v1922 = vld [vmem:[%s1671 + $0x82] sm:$0xff]
        %v1923 = vld [vmem:[%s1671 + $0x9a] sm:$0xff]
        %v1924 = vld [vmem:[%s1671 + $0xb2] sm:$0xff]
        %1933 = vrot.lane.b32.xlu0 %v1917, 38
        %v1934 = vpop.permute.xlu0 %1933
        %1935 = vrot.lane.b32.xlu0 %v1918, 38
        %v1936 = vpop.permute.xlu0 %1935
        %1937 = vrot.lane.b32.xlu0 %v1919, 38
        %v1938 = vpop.permute.xlu0 %1937
        %1939 = vrot.lane.b32.xlu0 %v1920, 38
        %v1940 = vpop.permute.xlu0 %1939
        %1941 = vrot.lane.b32.xlu0 %v1921, 38
        %v1942 = vpop.permute.xlu0 %1941
        %1943 = vrot.lane.b32.xlu0 %v1922, 38
        %v1944 = vpop.permute.xlu0 %1943
        %1945 = vrot.lane.b32.xlu0 %v1923, 38
        %v1946 = vpop.permute.xlu0 %1945
        %1947 = vrot.lane.b32.xlu0 %v1924, 38
        %v1948 = vpop.permute.xlu0 %1947
        %vm1957 = vcmask 326960
        %1958 = vst.msk [vmem:[#allocation3] sm:$0xff] %vm1957, %v1934
        %1959 = vst.msk [vmem:[#allocation3 + $0x8] sm:$0xff] %vm1957, %v1936
        %1960 = vst.msk [vmem:[#allocation3 + $0x10] sm:$0xff] %vm1957, %v1938
        %1961 = vst.msk [vmem:[#allocation3 + $0x18] sm:$0xff] %vm1957, %v1940
        %1962 = vst.msk [vmem:[#allocation3 + $0x20] sm:$0xff] %vm1957, %v1942
        %1963 = vst.msk [vmem:[#allocation3 + $0x28] sm:$0xff] %vm1957, %v1944
        %1964 = vst.msk [vmem:[#allocation3 + $0x30] sm:$0xff] %vm1957, %v1946
        %1965 = vst.msk [vmem:[#allocation3 + $0x38] sm:$0xff] %vm1957, %v1948
        %v1966 = vld [vmem:[%s1671 + $0xb] sm:$0xff]
        %v1967 = vld [vmem:[%s1671 + $0x23] sm:$0xff]
        %v1968 = vld [vmem:[%s1671 + $0x3b] sm:$0xff]
        %v1969 = vld [vmem:[%s1671 + $0x53] sm:$0xff]
        %v1970 = vld [vmem:[%s1671 + $0x6b] sm:$0xff]
        %v1971 = vld [vmem:[%s1671 + $0x83] sm:$0xff]
        %v1972 = vld [vmem:[%s1671 + $0x9b] sm:$0xff]
        %v1973 = vld [vmem:[%s1671 + $0xb3] sm:$0xff]
        %1982 = vrot.lane.b32.xlu0 %v1966, 40
        %v1983 = vpop.permute.xlu0 %1982
        %1984 = vrot.lane.b32.xlu0 %v1967, 40
        %v1985 = vpop.permute.xlu0 %1984
        %1986 = vrot.lane.b32.xlu0 %v1968, 40
        %v1987 = vpop.permute.xlu0 %1986
        %1988 = vrot.lane.b32.xlu0 %v1969, 40
        %v1989 = vpop.permute.xlu0 %1988
        %1990 = vrot.lane.b32.xlu0 %v1970, 40
        %v1991 = vpop.permute.xlu0 %1990
        %1992 = vrot.lane.b32.xlu0 %v1971, 40
        %v1993 = vpop.permute.xlu0 %1992
        %1994 = vrot.lane.b32.xlu0 %v1972, 40
        %v1995 = vpop.permute.xlu0 %1994
        %1996 = vrot.lane.b32.xlu0 %v1973, 40
        %v1997 = vpop.permute.xlu0 %1996
        %vm2006 = vcmask 343360
        %2007 = vst.msk [vmem:[#allocation3] sm:$0xff] %vm2006, %v1983
        %2008 = vst.msk [vmem:[#allocation3 + $0x8] sm:$0xff] %vm2006, %v1985
        %2009 = vst.msk [vmem:[#allocation3 + $0x10] sm:$0xff] %vm2006, %v1987
        %2010 = vst.msk [vmem:[#allocation3 + $0x18] sm:$0xff] %vm2006, %v1989
        %2011 = vst.msk [vmem:[#allocation3 + $0x20] sm:$0xff] %vm2006, %v1991
        %2012 = vst.msk [vmem:[#allocation3 + $0x28] sm:$0xff] %vm2006, %v1993
        %2013 = vst.msk [vmem:[#allocation3 + $0x30] sm:$0xff] %vm2006, %v1995
        %2014 = vst.msk [vmem:[#allocation3 + $0x38] sm:$0xff] %vm2006, %v1997
        %v2015 = vld [vmem:[%s998 + $0x5] sm:$0xff]
        %v2016 = vld [vmem:[%s998 + $0x1d] sm:$0xff]
        %v2017 = vld [vmem:[%s998 + $0x35] sm:$0xff]
        %v2018 = vld [vmem:[%s998 + $0x4d] sm:$0xff]
        %v2019 = vld [vmem:[%s998 + $0x65] sm:$0xff]
        %v2020 = vld [vmem:[%s998 + $0x7d] sm:$0xff]
        %v2021 = vld [vmem:[%s998 + $0x95] sm:$0xff]
        %v2022 = vld [vmem:[%s998 + $0xad] sm:$0xff]
        %2031 = vrot.lane.b32.xlu0 %v2015, 42
        %v2032 = vpop.permute.xlu0 %2031
        %2033 = vrot.lane.b32.xlu0 %v2016, 42
        %v2034 = vpop.permute.xlu0 %2033
        %2035 = vrot.lane.b32.xlu0 %v2017, 42
        %v2036 = vpop.permute.xlu0 %2035
        %2037 = vrot.lane.b32.xlu0 %v2018, 42
        %v2038 = vpop.permute.xlu0 %2037
        %2039 = vrot.lane.b32.xlu0 %v2019, 42
        %v2040 = vpop.permute.xlu0 %2039
        %2041 = vrot.lane.b32.xlu0 %v2020, 42
        %v2042 = vpop.permute.xlu0 %2041
        %2043 = vrot.lane.b32.xlu0 %v2021, 42
        %v2044 = vpop.permute.xlu0 %2043
        %2045 = vrot.lane.b32.xlu0 %v2022, 42
        %v2046 = vpop.permute.xlu0 %2045
        %vm2055 = vcmask 359760
        %2056 = vst.msk [vmem:[#allocation3] sm:$0xff] %vm2055, %v2032
        %2057 = vst.msk [vmem:[#allocation3 + $0x8] sm:$0xff] %vm2055, %v2034
        %2058 = vst.msk [vmem:[#allocation3 + $0x10] sm:$0xff] %vm2055, %v2036
        %2059 = vst.msk [vmem:[#allocation3 + $0x18] sm:$0xff] %vm2055, %v2038
        %2060 = vst.msk [vmem:[#allocation3 + $0x20] sm:$0xff] %vm2055, %v2040
        %2061 = vst.msk [vmem:[#allocation3 + $0x28] sm:$0xff] %vm2055, %v2042
        %2062 = vst.msk [vmem:[#allocation3 + $0x30] sm:$0xff] %vm2055, %v2044
        %2063 = vst.msk [vmem:[#allocation3 + $0x38] sm:$0xff] %vm2055, %v2046
        %v2064 = vld [vmem:[%s998 + $0x6] sm:$0xff]
        %v2065 = vld [vmem:[%s998 + $0x1e] sm:$0xff]
        %v2066 = vld [vmem:[%s998 + $0x36] sm:$0xff]
        %v2067 = vld [vmem:[%s998 + $0x4e] sm:$0xff]
        %v2068 = vld [vmem:[%s998 + $0x66] sm:$0xff]
        %v2069 = vld [vmem:[%s998 + $0x7e] sm:$0xff]
        %v2070 = vld [vmem:[%s998 + $0x96] sm:$0xff]
        %v2071 = vld [vmem:[%s998 + $0xae] sm:$0xff]
        %2080 = vrot.lane.b32.xlu0 %v2064, 44
        %v2081 = vpop.permute.xlu0 %2080
        %2082 = vrot.lane.b32.xlu0 %v2065, 44
        %v2083 = vpop.permute.xlu0 %2082
        %2084 = vrot.lane.b32.xlu0 %v2066, 44
        %v2085 = vpop.permute.xlu0 %2084
        %2086 = vrot.lane.b32.xlu0 %v2067, 44
        %v2087 = vpop.permute.xlu0 %2086
        %2088 = vrot.lane.b32.xlu0 %v2068, 44
        %v2089 = vpop.permute.xlu0 %2088
        %2090 = vrot.lane.b32.xlu0 %v2069, 44
        %v2091 = vpop.permute.xlu0 %2090
        %2092 = vrot.lane.b32.xlu0 %v2070, 44
        %v2093 = vpop.permute.xlu0 %2092
        %2094 = vrot.lane.b32.xlu0 %v2071, 44
        %v2095 = vpop.permute.xlu0 %2094
        %vm2104 = vcmask 376160
        %2105 = vst.msk [vmem:[#allocation3] sm:$0xff] %vm2104, %v2081
        %2106 = vst.msk [vmem:[#allocation3 + $0x8] sm:$0xff] %vm2104, %v2083
        %2107 = vst.msk [vmem:[#allocation3 + $0x10] sm:$0xff] %vm2104, %v2085
        %2108 = vst.msk [vmem:[#allocation3 + $0x18] sm:$0xff] %vm2104, %v2087
        %2109 = vst.msk [vmem:[#allocation3 + $0x20] sm:$0xff] %vm2104, %v2089
        %2110 = vst.msk [vmem:[#allocation3 + $0x28] sm:$0xff] %vm2104, %v2091
        %2111 = vst.msk [vmem:[#allocation3 + $0x30] sm:$0xff] %vm2104, %v2093
        %2112 = vst.msk [vmem:[#allocation3 + $0x38] sm:$0xff] %vm2104, %v2095
        %v2113 = vld [vmem:[%s998 + $0x7] sm:$0xff]
        %v2114 = vld [vmem:[%s998 + $0x1f] sm:$0xff]
        %v2115 = vld [vmem:[%s998 + $0x37] sm:$0xff]
        %v2116 = vld [vmem:[%s998 + $0x4f] sm:$0xff]
        %v2117 = vld [vmem:[%s998 + $0x67] sm:$0xff]
        %v2118 = vld [vmem:[%s998 + $0x7f] sm:$0xff]
        %v2119 = vld [vmem:[%s998 + $0x97] sm:$0xff]
        %v2120 = vld [vmem:[%s998 + $0xaf] sm:$0xff]
        %2129 = vrot.lane.b32.xlu0 %v2113, 46
        %v2130 = vpop.permute.xlu0 %2129
        %2131 = vrot.lane.b32.xlu0 %v2114, 46
        %v2132 = vpop.permute.xlu0 %2131
        %2133 = vrot.lane.b32.xlu0 %v2115, 46
        %v2134 = vpop.permute.xlu0 %2133
        %2135 = vrot.lane.b32.xlu0 %v2116, 46
        %v2136 = vpop.permute.xlu0 %2135
        %2137 = vrot.lane.b32.xlu0 %v2117, 46
        %v2138 = vpop.permute.xlu0 %2137
        %2139 = vrot.lane.b32.xlu0 %v2118, 46
        %v2140 = vpop.permute.xlu0 %2139
        %2141 = vrot.lane.b32.xlu0 %v2119, 46
        %v2142 = vpop.permute.xlu0 %2141
        %2143 = vrot.lane.b32.xlu0 %v2120, 46
        %v2144 = vpop.permute.xlu0 %2143
        %vm2153 = vcmask 392560
        %2154 = vst.msk [vmem:[#allocation3] sm:$0xff] %vm2153, %v2130
        %2155 = vst.msk [vmem:[#allocation3 + $0x8] sm:$0xff] %vm2153, %v2132
        %2156 = vst.msk [vmem:[#allocation3 + $0x10] sm:$0xff] %vm2153, %v2134
        %2157 = vst.msk [vmem:[#allocation3 + $0x18] sm:$0xff] %vm2153, %v2136
        %2158 = vst.msk [vmem:[#allocation3 + $0x20] sm:$0xff] %vm2153, %v2138
        %2159 = vst.msk [vmem:[#allocation3 + $0x28] sm:$0xff] %vm2153, %v2140
        %2160 = vst.msk [vmem:[#allocation3 + $0x30] sm:$0xff] %vm2153, %v2142
        %2161 = vst.msk [vmem:[#allocation3 + $0x38] sm:$0xff] %vm2153, %v2144
        %v2162 = vld [vmem:[%s998 + $0x8] sm:$0xff]
        %v2163 = vld [vmem:[%s998 + $0x20] sm:$0xff]
        %v2164 = vld [vmem:[%s998 + $0x38] sm:$0xff]
        %v2165 = vld [vmem:[%s998 + $0x50] sm:$0xff]
        %v2166 = vld [vmem:[%s998 + $0x68] sm:$0xff]
        %v2167 = vld [vmem:[%s998 + $0x80] sm:$0xff]
        %v2168 = vld [vmem:[%s998 + $0x98] sm:$0xff]
        %v2169 = vld [vmem:[%s998 + $0xb0] sm:$0xff]
        %2178 = vrot.lane.b32.xlu0 %v2162, 48
        %v2179 = vpop.permute.xlu0 %2178
        %2180 = vrot.lane.b32.xlu0 %v2163, 48
        %v2181 = vpop.permute.xlu0 %2180
        %2182 = vrot.lane.b32.xlu0 %v2164, 48
        %v2183 = vpop.permute.xlu0 %2182
        %2184 = vrot.lane.b32.xlu0 %v2165, 48
        %v2185 = vpop.permute.xlu0 %2184
        %2186 = vrot.lane.b32.xlu0 %v2166, 48
        %v2187 = vpop.permute.xlu0 %2186
        %2188 = vrot.lane.b32.xlu0 %v2167, 48
        %v2189 = vpop.permute.xlu0 %2188
        %2190 = vrot.lane.b32.xlu0 %v2168, 48
        %v2191 = vpop.permute.xlu0 %2190
        %2192 = vrot.lane.b32.xlu0 %v2169, 48
        %v2193 = vpop.permute.xlu0 %2192
        %vm2202 = vcmask 408960
        %2203 = vst.msk [vmem:[#allocation3] sm:$0xff] %vm2202, %v2179
        %2204 = vst.msk [vmem:[#allocation3 + $0x8] sm:$0xff] %vm2202, %v2181
        %2205 = vst.msk [vmem:[#allocation3 + $0x10] sm:$0xff] %vm2202, %v2183
        %2206 = vst.msk [vmem:[#allocation3 + $0x18] sm:$0xff] %vm2202, %v2185
        %2207 = vst.msk [vmem:[#allocation3 + $0x20] sm:$0xff] %vm2202, %v2187
        %2208 = vst.msk [vmem:[#allocation3 + $0x28] sm:$0xff] %vm2202, %v2189
        %2209 = vst.msk [vmem:[#allocation3 + $0x30] sm:$0xff] %vm2202, %v2191
        %2210 = vst.msk [vmem:[#allocation3 + $0x38] sm:$0xff] %vm2202, %v2193
        %v2211 = vld [vmem:[%s998 + $0x9] sm:$0xff]
        %v2212 = vld [vmem:[%s998 + $0x21] sm:$0xff]
        %v2213 = vld [vmem:[%s998 + $0x39] sm:$0xff]
        %v2214 = vld [vmem:[%s998 + $0x51] sm:$0xff]
        %v2215 = vld [vmem:[%s998 + $0x69] sm:$0xff]
        %v2216 = vld [vmem:[%s998 + $0x81] sm:$0xff]
        %v2217 = vld [vmem:[%s998 + $0x99] sm:$0xff]
        %v2218 = vld [vmem:[%s998 + $0xb1] sm:$0xff]
        %2227 = vrot.lane.b32.xlu0 %v2211, 50
        %v2228 = vpop.permute.xlu0 %2227
        %2229 = vrot.lane.b32.xlu0 %v2212, 50
        %v2230 = vpop.permute.xlu0 %2229
        %2231 = vrot.lane.b32.xlu0 %v2213, 50
        %v2232 = vpop.permute.xlu0 %2231
        %2233 = vrot.lane.b32.xlu0 %v2214, 50
        %v2234 = vpop.permute.xlu0 %2233
        %2235 = vrot.lane.b32.xlu0 %v2215, 50
        %v2236 = vpop.permute.xlu0 %2235
        %2237 = vrot.lane.b32.xlu0 %v2216, 50
        %v2238 = vpop.permute.xlu0 %2237
        %2239 = vrot.lane.b32.xlu0 %v2217, 50
        %v2240 = vpop.permute.xlu0 %2239
        %2241 = vrot.lane.b32.xlu0 %v2218, 50
        %v2242 = vpop.permute.xlu0 %2241
        %vm2251 = vcmask 425360
        %2252 = vst.msk [vmem:[#allocation3] sm:$0xff] %vm2251, %v2228
        %2253 = vst.msk [vmem:[#allocation3 + $0x8] sm:$0xff] %vm2251, %v2230
        %2254 = vst.msk [vmem:[#allocation3 + $0x10] sm:$0xff] %vm2251, %v2232
        %2255 = vst.msk [vmem:[#allocation3 + $0x18] sm:$0xff] %vm2251, %v2234
        %2256 = vst.msk [vmem:[#allocation3 + $0x20] sm:$0xff] %vm2251, %v2236
        %2257 = vst.msk [vmem:[#allocation3 + $0x28] sm:$0xff] %vm2251, %v2238
        %2258 = vst.msk [vmem:[#allocation3 + $0x30] sm:$0xff] %vm2251, %v2240
        %2259 = vst.msk [vmem:[#allocation3 + $0x38] sm:$0xff] %vm2251, %v2242
        %v2260 = vld [vmem:[%s998 + $0xa] sm:$0xff]
        %v2261 = vld [vmem:[%s998 + $0x22] sm:$0xff]
        %v2262 = vld [vmem:[%s998 + $0x3a] sm:$0xff]
        %v2263 = vld [vmem:[%s998 + $0x52] sm:$0xff]
        %v2264 = vld [vmem:[%s998 + $0x6a] sm:$0xff]
        %v2265 = vld [vmem:[%s998 + $0x82] sm:$0xff]
        %v2266 = vld [vmem:[%s998 + $0x9a] sm:$0xff]
        %v2267 = vld [vmem:[%s998 + $0xb2] sm:$0xff]
        %2276 = vrot.lane.b32.xlu0 %v2260, 52
        %v2277 = vpop.permute.xlu0 %2276
        %2278 = vrot.lane.b32.xlu0 %v2261, 52
        %v2279 = vpop.permute.xlu0 %2278
        %2280 = vrot.lane.b32.xlu0 %v2262, 52
        %v2281 = vpop.permute.xlu0 %2280
        %2282 = vrot.lane.b32.xlu0 %v2263, 52
        %v2283 = vpop.permute.xlu0 %2282
        %2284 = vrot.lane.b32.xlu0 %v2264, 52
        %v2285 = vpop.permute.xlu0 %2284
        %2286 = vrot.lane.b32.xlu0 %v2265, 52
        %v2287 = vpop.permute.xlu0 %2286
        %2288 = vrot.lane.b32.xlu0 %v2266, 52
        %v2289 = vpop.permute.xlu0 %2288
        %2290 = vrot.lane.b32.xlu0 %v2267, 52
        %v2291 = vpop.permute.xlu0 %2290
        %vm2300 = vcmask 441760
        %2301 = vst.msk [vmem:[#allocation3] sm:$0xff] %vm2300, %v2277
        %2302 = vst.msk [vmem:[#allocation3 + $0x8] sm:$0xff] %vm2300, %v2279
        %2303 = vst.msk [vmem:[#allocation3 + $0x10] sm:$0xff] %vm2300, %v2281
        %2304 = vst.msk [vmem:[#allocation3 + $0x18] sm:$0xff] %vm2300, %v2283
        %2305 = vst.msk [vmem:[#allocation3 + $0x20] sm:$0xff] %vm2300, %v2285
        %2306 = vst.msk [vmem:[#allocation3 + $0x28] sm:$0xff] %vm2300, %v2287
        %2307 = vst.msk [vmem:[#allocation3 + $0x30] sm:$0xff] %vm2300, %v2289
        %2308 = vst.msk [vmem:[#allocation3 + $0x38] sm:$0xff] %vm2300, %v2291
        %v2309 = vld [vmem:[%s998 + $0xb] sm:$0xff]
        %v2310 = vld [vmem:[%s998 + $0x23] sm:$0xff]
        %v2311 = vld [vmem:[%s998 + $0x3b] sm:$0xff]
        %v2312 = vld [vmem:[%s998 + $0x53] sm:$0xff]
        %v2313 = vld [vmem:[%s998 + $0x6b] sm:$0xff]
        %v2314 = vld [vmem:[%s998 + $0x83] sm:$0xff]
        %v2315 = vld [vmem:[%s998 + $0x9b] sm:$0xff]
        %v2316 = vld [vmem:[%s998 + $0xb3] sm:$0xff]
        %2325 = vrot.lane.b32.xlu0 %v2309, 54
        %v2326 = vpop.permute.xlu0 %2325
        %2327 = vrot.lane.b32.xlu0 %v2310, 54
        %v2328 = vpop.permute.xlu0 %2327
        %2329 = vrot.lane.b32.xlu0 %v2311, 54
        %v2330 = vpop.permute.xlu0 %2329
        %2331 = vrot.lane.b32.xlu0 %v2312, 54
        %v2332 = vpop.permute.xlu0 %2331
        %2333 = vrot.lane.b32.xlu0 %v2313, 54
        %v2334 = vpop.permute.xlu0 %2333
        %2335 = vrot.lane.b32.xlu0 %v2314, 54
        %v2336 = vpop.permute.xlu0 %2335
        %2337 = vrot.lane.b32.xlu0 %v2315, 54
        %v2338 = vpop.permute.xlu0 %2337
        %2339 = vrot.lane.b32.xlu0 %v2316, 54
        %v2340 = vpop.permute.xlu0 %2339
        %vm2349 = vcmask 458160
        %2350 = vst.msk [vmem:[#allocation3] sm:$0xff] %vm2349, %v2326
        %2351 = vst.msk [vmem:[#allocation3 + $0x8] sm:$0xff] %vm2349, %v2328
        %2352 = vst.msk [vmem:[#allocation3 + $0x10] sm:$0xff] %vm2349, %v2330
        %2353 = vst.msk [vmem:[#allocation3 + $0x18] sm:$0xff] %vm2349, %v2332
        %2354 = vst.msk [vmem:[#allocation3 + $0x20] sm:$0xff] %vm2349, %v2334
        %2355 = vst.msk [vmem:[#allocation3 + $0x28] sm:$0xff] %vm2349, %v2336
        %2356 = vst.msk [vmem:[#allocation3 + $0x30] sm:$0xff] %vm2349, %v2338
        %2357 = vst.msk [vmem:[#allocation3 + $0x38] sm:$0xff] %vm2349, %v2340
        %s2358 = scalar_lea.vmem [#allocation2], 96
        %v2359 = vld [vmem:[%s2358 + $0x5] sm:$0xff]
        %v2360 = vld [vmem:[%s2358 + $0x1d] sm:$0xff]
        %v2361 = vld [vmem:[%s2358 + $0x35] sm:$0xff]
        %v2362 = vld [vmem:[%s2358 + $0x4d] sm:$0xff]
        %v2363 = vld [vmem:[%s2358 + $0x65] sm:$0xff]
        %v2364 = vld [vmem:[%s2358 + $0x7d] sm:$0xff]
        %v2365 = vld [vmem:[%s2358 + $0x95] sm:$0xff]
        %v2366 = vld [vmem:[%s2358 + $0xad] sm:$0xff]
        %2375 = vrot.lane.b32.xlu0 %v2359, 56
        %v2376 = vpop.permute.xlu0 %2375
        %2377 = vrot.lane.b32.xlu0 %v2360, 56
        %v2378 = vpop.permute.xlu0 %2377
        %2379 = vrot.lane.b32.xlu0 %v2361, 56
        %v2380 = vpop.permute.xlu0 %2379
        %2381 = vrot.lane.b32.xlu0 %v2362, 56
        %v2382 = vpop.permute.xlu0 %2381
        %2383 = vrot.lane.b32.xlu0 %v2363, 56
        %v2384 = vpop.permute.xlu0 %2383
        %2385 = vrot.lane.b32.xlu0 %v2364, 56
        %v2386 = vpop.permute.xlu0 %2385
        %2387 = vrot.lane.b32.xlu0 %v2365, 56
        %v2388 = vpop.permute.xlu0 %2387
        %2389 = vrot.lane.b32.xlu0 %v2366, 56
        %v2390 = vpop.permute.xlu0 %2389
        %vm2399 = vcmask 474560
        %2400 = vst.msk [vmem:[#allocation3] sm:$0xff] %vm2399, %v2376
        %2401 = vst.msk [vmem:[#allocation3 + $0x8] sm:$0xff] %vm2399, %v2378
        %2402 = vst.msk [vmem:[#allocation3 + $0x10] sm:$0xff] %vm2399, %v2380
        %2403 = vst.msk [vmem:[#allocation3 + $0x18] sm:$0xff] %vm2399, %v2382
        %2404 = vst.msk [vmem:[#allocation3 + $0x20] sm:$0xff] %vm2399, %v2384
        %2405 = vst.msk [vmem:[#allocation3 + $0x28] sm:$0xff] %vm2399, %v2386
        %2406 = vst.msk [vmem:[#allocation3 + $0x30] sm:$0xff] %vm2399, %v2388
        %2407 = vst.msk [vmem:[#allocation3 + $0x38] sm:$0xff] %vm2399, %v2390
        %v2408 = vld [vmem:[%s2358 + $0x6] sm:$0xff]
        %v2409 = vld [vmem:[%s2358 + $0x1e] sm:$0xff]
        %v2410 = vld [vmem:[%s2358 + $0x36] sm:$0xff]
        %v2411 = vld [vmem:[%s2358 + $0x4e] sm:$0xff]
        %v2412 = vld [vmem:[%s2358 + $0x66] sm:$0xff]
        %v2413 = vld [vmem:[%s2358 + $0x7e] sm:$0xff]
        %v2414 = vld [vmem:[%s2358 + $0x96] sm:$0xff]
        %v2415 = vld [vmem:[%s2358 + $0xae] sm:$0xff]
        %2424 = vrot.lane.b32.xlu0 %v2408, 58
        %v2425 = vpop.permute.xlu0 %2424
        %2426 = vrot.lane.b32.xlu0 %v2409, 58
        %v2427 = vpop.permute.xlu0 %2426
        %2428 = vrot.lane.b32.xlu0 %v2410, 58
        %v2429 = vpop.permute.xlu0 %2428
        %2430 = vrot.lane.b32.xlu0 %v2411, 58
        %v2431 = vpop.permute.xlu0 %2430
        %2432 = vrot.lane.b32.xlu0 %v2412, 58
        %v2433 = vpop.permute.xlu0 %2432
        %2434 = vrot.lane.b32.xlu0 %v2413, 58
        %v2435 = vpop.permute.xlu0 %2434
        %2436 = vrot.lane.b32.xlu0 %v2414, 58
        %v2437 = vpop.permute.xlu0 %2436
        %2438 = vrot.lane.b32.xlu0 %v2415, 58
        %v2439 = vpop.permute.xlu0 %2438
        %vm2448 = vcmask 490960
        %2449 = vst.msk [vmem:[#allocation3] sm:$0xff] %vm2448, %v2425
        %2450 = vst.msk [vmem:[#allocation3 + $0x8] sm:$0xff] %vm2448, %v2427
        %2451 = vst.msk [vmem:[#allocation3 + $0x10] sm:$0xff] %vm2448, %v2429
        %2452 = vst.msk [vmem:[#allocation3 + $0x18] sm:$0xff] %vm2448, %v2431
        %2453 = vst.msk [vmem:[#allocation3 + $0x20] sm:$0xff] %vm2448, %v2433
        %2454 = vst.msk [vmem:[#allocation3 + $0x28] sm:$0xff] %vm2448, %v2435
        %2455 = vst.msk [vmem:[#allocation3 + $0x30] sm:$0xff] %vm2448, %v2437
        %2456 = vst.msk [vmem:[#allocation3 + $0x38] sm:$0xff] %vm2448, %v2439
        %v2457 = vld [vmem:[%s2358 + $0x7] sm:$0xff]
        %v2458 = vld [vmem:[%s2358 + $0x1f] sm:$0xff]
        %v2459 = vld [vmem:[%s2358 + $0x37] sm:$0xff]
        %v2460 = vld [vmem:[%s2358 + $0x4f] sm:$0xff]
        %v2461 = vld [vmem:[%s2358 + $0x67] sm:$0xff]
        %v2462 = vld [vmem:[%s2358 + $0x7f] sm:$0xff]
        %v2463 = vld [vmem:[%s2358 + $0x97] sm:$0xff]
        %v2464 = vld [vmem:[%s2358 + $0xaf] sm:$0xff]
        %2473 = vrot.lane.b32.xlu0 %v2457, 60
        %v2474 = vpop.permute.xlu0 %2473
        %2475 = vrot.lane.b32.xlu0 %v2458, 60
        %v2476 = vpop.permute.xlu0 %2475
        %2477 = vrot.lane.b32.xlu0 %v2459, 60
        %v2478 = vpop.permute.xlu0 %2477
        %2479 = vrot.lane.b32.xlu0 %v2460, 60
        %v2480 = vpop.permute.xlu0 %2479
        %2481 = vrot.lane.b32.xlu0 %v2461, 60
        %v2482 = vpop.permute.xlu0 %2481
        %2483 = vrot.lane.b32.xlu0 %v2462, 60
        %v2484 = vpop.permute.xlu0 %2483
        %2485 = vrot.lane.b32.xlu0 %v2463, 60
        %v2486 = vpop.permute.xlu0 %2485
        %2487 = vrot.lane.b32.xlu0 %v2464, 60
        %v2488 = vpop.permute.xlu0 %2487
        %vm2497 = vcmask 507360
        %2498 = vst.msk [vmem:[#allocation3] sm:$0xff] %vm2497, %v2474
        %2499 = vst.msk [vmem:[#allocation3 + $0x8] sm:$0xff] %vm2497, %v2476
        %2500 = vst.msk [vmem:[#allocation3 + $0x10] sm:$0xff] %vm2497, %v2478
        %2501 = vst.msk [vmem:[#allocation3 + $0x18] sm:$0xff] %vm2497, %v2480
        %2502 = vst.msk [vmem:[#allocation3 + $0x20] sm:$0xff] %vm2497, %v2482
        %2503 = vst.msk [vmem:[#allocation3 + $0x28] sm:$0xff] %vm2497, %v2484
        %2504 = vst.msk [vmem:[#allocation3 + $0x30] sm:$0xff] %vm2497, %v2486
        %2505 = vst.msk [vmem:[#allocation3 + $0x38] sm:$0xff] %vm2497, %v2488
        %v2506 = vld [vmem:[%s2358 + $0x8] sm:$0xff]
        %v2507 = vld [vmem:[%s2358 + $0x20] sm:$0xff]
        %v2508 = vld [vmem:[%s2358 + $0x38] sm:$0xff]
        %v2509 = vld [vmem:[%s2358 + $0x50] sm:$0xff]
        %v2510 = vld [vmem:[%s2358 + $0x68] sm:$0xff]
        %v2511 = vld [vmem:[%s2358 + $0x80] sm:$0xff]
        %v2512 = vld [vmem:[%s2358 + $0x98] sm:$0xff]
        %v2513 = vld [vmem:[%s2358 + $0xb0] sm:$0xff]
        %2522 = vrot.lane.b32.xlu0 %v2506, 62
        %v2523 = vpop.permute.xlu0 %2522
        %2524 = vrot.lane.b32.xlu0 %v2507, 62
        %v2525 = vpop.permute.xlu0 %2524
        %2526 = vrot.lane.b32.xlu0 %v2508, 62
        %v2527 = vpop.permute.xlu0 %2526
        %2528 = vrot.lane.b32.xlu0 %v2509, 62
        %v2529 = vpop.permute.xlu0 %2528
        %2530 = vrot.lane.b32.xlu0 %v2510, 62
        %v2531 = vpop.permute.xlu0 %2530
        %2532 = vrot.lane.b32.xlu0 %v2511, 62
        %v2533 = vpop.permute.xlu0 %2532
        %2534 = vrot.lane.b32.xlu0 %v2512, 62
        %v2535 = vpop.permute.xlu0 %2534
        %2536 = vrot.lane.b32.xlu0 %v2513, 62
        %v2537 = vpop.permute.xlu0 %2536
        %vm2546 = vcmask 523760
        %2547 = vst.msk [vmem:[#allocation3] sm:$0xff] %vm2546, %v2523
        %2548 = vst.msk [vmem:[#allocation3 + $0x8] sm:$0xff] %vm2546, %v2525
        %2549 = vst.msk [vmem:[#allocation3 + $0x10] sm:$0xff] %vm2546, %v2527
        %2550 = vst.msk [vmem:[#allocation3 + $0x18] sm:$0xff] %vm2546, %v2529
        %2551 = vst.msk [vmem:[#allocation3 + $0x20] sm:$0xff] %vm2546, %v2531
        %2552 = vst.msk [vmem:[#allocation3 + $0x28] sm:$0xff] %vm2546, %v2533
        %2553 = vst.msk [vmem:[#allocation3 + $0x30] sm:$0xff] %vm2546, %v2535
        %2554 = vst.msk [vmem:[#allocation3 + $0x38] sm:$0xff] %vm2546, %v2537
        %v2555 = vld [vmem:[%s2358 + $0x9] sm:$0xff]
        %v2556 = vld [vmem:[%s2358 + $0x21] sm:$0xff]
        %v2557 = vld [vmem:[%s2358 + $0x39] sm:$0xff]
        %v2558 = vld [vmem:[%s2358 + $0x51] sm:$0xff]
        %v2559 = vld [vmem:[%s2358 + $0x69] sm:$0xff]
        %v2560 = vld [vmem:[%s2358 + $0x81] sm:$0xff]
        %v2561 = vld [vmem:[%s2358 + $0x99] sm:$0xff]
        %v2562 = vld [vmem:[%s2358 + $0xb1] sm:$0xff]
        %2571 = vrot.lane.b32.xlu0 %v2555, 64
        %v2572 = vpop.permute.xlu0 %2571
        %2573 = vrot.lane.b32.xlu0 %v2556, 64
        %v2574 = vpop.permute.xlu0 %2573
        %2575 = vrot.lane.b32.xlu0 %v2557, 64
        %v2576 = vpop.permute.xlu0 %2575
        %2577 = vrot.lane.b32.xlu0 %v2558, 64
        %v2578 = vpop.permute.xlu0 %2577
        %2579 = vrot.lane.b32.xlu0 %v2559, 64
        %v2580 = vpop.permute.xlu0 %2579
        %2581 = vrot.lane.b32.xlu0 %v2560, 64
        %v2582 = vpop.permute.xlu0 %2581
        %2583 = vrot.lane.b32.xlu0 %v2561, 64
        %v2584 = vpop.permute.xlu0 %2583
        %2585 = vrot.lane.b32.xlu0 %v2562, 64
        %v2586 = vpop.permute.xlu0 %2585
        %vm2595 = vcmask 540160
        %2596 = vst.msk [vmem:[#allocation3] sm:$0xff] %vm2595, %v2572
        %2597 = vst.msk [vmem:[#allocation3 + $0x8] sm:$0xff] %vm2595, %v2574
        %2598 = vst.msk [vmem:[#allocation3 + $0x10] sm:$0xff] %vm2595, %v2576
        %2599 = vst.msk [vmem:[#allocation3 + $0x18] sm:$0xff] %vm2595, %v2578
        %2600 = vst.msk [vmem:[#allocation3 + $0x20] sm:$0xff] %vm2595, %v2580
        %2601 = vst.msk [vmem:[#allocation3 + $0x28] sm:$0xff] %vm2595, %v2582
        %2602 = vst.msk [vmem:[#allocation3 + $0x30] sm:$0xff] %vm2595, %v2584
        %2603 = vst.msk [vmem:[#allocation3 + $0x38] sm:$0xff] %vm2595, %v2586
        %v2604 = vld [vmem:[%s2358 + $0xa] sm:$0xff]
        %v2605 = vld [vmem:[%s2358 + $0x22] sm:$0xff]
        %v2606 = vld [vmem:[%s2358 + $0x3a] sm:$0xff]
        %v2607 = vld [vmem:[%s2358 + $0x52] sm:$0xff]
        %v2608 = vld [vmem:[%s2358 + $0x6a] sm:$0xff]
        %v2609 = vld [vmem:[%s2358 + $0x82] sm:$0xff]
        %v2610 = vld [vmem:[%s2358 + $0x9a] sm:$0xff]
        %v2611 = vld [vmem:[%s2358 + $0xb2] sm:$0xff]
        %2620 = vrot.lane.b32.xlu0 %v2604, 66
        %v2621 = vpop.permute.xlu0 %2620
        %2622 = vrot.lane.b32.xlu0 %v2605, 66
        %v2623 = vpop.permute.xlu0 %2622
        %2624 = vrot.lane.b32.xlu0 %v2606, 66
        %v2625 = vpop.permute.xlu0 %2624
        %2626 = vrot.lane.b32.xlu0 %v2607, 66
        %v2627 = vpop.permute.xlu0 %2626
        %2628 = vrot.lane.b32.xlu0 %v2608, 66
        %v2629 = vpop.permute.xlu0 %2628
        %2630 = vrot.lane.b32.xlu0 %v2609, 66
        %v2631 = vpop.permute.xlu0 %2630
        %2632 = vrot.lane.b32.xlu0 %v2610, 66
        %v2633 = vpop.permute.xlu0 %2632
        %2634 = vrot.lane.b32.xlu0 %v2611, 66
        %v2635 = vpop.permute.xlu0 %2634
        %vm2644 = vcmask 556560
        %2645 = vst.msk [vmem:[#allocation3] sm:$0xff] %vm2644, %v2621
        %2646 = vst.msk [vmem:[#allocation3 + $0x8] sm:$0xff] %vm2644, %v2623
        %2647 = vst.msk [vmem:[#allocation3 + $0x10] sm:$0xff] %vm2644, %v2625
        %2648 = vst.msk [vmem:[#allocation3 + $0x18] sm:$0xff] %vm2644, %v2627
        %2649 = vst.msk [vmem:[#allocation3 + $0x20] sm:$0xff] %vm2644, %v2629
        %2650 = vst.msk [vmem:[#allocation3 + $0x28] sm:$0xff] %vm2644, %v2631
        %2651 = vst.msk [vmem:[#allocation3 + $0x30] sm:$0xff] %vm2644, %v2633
        %2652 = vst.msk [vmem:[#allocation3 + $0x38] sm:$0xff] %vm2644, %v2635
        %v2653 = vld [vmem:[%s2358 + $0xb] sm:$0xff]
        %v2654 = vld [vmem:[%s2358 + $0x23] sm:$0xff]
        %v2655 = vld [vmem:[%s2358 + $0x3b] sm:$0xff]
        %v2656 = vld [vmem:[%s2358 + $0x53] sm:$0xff]
        %v2657 = vld [vmem:[%s2358 + $0x6b] sm:$0xff]
        %v2658 = vld [vmem:[%s2358 + $0x83] sm:$0xff]
        %v2659 = vld [vmem:[%s2358 + $0x9b] sm:$0xff]
        %v2660 = vld [vmem:[%s2358 + $0xb3] sm:$0xff]
        %2669 = vrot.lane.b32.xlu0 %v2653, 68
        %v2670 = vpop.permute.xlu0 %2669
        %2671 = vrot.lane.b32.xlu0 %v2654, 68
        %v2672 = vpop.permute.xlu0 %2671
        %2673 = vrot.lane.b32.xlu0 %v2655, 68
        %v2674 = vpop.permute.xlu0 %2673
        %2675 = vrot.lane.b32.xlu0 %v2656, 68
        %v2676 = vpop.permute.xlu0 %2675
        %2677 = vrot.lane.b32.xlu0 %v2657, 68
        %v2678 = vpop.permute.xlu0 %2677
        %2679 = vrot.lane.b32.xlu0 %v2658, 68
        %v2680 = vpop.permute.xlu0 %2679
        %2681 = vrot.lane.b32.xlu0 %v2659, 68
        %v2682 = vpop.permute.xlu0 %2681
        %2683 = vrot.lane.b32.xlu0 %v2660, 68
        %v2684 = vpop.permute.xlu0 %2683
        %vm2693 = vcmask 572960
        %2694 = vst.msk [vmem:[#allocation3] sm:$0xff] %vm2693, %v2670
        %2695 = vst.msk [vmem:[#allocation3 + $0x8] sm:$0xff] %vm2693, %v2672
        %2696 = vst.msk [vmem:[#allocation3 + $0x10] sm:$0xff] %vm2693, %v2674
        %2697 = vst.msk [vmem:[#allocation3 + $0x18] sm:$0xff] %vm2693, %v2676
        %2698 = vst.msk [vmem:[#allocation3 + $0x20] sm:$0xff] %vm2693, %v2678
        %2699 = vst.msk [vmem:[#allocation3 + $0x28] sm:$0xff] %vm2693, %v2680
        %2700 = vst.msk [vmem:[#allocation3 + $0x30] sm:$0xff] %vm2693, %v2682
        %2701 = vst.msk [vmem:[#allocation3 + $0x38] sm:$0xff] %vm2693, %v2684
        %s2702 = scalar_lea.vmem [#allocation2], 120
        %v2703 = vld [vmem:[%s2702 + $0x5] sm:$0xff]
        %v2704 = vld [vmem:[%s2702 + $0x1d] sm:$0xff]
        %v2705 = vld [vmem:[%s2702 + $0x35] sm:$0xff]
        %v2706 = vld [vmem:[%s2702 + $0x4d] sm:$0xff]
        %v2707 = vld [vmem:[%s2702 + $0x65] sm:$0xff]
        %v2708 = vld [vmem:[%s2702 + $0x7d] sm:$0xff]
        %v2709 = vld [vmem:[%s2702 + $0x95] sm:$0xff]
        %v2710 = vld [vmem:[%s2702 + $0xad] sm:$0xff]
        %2719 = vrot.lane.b32.xlu0 %v2703, 70
        %v2720 = vpop.permute.xlu0 %2719
        %2721 = vrot.lane.b32.xlu0 %v2704, 70
        %v2722 = vpop.permute.xlu0 %2721
        %2723 = vrot.lane.b32.xlu0 %v2705, 70
        %v2724 = vpop.permute.xlu0 %2723
        %2725 = vrot.lane.b32.xlu0 %v2706, 70
        %v2726 = vpop.permute.xlu0 %2725
        %2727 = vrot.lane.b32.xlu0 %v2707, 70
        %v2728 = vpop.permute.xlu0 %2727
        %2729 = vrot.lane.b32.xlu0 %v2708, 70
        %v2730 = vpop.permute.xlu0 %2729
        %2731 = vrot.lane.b32.xlu0 %v2709, 70
        %v2732 = vpop.permute.xlu0 %2731
        %2733 = vrot.lane.b32.xlu0 %v2710, 70
        %v2734 = vpop.permute.xlu0 %2733
        %vm2743 = vcmask 589360
        %2744 = vst.msk [vmem:[#allocation3] sm:$0xff] %vm2743, %v2720
        %2745 = vst.msk [vmem:[#allocation3 + $0x8] sm:$0xff] %vm2743, %v2722
        %2746 = vst.msk [vmem:[#allocation3 + $0x10] sm:$0xff] %vm2743, %v2724
        %2747 = vst.msk [vmem:[#allocation3 + $0x18] sm:$0xff] %vm2743, %v2726
        %2748 = vst.msk [vmem:[#allocation3 + $0x20] sm:$0xff] %vm2743, %v2728
        %2749 = vst.msk [vmem:[#allocation3 + $0x28] sm:$0xff] %vm2743, %v2730
        %2750 = vst.msk [vmem:[#allocation3 + $0x30] sm:$0xff] %vm2743, %v2732
        %2751 = vst.msk [vmem:[#allocation3 + $0x38] sm:$0xff] %vm2743, %v2734
        %v2752 = vld [vmem:[%s2702 + $0x6] sm:$0xff]
        %v2753 = vld [vmem:[%s2702 + $0x1e] sm:$0xff]
        %v2754 = vld [vmem:[%s2702 + $0x36] sm:$0xff]
        %v2755 = vld [vmem:[%s2702 + $0x4e] sm:$0xff]
        %v2756 = vld [vmem:[%s2702 + $0x66] sm:$0xff]
        %v2757 = vld [vmem:[%s2702 + $0x7e] sm:$0xff]
        %v2758 = vld [vmem:[%s2702 + $0x96] sm:$0xff]
        %v2759 = vld [vmem:[%s2702 + $0xae] sm:$0xff]
        %2768 = vrot.lane.b32.xlu0 %v2752, 72
        %v2769 = vpop.permute.xlu0 %2768
        %2770 = vrot.lane.b32.xlu0 %v2753, 72
        %v2771 = vpop.permute.xlu0 %2770
        %2772 = vrot.lane.b32.xlu0 %v2754, 72
        %v2773 = vpop.permute.xlu0 %2772
        %2774 = vrot.lane.b32.xlu0 %v2755, 72
        %v2775 = vpop.permute.xlu0 %2774
        %2776 = vrot.lane.b32.xlu0 %v2756, 72
        %v2777 = vpop.permute.xlu0 %2776
        %2778 = vrot.lane.b32.xlu0 %v2757, 72
        %v2779 = vpop.permute.xlu0 %2778
        %2780 = vrot.lane.b32.xlu0 %v2758, 72
        %v2781 = vpop.permute.xlu0 %2780
        %2782 = vrot.lane.b32.xlu0 %v2759, 72
        %v2783 = vpop.permute.xlu0 %2782
        %vm2792 = vcmask 605760
        %2793 = vst.msk [vmem:[#allocation3] sm:$0xff] %vm2792, %v2769
        %2794 = vst.msk [vmem:[#allocation3 + $0x8] sm:$0xff] %vm2792, %v2771
        %2795 = vst.msk [vmem:[#allocation3 + $0x10] sm:$0xff] %vm2792, %v2773
        %2796 = vst.msk [vmem:[#allocation3 + $0x18] sm:$0xff] %vm2792, %v2775
        %2797 = vst.msk [vmem:[#allocation3 + $0x20] sm:$0xff] %vm2792, %v2777
        %2798 = vst.msk [vmem:[#allocation3 + $0x28] sm:$0xff] %vm2792, %v2779
        %2799 = vst.msk [vmem:[#allocation3 + $0x30] sm:$0xff] %vm2792, %v2781
        %2800 = vst.msk [vmem:[#allocation3 + $0x38] sm:$0xff] %vm2792, %v2783
        %v2801 = vld [vmem:[%s2702 + $0x7] sm:$0xff]
        %v2802 = vld [vmem:[%s2702 + $0x1f] sm:$0xff]
        %v2803 = vld [vmem:[%s2702 + $0x37] sm:$0xff]
        %v2804 = vld [vmem:[%s2702 + $0x4f] sm:$0xff]
        %v2805 = vld [vmem:[%s2702 + $0x67] sm:$0xff]
        %v2806 = vld [vmem:[%s2702 + $0x7f] sm:$0xff]
        %v2807 = vld [vmem:[%s2702 + $0x97] sm:$0xff]
        %v2808 = vld [vmem:[%s2702 + $0xaf] sm:$0xff]
        %2817 = vrot.lane.b32.xlu0 %v2801, 74
        %v2818 = vpop.permute.xlu0 %2817
        %2819 = vrot.lane.b32.xlu0 %v2802, 74
        %v2820 = vpop.permute.xlu0 %2819
        %2821 = vrot.lane.b32.xlu0 %v2803, 74
        %v2822 = vpop.permute.xlu0 %2821
        %2823 = vrot.lane.b32.xlu0 %v2804, 74
        %v2824 = vpop.permute.xlu0 %2823
        %2825 = vrot.lane.b32.xlu0 %v2805, 74
        %v2826 = vpop.permute.xlu0 %2825
        %2827 = vrot.lane.b32.xlu0 %v2806, 74
        %v2828 = vpop.permute.xlu0 %2827
        %2829 = vrot.lane.b32.xlu0 %v2807, 74
        %v2830 = vpop.permute.xlu0 %2829
        %2831 = vrot.lane.b32.xlu0 %v2808, 74
        %v2832 = vpop.permute.xlu0 %2831
        %vm2841 = vcmask 622160
        %2842 = vst.msk [vmem:[#allocation3] sm:$0xff] %vm2841, %v2818
        %2843 = vst.msk [vmem:[#allocation3 + $0x8] sm:$0xff] %vm2841, %v2820
        %2844 = vst.msk [vmem:[#allocation3 + $0x10] sm:$0xff] %vm2841, %v2822
        %2845 = vst.msk [vmem:[#allocation3 + $0x18] sm:$0xff] %vm2841, %v2824
        %2846 = vst.msk [vmem:[#allocation3 + $0x20] sm:$0xff] %vm2841, %v2826
        %2847 = vst.msk [vmem:[#allocation3 + $0x28] sm:$0xff] %vm2841, %v2828
        %2848 = vst.msk [vmem:[#allocation3 + $0x30] sm:$0xff] %vm2841, %v2830
        %2849 = vst.msk [vmem:[#allocation3 + $0x38] sm:$0xff] %vm2841, %v2832
        %v2850 = vld [vmem:[%s2702 + $0x8] sm:$0xff]
        %v2851 = vld [vmem:[%s2702 + $0x20] sm:$0xff]
        %v2852 = vld [vmem:[%s2702 + $0x38] sm:$0xff]
        %v2853 = vld [vmem:[%s2702 + $0x50] sm:$0xff]
        %v2854 = vld [vmem:[%s2702 + $0x68] sm:$0xff]
        %v2855 = vld [vmem:[%s2702 + $0x80] sm:$0xff]
        %v2856 = vld [vmem:[%s2702 + $0x98] sm:$0xff]
        %v2857 = vld [vmem:[%s2702 + $0xb0] sm:$0xff]
        %2866 = vrot.lane.b32.xlu0 %v2850, 76
        %v2867 = vpop.permute.xlu0 %2866
        %2868 = vrot.lane.b32.xlu0 %v2851, 76
        %v2869 = vpop.permute.xlu0 %2868
        %2870 = vrot.lane.b32.xlu0 %v2852, 76
        %v2871 = vpop.permute.xlu0 %2870
        %2872 = vrot.lane.b32.xlu0 %v2853, 76
        %v2873 = vpop.permute.xlu0 %2872
        %2874 = vrot.lane.b32.xlu0 %v2854, 76
        %v2875 = vpop.permute.xlu0 %2874
        %2876 = vrot.lane.b32.xlu0 %v2855, 76
        %v2877 = vpop.permute.xlu0 %2876
        %2878 = vrot.lane.b32.xlu0 %v2856, 76
        %v2879 = vpop.permute.xlu0 %2878
        %2880 = vrot.lane.b32.xlu0 %v2857, 76
        %v2881 = vpop.permute.xlu0 %2880
        %vm2890 = vcmask 638560
        %2891 = vst.msk [vmem:[#allocation3] sm:$0xff] %vm2890, %v2867
        %2892 = vst.msk [vmem:[#allocation3 + $0x8] sm:$0xff] %vm2890, %v2869
        %2893 = vst.msk [vmem:[#allocation3 + $0x10] sm:$0xff] %vm2890, %v2871
        %2894 = vst.msk [vmem:[#allocation3 + $0x18] sm:$0xff] %vm2890, %v2873
        %2895 = vst.msk [vmem:[#allocation3 + $0x20] sm:$0xff] %vm2890, %v2875
        %2896 = vst.msk [vmem:[#allocation3 + $0x28] sm:$0xff] %vm2890, %v2877
        %2897 = vst.msk [vmem:[#allocation3 + $0x30] sm:$0xff] %vm2890, %v2879
        %2898 = vst.msk [vmem:[#allocation3 + $0x38] sm:$0xff] %vm2890, %v2881
        %v2899 = vld [vmem:[%s2702 + $0x9] sm:$0xff]
        %v2900 = vld [vmem:[%s2702 + $0x21] sm:$0xff]
        %v2901 = vld [vmem:[%s2702 + $0x39] sm:$0xff]
        %v2902 = vld [vmem:[%s2702 + $0x51] sm:$0xff]
        %v2903 = vld [vmem:[%s2702 + $0x69] sm:$0xff]
        %v2904 = vld [vmem:[%s2702 + $0x81] sm:$0xff]
        %v2905 = vld [vmem:[%s2702 + $0x99] sm:$0xff]
        %v2906 = vld [vmem:[%s2702 + $0xb1] sm:$0xff]
        %2915 = vrot.lane.b32.xlu0 %v2899, 78
        %v2916 = vpop.permute.xlu0 %2915
        %2917 = vrot.lane.b32.xlu0 %v2900, 78
        %v2918 = vpop.permute.xlu0 %2917
        %2919 = vrot.lane.b32.xlu0 %v2901, 78
        %v2920 = vpop.permute.xlu0 %2919
        %2921 = vrot.lane.b32.xlu0 %v2902, 78
        %v2922 = vpop.permute.xlu0 %2921
        %2923 = vrot.lane.b32.xlu0 %v2903, 78
        %v2924 = vpop.permute.xlu0 %2923
        %2925 = vrot.lane.b32.xlu0 %v2904, 78
        %v2926 = vpop.permute.xlu0 %2925
        %2927 = vrot.lane.b32.xlu0 %v2905, 78
        %v2928 = vpop.permute.xlu0 %2927
        %2929 = vrot.lane.b32.xlu0 %v2906, 78
        %v2930 = vpop.permute.xlu0 %2929
        %vm2939 = vcmask 654960
        %2940 = vst.msk [vmem:[#allocation3] sm:$0xff] %vm2939, %v2916
        %2941 = vst.msk [vmem:[#allocation3 + $0x8] sm:$0xff] %vm2939, %v2918
        %2942 = vst.msk [vmem:[#allocation3 + $0x10] sm:$0xff] %vm2939, %v2920
        %2943 = vst.msk [vmem:[#allocation3 + $0x18] sm:$0xff] %vm2939, %v2922
        %2944 = vst.msk [vmem:[#allocation3 + $0x20] sm:$0xff] %vm2939, %v2924
        %2945 = vst.msk [vmem:[#allocation3 + $0x28] sm:$0xff] %vm2939, %v2926
        %2946 = vst.msk [vmem:[#allocation3 + $0x30] sm:$0xff] %vm2939, %v2928
        %2947 = vst.msk [vmem:[#allocation3 + $0x38] sm:$0xff] %vm2939, %v2930
        %v2948 = vld [vmem:[%s2702 + $0xa] sm:$0xff]
        %v2949 = vld [vmem:[%s2702 + $0x22] sm:$0xff]
        %v2950 = vld [vmem:[%s2702 + $0x3a] sm:$0xff]
        %v2951 = vld [vmem:[%s2702 + $0x52] sm:$0xff]
        %v2952 = vld [vmem:[%s2702 + $0x6a] sm:$0xff]
        %v2953 = vld [vmem:[%s2702 + $0x82] sm:$0xff]
        %v2954 = vld [vmem:[%s2702 + $0x9a] sm:$0xff]
        %v2955 = vld [vmem:[%s2702 + $0xb2] sm:$0xff]
        %2964 = vrot.lane.b32.xlu0 %v2948, 80
        %v2965 = vpop.permute.xlu0 %2964
        %2966 = vrot.lane.b32.xlu0 %v2949, 80
        %v2967 = vpop.permute.xlu0 %2966
        %2968 = vrot.lane.b32.xlu0 %v2950, 80
        %v2969 = vpop.permute.xlu0 %2968
        %2970 = vrot.lane.b32.xlu0 %v2951, 80
        %v2971 = vpop.permute.xlu0 %2970
        %2972 = vrot.lane.b32.xlu0 %v2952, 80
        %v2973 = vpop.permute.xlu0 %2972
        %2974 = vrot.lane.b32.xlu0 %v2953, 80
        %v2975 = vpop.permute.xlu0 %2974
        %2976 = vrot.lane.b32.xlu0 %v2954, 80
        %v2977 = vpop.permute.xlu0 %2976
        %2978 = vrot.lane.b32.xlu0 %v2955, 80
        %v2979 = vpop.permute.xlu0 %2978
        %vm2988 = vcmask 671360
        %2989 = vst.msk [vmem:[#allocation3] sm:$0xff] %vm2988, %v2965
        %2990 = vst.msk [vmem:[#allocation3 + $0x8] sm:$0xff] %vm2988, %v2967
        %2991 = vst.msk [vmem:[#allocation3 + $0x10] sm:$0xff] %vm2988, %v2969
        %2992 = vst.msk [vmem:[#allocation3 + $0x18] sm:$0xff] %vm2988, %v2971
        %2993 = vst.msk [vmem:[#allocation3 + $0x20] sm:$0xff] %vm2988, %v2973
        %2994 = vst.msk [vmem:[#allocation3 + $0x28] sm:$0xff] %vm2988, %v2975
        %2995 = vst.msk [vmem:[#allocation3 + $0x30] sm:$0xff] %vm2988, %v2977
        %2996 = vst.msk [vmem:[#allocation3 + $0x38] sm:$0xff] %vm2988, %v2979
        %v2997 = vld [vmem:[%s2702 + $0xb] sm:$0xff]
        %v2998 = vld [vmem:[%s2702 + $0x23] sm:$0xff]
        %v2999 = vld [vmem:[%s2702 + $0x3b] sm:$0xff]
        %v3000 = vld [vmem:[%s2702 + $0x53] sm:$0xff]
        %v3001 = vld [vmem:[%s2702 + $0x6b] sm:$0xff]
        %v3002 = vld [vmem:[%s2702 + $0x83] sm:$0xff]
        %v3003 = vld [vmem:[%s2702 + $0x9b] sm:$0xff]
        %v3004 = vld [vmem:[%s2702 + $0xb3] sm:$0xff]
        %3013 = vrot.lane.b32.xlu0 %v2997, 82
        %v3014 = vpop.permute.xlu0 %3013
        %3015 = vrot.lane.b32.xlu0 %v2998, 82
        %v3016 = vpop.permute.xlu0 %3015
        %3017 = vrot.lane.b32.xlu0 %v2999, 82
        %v3018 = vpop.permute.xlu0 %3017
        %3019 = vrot.lane.b32.xlu0 %v3000, 82
        %v3020 = vpop.permute.xlu0 %3019
        %3021 = vrot.lane.b32.xlu0 %v3001, 82
        %v3022 = vpop.permute.xlu0 %3021
        %3023 = vrot.lane.b32.xlu0 %v3002, 82
        %v3024 = vpop.permute.xlu0 %3023
        %3025 = vrot.lane.b32.xlu0 %v3003, 82
        %v3026 = vpop.permute.xlu0 %3025
        %3027 = vrot.lane.b32.xlu0 %v3004, 82
        %v3028 = vpop.permute.xlu0 %3027
        %vm3037 = vcmask 687760
        %3038 = vst.msk [vmem:[#allocation3] sm:$0xff] %vm3037, %v3014
        %3039 = vst.msk [vmem:[#allocation3 + $0x8] sm:$0xff] %vm3037, %v3016
        %3040 = vst.msk [vmem:[#allocation3 + $0x10] sm:$0xff] %vm3037, %v3018
        %3041 = vst.msk [vmem:[#allocation3 + $0x18] sm:$0xff] %vm3037, %v3020
        %3042 = vst.msk [vmem:[#allocation3 + $0x20] sm:$0xff] %vm3037, %v3022
        %3043 = vst.msk [vmem:[#allocation3 + $0x28] sm:$0xff] %vm3037, %v3024
        %3044 = vst.msk [vmem:[#allocation3 + $0x30] sm:$0xff] %vm3037, %v3026
        %3045 = vst.msk [vmem:[#allocation3 + $0x38] sm:$0xff] %vm3037, %v3028
        %s3046 = scalar_lea.vmem [#allocation2], 144
        %v3047 = vld [vmem:[%s3046 + $0x5] sm:$0xff]
        %v3048 = vld [vmem:[%s3046 + $0x1d] sm:$0xff]
        %v3049 = vld [vmem:[%s3046 + $0x35] sm:$0xff]
        %v3050 = vld [vmem:[%s3046 + $0x4d] sm:$0xff]
        %v3051 = vld [vmem:[%s3046 + $0x65] sm:$0xff]
        %v3052 = vld [vmem:[%s3046 + $0x7d] sm:$0xff]
        %v3053 = vld [vmem:[%s3046 + $0x95] sm:$0xff]
        %v3054 = vld [vmem:[%s3046 + $0xad] sm:$0xff]
        %3063 = vrot.lane.b32.xlu0 %v3047, 84
        %v3064 = vpop.permute.xlu0 %3063
        %3065 = vrot.lane.b32.xlu0 %v3048, 84
        %v3066 = vpop.permute.xlu0 %3065
        %3067 = vrot.lane.b32.xlu0 %v3049, 84
        %v3068 = vpop.permute.xlu0 %3067
        %3069 = vrot.lane.b32.xlu0 %v3050, 84
        %v3070 = vpop.permute.xlu0 %3069
        %3071 = vrot.lane.b32.xlu0 %v3051, 84
        %v3072 = vpop.permute.xlu0 %3071
        %3073 = vrot.lane.b32.xlu0 %v3052, 84
        %v3074 = vpop.permute.xlu0 %3073
        %3075 = vrot.lane.b32.xlu0 %v3053, 84
        %v3076 = vpop.permute.xlu0 %3075
        %3077 = vrot.lane.b32.xlu0 %v3054, 84
        %v3078 = vpop.permute.xlu0 %3077
        %vm3087 = vcmask 704160
        %3088 = vst.msk [vmem:[#allocation3] sm:$0xff] %vm3087, %v3064
        %3089 = vst.msk [vmem:[#allocation3 + $0x8] sm:$0xff] %vm3087, %v3066
        %3090 = vst.msk [vmem:[#allocation3 + $0x10] sm:$0xff] %vm3087, %v3068
        %3091 = vst.msk [vmem:[#allocation3 + $0x18] sm:$0xff] %vm3087, %v3070
        %3092 = vst.msk [vmem:[#allocation3 + $0x20] sm:$0xff] %vm3087, %v3072
        %3093 = vst.msk [vmem:[#allocation3 + $0x28] sm:$0xff] %vm3087, %v3074
        %3094 = vst.msk [vmem:[#allocation3 + $0x30] sm:$0xff] %vm3087, %v3076
        %3095 = vst.msk [vmem:[#allocation3 + $0x38] sm:$0xff] %vm3087, %v3078
        %v3096 = vld [vmem:[%s3046 + $0x6] sm:$0xff]
        %v3097 = vld [vmem:[%s3046 + $0x1e] sm:$0xff]
        %v3098 = vld [vmem:[%s3046 + $0x36] sm:$0xff]
        %v3099 = vld [vmem:[%s3046 + $0x4e] sm:$0xff]
        %v3100 = vld [vmem:[%s3046 + $0x66] sm:$0xff]
        %v3101 = vld [vmem:[%s3046 + $0x7e] sm:$0xff]
        %v3102 = vld [vmem:[%s3046 + $0x96] sm:$0xff]
        %v3103 = vld [vmem:[%s3046 + $0xae] sm:$0xff]
        %3112 = vrot.lane.b32.xlu0 %v3096, 86
        %v3113 = vpop.permute.xlu0 %3112
        %3114 = vrot.lane.b32.xlu0 %v3097, 86
        %v3115 = vpop.permute.xlu0 %3114
        %3116 = vrot.lane.b32.xlu0 %v3098, 86
        %v3117 = vpop.permute.xlu0 %3116
        %3118 = vrot.lane.b32.xlu0 %v3099, 86
        %v3119 = vpop.permute.xlu0 %3118
        %3120 = vrot.lane.b32.xlu0 %v3100, 86
        %v3121 = vpop.permute.xlu0 %3120
        %3122 = vrot.lane.b32.xlu0 %v3101, 86
        %v3123 = vpop.permute.xlu0 %3122
        %3124 = vrot.lane.b32.xlu0 %v3102, 86
        %v3125 = vpop.permute.xlu0 %3124
        %3126 = vrot.lane.b32.xlu0 %v3103, 86
        %v3127 = vpop.permute.xlu0 %3126
        %vm3136 = vcmask 720560
        %3137 = vst.msk [vmem:[#allocation3] sm:$0xff] %vm3136, %v3113
        %3138 = vst.msk [vmem:[#allocation3 + $0x8] sm:$0xff] %vm3136, %v3115
        %3139 = vst.msk [vmem:[#allocation3 + $0x10] sm:$0xff] %vm3136, %v3117
        %3140 = vst.msk [vmem:[#allocation3 + $0x18] sm:$0xff] %vm3136, %v3119
        %3141 = vst.msk [vmem:[#allocation3 + $0x20] sm:$0xff] %vm3136, %v3121
        %3142 = vst.msk [vmem:[#allocation3 + $0x28] sm:$0xff] %vm3136, %v3123
        %3143 = vst.msk [vmem:[#allocation3 + $0x30] sm:$0xff] %vm3136, %v3125
        %3144 = vst.msk [vmem:[#allocation3 + $0x38] sm:$0xff] %vm3136, %v3127
        %v3145 = vld [vmem:[%s3046 + $0x7] sm:$0xff]
        %v3146 = vld [vmem:[%s3046 + $0x1f] sm:$0xff]
        %v3147 = vld [vmem:[%s3046 + $0x37] sm:$0xff]
        %v3148 = vld [vmem:[%s3046 + $0x4f] sm:$0xff]
        %v3149 = vld [vmem:[%s3046 + $0x67] sm:$0xff]
        %v3150 = vld [vmem:[%s3046 + $0x7f] sm:$0xff]
        %v3151 = vld [vmem:[%s3046 + $0x97] sm:$0xff]
        %v3152 = vld [vmem:[%s3046 + $0xaf] sm:$0xff]
        %3161 = vrot.lane.b32.xlu0 %v3145, 88
        %v3162 = vpop.permute.xlu0 %3161
        %3163 = vrot.lane.b32.xlu0 %v3146, 88
        %v3164 = vpop.permute.xlu0 %3163
        %3165 = vrot.lane.b32.xlu0 %v3147, 88
        %v3166 = vpop.permute.xlu0 %3165
        %3167 = vrot.lane.b32.xlu0 %v3148, 88
        %v3168 = vpop.permute.xlu0 %3167
        %3169 = vrot.lane.b32.xlu0 %v3149, 88
        %v3170 = vpop.permute.xlu0 %3169
        %3171 = vrot.lane.b32.xlu0 %v3150, 88
        %v3172 = vpop.permute.xlu0 %3171
        %3173 = vrot.lane.b32.xlu0 %v3151, 88
        %v3174 = vpop.permute.xlu0 %3173
        %3175 = vrot.lane.b32.xlu0 %v3152, 88
        %v3176 = vpop.permute.xlu0 %3175
        %vm3185 = vcmask 736960
        %3186 = vst.msk [vmem:[#allocation3] sm:$0xff] %vm3185, %v3162
        %3187 = vst.msk [vmem:[#allocation3 + $0x8] sm:$0xff] %vm3185, %v3164
        %3188 = vst.msk [vmem:[#allocation3 + $0x10] sm:$0xff] %vm3185, %v3166
        %3189 = vst.msk [vmem:[#allocation3 + $0x18] sm:$0xff] %vm3185, %v3168
        %3190 = vst.msk [vmem:[#allocation3 + $0x20] sm:$0xff] %vm3185, %v3170
        %3191 = vst.msk [vmem:[#allocation3 + $0x28] sm:$0xff] %vm3185, %v3172
        %3192 = vst.msk [vmem:[#allocation3 + $0x30] sm:$0xff] %vm3185, %v3174
        %3193 = vst.msk [vmem:[#allocation3 + $0x38] sm:$0xff] %vm3185, %v3176
        %v3194 = vld [vmem:[%s3046 + $0x8] sm:$0xff]
        %v3195 = vld [vmem:[%s3046 + $0x20] sm:$0xff]
        %v3196 = vld [vmem:[%s3046 + $0x38] sm:$0xff]
        %v3197 = vld [vmem:[%s3046 + $0x50] sm:$0xff]
        %v3198 = vld [vmem:[%s3046 + $0x68] sm:$0xff]
        %v3199 = vld [vmem:[%s3046 + $0x80] sm:$0xff]
        %v3200 = vld [vmem:[%s3046 + $0x98] sm:$0xff]
        %v3201 = vld [vmem:[%s3046 + $0xb0] sm:$0xff]
        %3210 = vrot.lane.b32.xlu0 %v3194, 90
        %v3211 = vpop.permute.xlu0 %3210
        %3212 = vrot.lane.b32.xlu0 %v3195, 90
        %v3213 = vpop.permute.xlu0 %3212
        %3214 = vrot.lane.b32.xlu0 %v3196, 90
        %v3215 = vpop.permute.xlu0 %3214
        %3216 = vrot.lane.b32.xlu0 %v3197, 90
        %v3217 = vpop.permute.xlu0 %3216
        %3218 = vrot.lane.b32.xlu0 %v3198, 90
        %v3219 = vpop.permute.xlu0 %3218
        %3220 = vrot.lane.b32.xlu0 %v3199, 90
        %v3221 = vpop.permute.xlu0 %3220
        %3222 = vrot.lane.b32.xlu0 %v3200, 90
        %v3223 = vpop.permute.xlu0 %3222
        %3224 = vrot.lane.b32.xlu0 %v3201, 90
        %v3225 = vpop.permute.xlu0 %3224
        %vm3234 = vcmask 753360
        %3235 = vst.msk [vmem:[#allocation3] sm:$0xff] %vm3234, %v3211
        %3236 = vst.msk [vmem:[#allocation3 + $0x8] sm:$0xff] %vm3234, %v3213
        %3237 = vst.msk [vmem:[#allocation3 + $0x10] sm:$0xff] %vm3234, %v3215
        %3238 = vst.msk [vmem:[#allocation3 + $0x18] sm:$0xff] %vm3234, %v3217
        %3239 = vst.msk [vmem:[#allocation3 + $0x20] sm:$0xff] %vm3234, %v3219
        %3240 = vst.msk [vmem:[#allocation3 + $0x28] sm:$0xff] %vm3234, %v3221
        %3241 = vst.msk [vmem:[#allocation3 + $0x30] sm:$0xff] %vm3234, %v3223
        %3242 = vst.msk [vmem:[#allocation3 + $0x38] sm:$0xff] %vm3234, %v3225
        %v3243 = vld [vmem:[%s3046 + $0x9] sm:$0xff]
        %v3244 = vld [vmem:[%s3046 + $0x21] sm:$0xff]
        %v3245 = vld [vmem:[%s3046 + $0x39] sm:$0xff]
        %v3246 = vld [vmem:[%s3046 + $0x51] sm:$0xff]
        %v3247 = vld [vmem:[%s3046 + $0x69] sm:$0xff]
        %v3248 = vld [vmem:[%s3046 + $0x81] sm:$0xff]
        %v3249 = vld [vmem:[%s3046 + $0x99] sm:$0xff]
        %v3250 = vld [vmem:[%s3046 + $0xb1] sm:$0xff]
        %3259 = vrot.lane.b32.xlu0 %v3243, 92
        %v3260 = vpop.permute.xlu0 %3259
        %3261 = vrot.lane.b32.xlu0 %v3244, 92
        %v3262 = vpop.permute.xlu0 %3261
        %3263 = vrot.lane.b32.xlu0 %v3245, 92
        %v3264 = vpop.permute.xlu0 %3263
        %3265 = vrot.lane.b32.xlu0 %v3246, 92
        %v3266 = vpop.permute.xlu0 %3265
        %3267 = vrot.lane.b32.xlu0 %v3247, 92
        %v3268 = vpop.permute.xlu0 %3267
        %3269 = vrot.lane.b32.xlu0 %v3248, 92
        %v3270 = vpop.permute.xlu0 %3269
        %3271 = vrot.lane.b32.xlu0 %v3249, 92
        %v3272 = vpop.permute.xlu0 %3271
        %3273 = vrot.lane.b32.xlu0 %v3250, 92
        %v3274 = vpop.permute.xlu0 %3273
        %vm3283 = vcmask 769760
        %3284 = vst.msk [vmem:[#allocation3] sm:$0xff] %vm3283, %v3260
        %3285 = vst.msk [vmem:[#allocation3 + $0x8] sm:$0xff] %vm3283, %v3262
        %3286 = vst.msk [vmem:[#allocation3 + $0x10] sm:$0xff] %vm3283, %v3264
        %3287 = vst.msk [vmem:[#allocation3 + $0x18] sm:$0xff] %vm3283, %v3266
        %3288 = vst.msk [vmem:[#allocation3 + $0x20] sm:$0xff] %vm3283, %v3268
        %3289 = vst.msk [vmem:[#allocation3 + $0x28] sm:$0xff] %vm3283, %v3270
        %3290 = vst.msk [vmem:[#allocation3 + $0x30] sm:$0xff] %vm3283, %v3272
        %3291 = vst.msk [vmem:[#allocation3 + $0x38] sm:$0xff] %vm3283, %v3274
        %v3292 = vld [vmem:[%s3046 + $0xa] sm:$0xff]
        %v3293 = vld [vmem:[%s3046 + $0x22] sm:$0xff]
        %v3294 = vld [vmem:[%s3046 + $0x3a] sm:$0xff]
        %v3295 = vld [vmem:[%s3046 + $0x52] sm:$0xff]
        %v3296 = vld [vmem:[%s3046 + $0x6a] sm:$0xff]
        %v3297 = vld [vmem:[%s3046 + $0x82] sm:$0xff]
        %v3298 = vld [vmem:[%s3046 + $0x9a] sm:$0xff]
        %v3299 = vld [vmem:[%s3046 + $0xb2] sm:$0xff]
        %3308 = vrot.lane.b32.xlu0 %v3292, 94
        %v3309 = vpop.permute.xlu0 %3308
        %3310 = vrot.lane.b32.xlu0 %v3293, 94
        %v3311 = vpop.permute.xlu0 %3310
        %3312 = vrot.lane.b32.xlu0 %v3294, 94
        %v3313 = vpop.permute.xlu0 %3312
        %3314 = vrot.lane.b32.xlu0 %v3295, 94
        %v3315 = vpop.permute.xlu0 %3314
        %3316 = vrot.lane.b32.xlu0 %v3296, 94
        %v3317 = vpop.permute.xlu0 %3316
        %3318 = vrot.lane.b32.xlu0 %v3297, 94
        %v3319 = vpop.permute.xlu0 %3318
        %3320 = vrot.lane.b32.xlu0 %v3298, 94
        %v3321 = vpop.permute.xlu0 %3320
        %3322 = vrot.lane.b32.xlu0 %v3299, 94
        %v3323 = vpop.permute.xlu0 %3322
        %vm3332 = vcmask 786160
        %3333 = vst.msk [vmem:[#allocation3] sm:$0xff] %vm3332, %v3309
        %3334 = vst.msk [vmem:[#allocation3 + $0x8] sm:$0xff] %vm3332, %v3311
        %3335 = vst.msk [vmem:[#allocation3 + $0x10] sm:$0xff] %vm3332, %v3313
        %3336 = vst.msk [vmem:[#allocation3 + $0x18] sm:$0xff] %vm3332, %v3315
        %3337 = vst.msk [vmem:[#allocation3 + $0x20] sm:$0xff] %vm3332, %v3317
        %3338 = vst.msk [vmem:[#allocation3 + $0x28] sm:$0xff] %vm3332, %v3319
        %3339 = vst.msk [vmem:[#allocation3 + $0x30] sm:$0xff] %vm3332, %v3321
        %3340 = vst.msk [vmem:[#allocation3 + $0x38] sm:$0xff] %vm3332, %v3323
        %v3341 = vld [vmem:[%s3046 + $0xb] sm:$0xff]
        %v3342 = vld [vmem:[%s3046 + $0x23] sm:$0xff]
        %v3343 = vld [vmem:[%s3046 + $0x3b] sm:$0xff]
        %v3344 = vld [vmem:[%s3046 + $0x53] sm:$0xff]
        %v3345 = vld [vmem:[%s3046 + $0x6b] sm:$0xff]
        %v3346 = vld [vmem:[%s3046 + $0x83] sm:$0xff]
        %v3347 = vld [vmem:[%s3046 + $0x9b] sm:$0xff]
        %v3348 = vld [vmem:[%s3046 + $0xb3] sm:$0xff]
        %3357 = vrot.lane.b32.xlu0 %v3341, 96
        %v3358 = vpop.permute.xlu0 %3357
        %3359 = vrot.lane.b32.xlu0 %v3342, 96
        %v3360 = vpop.permute.xlu0 %3359
        %3361 = vrot.lane.b32.xlu0 %v3343, 96
        %v3362 = vpop.permute.xlu0 %3361
        %3363 = vrot.lane.b32.xlu0 %v3344, 96
        %v3364 = vpop.permute.xlu0 %3363
        %3365 = vrot.lane.b32.xlu0 %v3345, 96
        %v3366 = vpop.permute.xlu0 %3365
        %3367 = vrot.lane.b32.xlu0 %v3346, 96
        %v3368 = vpop.permute.xlu0 %3367
        %3369 = vrot.lane.b32.xlu0 %v3347, 96
        %v3370 = vpop.permute.xlu0 %3369
        %3371 = vrot.lane.b32.xlu0 %v3348, 96
        %v3372 = vpop.permute.xlu0 %3371
        %vm3381 = vcmask 802560
        %3382 = vst.msk [vmem:[#allocation3] sm:$0xff] %vm3381, %v3358
        %3383 = vst.msk [vmem:[#allocation3 + $0x8] sm:$0xff] %vm3381, %v3360
        %3384 = vst.msk [vmem:[#allocation3 + $0x10] sm:$0xff] %vm3381, %v3362
        %3385 = vst.msk [vmem:[#allocation3 + $0x18] sm:$0xff] %vm3381, %v3364
        %3386 = vst.msk [vmem:[#allocation3 + $0x20] sm:$0xff] %vm3381, %v3366
        %3387 = vst.msk [vmem:[#allocation3 + $0x28] sm:$0xff] %vm3381, %v3368
        %3388 = vst.msk [vmem:[#allocation3 + $0x30] sm:$0xff] %vm3381, %v3370
        %3389 = vst.msk [vmem:[#allocation3 + $0x38] sm:$0xff] %vm3381, %v3372
        %v3390 = vld [vmem:[#allocation3] sm:$0xff]
        %v3391 = vld [vmem:[#allocation3 + $0x8] sm:$0xff]
        %v3392 = vld [vmem:[#allocation3 + $0x10] sm:$0xff]
        %v3393 = vld [vmem:[#allocation3 + $0x18] sm:$0xff]
        %v3394 = vld [vmem:[#allocation3 + $0x20] sm:$0xff]
        %v3395 = vld [vmem:[#allocation3 + $0x28] sm:$0xff]
        %v3396 = vld [vmem:[#allocation3 + $0x30] sm:$0xff]
        %v3397 = vld [vmem:[#allocation3 + $0x38] sm:$0xff]
        %v3398 = vld [vmem:[%s6] sm:$0xff]
        %v3399 = vld [vmem:[%s6 + $0x8] sm:$0xff]
        %v3400 = vld [vmem:[%s6 + $0x10] sm:$0xff]
        %v3401 = vld [vmem:[%s6 + $0x18] sm:$0xff]
        %v3402 = vld [vmem:[%s6 + $0x20] sm:$0xff]
        %v3403 = vld [vmem:[%s6 + $0x28] sm:$0xff]
        %v3404 = vld [vmem:[%s6 + $0x30] sm:$0xff]
        %v3405 = vld [vmem:[%s6 + $0x38] sm:$0xff]
        %v3406 = vld [vmem:[%s6 + $0x40] sm:$0xff]
        %v3407 = vld [vmem:[%s6 + $0x48] sm:$0xff]
        %v3408 = vld [vmem:[%s6 + $0x50] sm:$0xff]
        %v3409 = vld [vmem:[%s6 + $0x58] sm:$0xff]
        %v3410 = vld [vmem:[%s6 + $0x60] sm:$0x3]
        %v3411 = vld [vmem:[%s7] sm:$0x1]
        %v3413 = vlaneseq
        %v3414 = vshrl.u32 %v3413, 7
        %v3415 = vsub.s32 0, %v3414
        %v3416 = vrot.slane %v3411, %v3415
        %vm3418 = vcmask 801792
        %v3420 = vsel %vm3418, %v3390, 0
        %v3423 = vsel %vm3418, %v3391, 0
        %v3426 = vsel %vm3418, %v3392, 0
        %v3429 = vsel %vm3418, %v3393, 0
        %v3432 = vsel %vm3418, %v3394, 0
        %v3435 = vsel %vm3418, %v3395, 0
        %v3438 = vsel %vm3418, %v3396, 0
        %v3441 = vsel %vm3418, %v3397, 0
        %vm3443 = vcmask 1041408
        %v3445 = vsel %vm3443, %v3410, 0
        %3447 = vmatprep.subr.mxu0 0.0
        %3448 = vmatpush1.msra.mxu0 %v3398
        %3449 = vmatprep.subr.mxu0 0.0
        %3450 = vmatpush1.msra.mxu0 %v3399
        %3451 = vmatprep.subr.mxu0 0.0
        %3452 = vmatpush1.msra.mxu0 %v3400
        %3453 = vmatprep.subr.mxu0 0.0
        %3454 = vmatpush1.msra.mxu0 %v3401
        %3455 = vmatprep.subr.mxu0 0.0
        %3456 = vmatpush1.msra.mxu0 %v3402
        %3457 = vmatprep.subr.mxu0 0.0
        %3458 = vmatpush1.msra.mxu0 %v3403
        %3459 = vmatprep.subr.mxu0 0.0
        %3460 = vmatpush1.msra.mxu0 %v3404
        %3461 = vmatprep.subr.mxu0 0.0
        %3462 = vmatpush1.msra.mxu0 %v3405
        %3463 = vmatprep.subr.mxu0 0.0
        %3464 = vmatpush1.msra.mxu0 %v3406
        %3465 = vmatprep.subr.mxu0 0.0
        %3466 = vmatpush1.msra.mxu0 %v3407
        %3467 = vmatprep.subr.mxu0 0.0
        %3468 = vmatpush1.msra.mxu0 %v3408
        %3469 = vmatprep.subr.mxu0 0.0
        %3470 = vmatpush1.msra.mxu0 %v3409
        %3471 = vmatprep.subr.mxu0 0.0
        %3472 = vmatpush1.msra.mxu0 %v3445
        %3473 = vmatprep.subr.mxu0 0.0
        %3474 = vmatpush1.msra.mxu0 0.0
        %3475 = vmatprep.subr.mxu0 0.0
        %3476 = vmatpush1.msra.mxu0 0.0
        %3477 = vmatprep.subr.mxu0 0.0
        %3478 = vmatpush1.msra.mxu0 0.0
        %3479 = vmatprep.subr.mxu0 0.0
        %3480 = vmatpush1.msra.mxu0 0.0
        %3481 = vmatprep.subr.mxu0 0.0
        %3482 = vmatpush1.msra.mxu0 0.0
        %3483 = vmatprep.subr.mxu0 0.0
        %3484 = vmatpush1.msra.mxu0 0.0
        %3485 = vmatprep.subr.mxu0 0.0
        %3486 = vmatpush1.msra.mxu0 0.0
        %3487 = vmatprep.subr.mxu0 0.0
        %3488 = vmatpush1.msra.mxu0 0.0
        %3489 = vmatprep.subr.mxu0 0.0
        %3490 = vmatpush1.msra.mxu0 0.0
        %3491 = vmatprep.subr.mxu0 0.0
        %3492 = vmatpush1.msra.mxu0 0.0
        %3493 = vmatprep.subr.mxu0 0.0
        %3494 = vmatpush1.msra.mxu0 0.0
        %3495 = vmatprep.subr.mxu0 0.0
        %3496 = vmatpush1.msra.mxu0 0.0
        %3497 = vmatprep.subr.mxu0 0.0
        %3498 = vmatpush1.msra.mxu0 0.0
        %3499 = vmatprep.subr.mxu0 0.0
        %3500 = vmatpush1.msra.mxu0 0.0
        %3501 = vmatprep.subr.mxu0 0.0
        %3502 = vmatpush1.msra.mxu0 0.0
        %3503 = vmatprep.subr.mxu0 0.0
        %3504 = vmatpush1.msra.mxu0 0.0
        %3505 = vmatprep.subr.mxu0 0.0
        %3506 = vmatpush1.msra.mxu0 0.0
        %3507 = vmatprep.subr.mxu0 0.0
        %3508 = vmatpush1.msra.mxu0 0.0
        %3509 = vmatprep.subr.mxu0 0.0
        %3510 = vmatpush1.msra.mxu0 0.0
        %3511 = vmatprep.mubr.f32.mxu0 0.0
        %3512 = vmatmul.mubr.f32.gmra.mrb[0].mxu0 %v3420
        %v3513 = vpop.f32.mrb[0].mxu0
        %v3514 = vadd.f32 %v3416, %v3513
        %v3515 = vpop.f32.mrb[0].mxu0
        %3516 = vmatprep.mubr.f32.mxu0 0.0
        %3517 = vmatmul.mubr.f32.gmra.mrb[0].mxu0 %v3423
        %v3518 = vpop.f32.mrb[0].mxu0
        %v3519 = vadd.f32 %v3416, %v3518
        %v3520 = vpop.f32.mrb[0].mxu0
        %3521 = vmatprep.mubr.f32.mxu0 0.0
        %3522 = vmatmul.mubr.f32.gmra.mrb[0].mxu0 %v3426
        %v3523 = vpop.f32.mrb[0].mxu0
        %v3524 = vadd.f32 %v3416, %v3523
        %v3525 = vpop.f32.mrb[0].mxu0
        %3526 = vmatprep.mubr.f32.mxu0 0.0
        %3527 = vmatmul.mubr.f32.gmra.mrb[0].mxu0 %v3429
        %v3528 = vpop.f32.mrb[0].mxu0
        %v3529 = vadd.f32 %v3416, %v3528
        %v3530 = vpop.f32.mrb[0].mxu0
        %3531 = vmatprep.mubr.f32.mxu0 0.0
        %3532 = vmatmul.mubr.f32.gmra.mrb[0].mxu0 %v3432
        %v3533 = vpop.f32.mrb[0].mxu0
        %v3534 = vadd.f32 %v3416, %v3533
        %v3535 = vpop.f32.mrb[0].mxu0
        %3536 = vmatprep.mubr.f32.mxu0 0.0
        %3537 = vmatmul.mubr.f32.gmra.mrb[0].mxu0 %v3435
        %v3538 = vpop.f32.mrb[0].mxu0
        %v3539 = vadd.f32 %v3416, %v3538
        %v3540 = vpop.f32.mrb[0].mxu0
        %3541 = vmatprep.mubr.f32.mxu0 0.0
        %3542 = vmatmul.mubr.f32.gmra.mrb[0].mxu0 %v3438
        %v3543 = vpop.f32.mrb[0].mxu0
        %v3544 = vadd.f32 %v3416, %v3543
        %v3545 = vpop.f32.mrb[0].mxu0
        %3546 = vmatprep.mubr.f32.mxu0 0.0
        %3547 = vmatmul.mubr.f32.gmra.mrb[0].mxu0 %v3441
        %v3548 = vpop.f32.mrb[0].mxu0
        %v3549 = vadd.f32 %v3416, %v3548
        %v3550 = vpop.f32.mrb[0].mxu0
        %3551 = vdwg.mxu0
        %v3552 = vxor.u32 %v3514, 2147483648
        %v3553 = vxor.u32 %v3519, 2147483648
        %v3554 = vxor.u32 %v3524, 2147483648
        %v3555 = vxor.u32 %v3529, 2147483648
        %v3556 = vxor.u32 %v3534, 2147483648
        %v3557 = vxor.u32 %v3539, 2147483648
        %v3558 = vxor.u32 %v3544, 2147483648
        %v3559 = vxor.u32 %v3549, 2147483648
        %v3560 = vmul.f32 %v3552, 1.442695
        %v3561 = vpow.pop %v3560
        %v3562 = vmul.f32 %v3553, 1.442695
        %v3563 = vpow.pop %v3562
        %v3564 = vmul.f32 %v3554, 1.442695
        %v3565 = vpow.pop %v3564
        %v3566 = vmul.f32 %v3555, 1.442695
        %v3567 = vpow.pop %v3566
        %v3568 = vmul.f32 %v3556, 1.442695
        %v3569 = vpow.pop %v3568
        %v3570 = vmul.f32 %v3557, 1.442695
        %v3571 = vpow.pop %v3570
        %v3572 = vmul.f32 %v3558, 1.442695
        %v3573 = vpow.pop %v3572
        %v3574 = vmul.f32 %v3559, 1.442695
        %v3575 = vpow.pop %v3574
        %v3576 = vadd.f32 %v3561, 1.0
        %v3577 = vadd.f32 %v3563, 1.0
        %v3578 = vadd.f32 %v3565, 1.0
        %v3579 = vadd.f32 %v3567, 1.0
        %v3580 = vadd.f32 %v3569, 1.0
        %v3581 = vadd.f32 %v3571, 1.0
        %v3582 = vadd.f32 %v3573, 1.0
        %v3583 = vadd.f32 %v3575, 1.0
        %v3584 = vrcp.pop %v3576
        %v3585 = vmul.f32 1.0, %v3584
        %v3586 = vrcp.pop %v3577
        %v3587 = vmul.f32 1.0, %v3586
        %v3588 = vrcp.pop %v3578
        %v3589 = vmul.f32 1.0, %v3588
        %v3590 = vrcp.pop %v3579
        %v3591 = vmul.f32 1.0, %v3590
        %v3592 = vrcp.pop %v3580
        %v3593 = vmul.f32 1.0, %v3592
        %v3594 = vrcp.pop %v3581
        %v3595 = vmul.f32 1.0, %v3594
        %v3596 = vrcp.pop %v3582
        %v3597 = vmul.f32 1.0, %v3596
        %v3598 = vrcp.pop %v3583
        %v3599 = vmul.f32 1.0, %v3598
        %v3600 = vmul.f32 %v3514, %v3585
        %v3601 = vmul.f32 %v3519, %v3587
        %v3602 = vmul.f32 %v3524, %v3589
        %v3603 = vmul.f32 %v3529, %v3591
        %v3604 = vmul.f32 %v3534, %v3593
        %v3605 = vmul.f32 %v3539, %v3595
        %v3606 = vmul.f32 %v3544, %v3597
        %v3607 = vmul.f32 %v3549, %v3599
        %v3608 = vxor.u32 %v3600, 2147483648
        %v3609 = vxor.u32 %v3601, 2147483648
        %v3610 = vxor.u32 %v3602, 2147483648
        %v3611 = vxor.u32 %v3603, 2147483648
        %v3612 = vxor.u32 %v3604, 2147483648
        %v3613 = vxor.u32 %v3605, 2147483648
        %v3614 = vxor.u32 %v3606, 2147483648
        %v3615 = vxor.u32 %v3607, 2147483648
        %v3616 = vmul.f32 %v3608, 1.442695
        %v3617 = vpow.pop %v3616
        %v3618 = vmul.f32 %v3609, 1.442695
        %v3619 = vpow.pop %v3618
        %v3620 = vmul.f32 %v3610, 1.442695
        %v3621 = vpow.pop %v3620
        %v3622 = vmul.f32 %v3611, 1.442695
        %v3623 = vpow.pop %v3622
        %v3624 = vmul.f32 %v3612, 1.442695
        %v3625 = vpow.pop %v3624
        %v3626 = vmul.f32 %v3613, 1.442695
        %v3627 = vpow.pop %v3626
        %v3628 = vmul.f32 %v3614, 1.442695
        %v3629 = vpow.pop %v3628
        %v3630 = vmul.f32 %v3615, 1.442695
        %v3631 = vpow.pop %v3630
        %v3632 = vadd.f32 %v3617, 1.0
        %v3633 = vadd.f32 %v3619, 1.0
        %v3634 = vadd.f32 %v3621, 1.0
        %v3635 = vadd.f32 %v3623, 1.0
        %v3636 = vadd.f32 %v3625, 1.0
        %v3637 = vadd.f32 %v3627, 1.0
        %v3638 = vadd.f32 %v3629, 1.0
        %v3639 = vadd.f32 %v3631, 1.0
        %v3640 = vrcp.pop %v3632
        %v3641 = vmul.f32 1.0, %v3640
        %v3642 = vrcp.pop %v3633
        %v3643 = vmul.f32 1.0, %v3642
        %v3644 = vrcp.pop %v3634
        %v3645 = vmul.f32 1.0, %v3644
        %v3646 = vrcp.pop %v3635
        %v3647 = vmul.f32 1.0, %v3646
        %v3648 = vrcp.pop %v3636
        %v3649 = vmul.f32 1.0, %v3648
        %v3650 = vrcp.pop %v3637
        %v3651 = vmul.f32 1.0, %v3650
        %v3652 = vrcp.pop %v3638
        %v3653 = vmul.f32 1.0, %v3652
        %v3654 = vrcp.pop %v3639
        %v3655 = vmul.f32 1.0, %v3654
        %v3656 = vmul.f32 %v3641, %v889
        %v3657 = vmul.f32 %v3643, %v890
        %v3658 = vmul.f32 %v3645, %v891
        %v3659 = vmul.f32 %v3647, %v892
        %v3660 = vmul.f32 %v3649, %v893
        %v3661 = vmul.f32 %v3651, %v894
        %v3662 = vmul.f32 %v3653, %v895
        %v3663 = vmul.f32 %v3655, %v896
        %v3664 = vsel %vm623, %v3656, 0.0
        %v3665 = vsel %vm623, %v3657, 0.0
        %v3666 = vadd.f32 %v3664, %v3665
        %v3667 = vsel %vm623, %v3658, 0.0
        %v3668 = vadd.f32 %v3666, %v3667
        %v3669 = vsel %vm623, %v3659, 0.0
        %v3670 = vadd.f32 %v3668, %v3669
        %v3671 = vsel %vm623, %v3660, 0.0
        %v3672 = vadd.f32 %v3670, %v3671
        %v3673 = vsel %vm623, %v3661, 0.0
        %v3674 = vadd.f32 %v3672, %v3673
        %v3675 = vsel %vm623, %v3662, 0.0
        %v3676 = vadd.f32 %v3674, %v3675
        %v3677 = vsel %vm623, %v3663, 0.0
        %v3678 = vadd.f32 %v3676, %v3677
        %3679 = vadd.xlane.f32.xlu0 %v3678
        %v3680 = vpop.xlane.xlu0 %3679
        %v3681 = vrot.slane %v3680, 4
        %v3682 = vadd.f32 %v3680, %v3681
        %v3683 = vrot.slane %v3682, 2
        %v3684 = vadd.f32 %v3682, %v3683
        %v3685 = vrot.slane %v3684, 1
        %v3686 = vadd.f32 %v3684, %v3685
        %s3687 = vtos %v3686
        %v3688 = vrcp.pop 1024.0
        %s3689 = vtos %v3688
        %s3690 = smul.f32 %s3687, %s3689
        %v3691 = vstv %s3690
        %v3692 = vsub.f32 %v3656, %v3691
        %v3693 = vsub.f32 %v3657, %v3691
        %v3694 = vsub.f32 %v3658, %v3691
        %v3695 = vsub.f32 %v3659, %v3691
        %v3696 = vsub.f32 %v3660, %v3691
        %v3697 = vsub.f32 %v3661, %v3691
        %v3698 = vsub.f32 %v3662, %v3691
        %v3699 = vsub.f32 %v3663, %v3691
        %v3700 = vmul.f32 %v3692, %v3692
        %v3701 = vmul.f32 %v3693, %v3693
        %v3702 = vmul.f32 %v3694, %v3694
        %v3703 = vmul.f32 %v3695, %v3695
        %v3704 = vmul.f32 %v3696, %v3696
        %v3705 = vmul.f32 %v3697, %v3697
        %v3706 = vmul.f32 %v3698, %v3698
        %v3707 = vmul.f32 %v3699, %v3699
        %v3708 = vsel %vm623, %v3700, 0.0
        %v3709 = vsel %vm623, %v3701, 0.0
        %v3710 = vadd.f32 %v3708, %v3709
        %v3711 = vsel %vm623, %v3702, 0.0
        %v3712 = vadd.f32 %v3710, %v3711
        %v3713 = vsel %vm623, %v3703, 0.0
        %v3714 = vadd.f32 %v3712, %v3713
        %v3715 = vsel %vm623, %v3704, 0.0
        %v3716 = vadd.f32 %v3714, %v3715
        %v3717 = vsel %vm623, %v3705, 0.0
        %v3718 = vadd.f32 %v3716, %v3717
        %v3719 = vsel %vm623, %v3706, 0.0
        %v3720 = vadd.f32 %v3718, %v3719
        %v3721 = vsel %vm623, %v3707, 0.0
        %v3722 = vadd.f32 %v3720, %v3721
        %3723 = vadd.xlane.f32.xlu0 %v3722
        %v3724 = vpop.xlane.xlu0 %3723
        %v3725 = vrot.slane %v3724, 4
        %v3726 = vadd.f32 %v3724, %v3725
        %v3727 = vrot.slane %v3726, 2
        %v3728 = vadd.f32 %v3726, %v3727
        %v3729 = vrot.slane %v3728, 1
        %v3730 = vadd.f32 %v3728, %v3729
        %s3731 = vtos %v3730
        %v3732 = vrcp.pop 1024.0
        %s3733 = vtos %v3732
        %s3734 = smul.f32 %s3731, %s3733
        %s3735 = sadd.f32 %s3734, 1e-05
        %v3736 = vstv %s3735
        %v3737 = vrsqrt.pop %v3736
        %s3738 = vtos %v3737
        %v3739 = vstv %s3738
        %v3740 = vmul.f32 %v3692, %v3739
        %v3741 = vmul.f32 %v3693, %v3739
        %v3742 = vmul.f32 %v3694, %v3739
        %v3743 = vmul.f32 %v3695, %v3739
        %v3744 = vmul.f32 %v3696, %v3739
        %v3745 = vmul.f32 %v3697, %v3739
        %v3746 = vmul.f32 %v3698, %v3739
        %v3747 = vmul.f32 %v3699, %v3739
        %v3748 = vld [vmem:[%s8] sm:$0xff]
        %v3749 = vld [vmem:[%s8 + $0x8] sm:$0xff]
        %v3750 = vld [vmem:[%s8 + $0x10] sm:$0xff]
        %v3751 = vld [vmem:[%s8 + $0x18] sm:$0xff]
        %v3752 = vld [vmem:[%s8 + $0x20] sm:$0xff]
        %v3753 = vld [vmem:[%s8 + $0x28] sm:$0xff]
        %v3754 = vld [vmem:[%s8 + $0x30] sm:$0xff]
        %v3755 = vld [vmem:[%s8 + $0x38] sm:$0xff]
        %v3756 = vmul.f32 %v3740, %v3748
        %v3757 = vmul.f32 %v3741, %v3749
        %v3758 = vmul.f32 %v3742, %v3750
        %v3759 = vmul.f32 %v3743, %v3751
        %v3760 = vmul.f32 %v3744, %v3752
        %v3761 = vmul.f32 %v3745, %v3753
        %v3762 = vmul.f32 %v3746, %v3754
        %v3763 = vmul.f32 %v3747, %v3755
        %v3764 = vld [vmem:[%s9] sm:$0xff]
        %v3765 = vld [vmem:[%s9 + $0x8] sm:$0xff]
        %v3766 = vld [vmem:[%s9 + $0x10] sm:$0xff]
        %v3767 = vld [vmem:[%s9 + $0x18] sm:$0xff]
        %v3768 = vld [vmem:[%s9 + $0x20] sm:$0xff]
        %v3769 = vld [vmem:[%s9 + $0x28] sm:$0xff]
        %v3770 = vld [vmem:[%s9 + $0x30] sm:$0xff]
        %v3771 = vld [vmem:[%s9 + $0x38] sm:$0xff]
        %v3772 = vadd.f32 %v3756, %v3764
        %v3773 = vadd.f32 %v3757, %v3765
        %v3774 = vadd.f32 %v3758, %v3766
        %v3775 = vadd.f32 %v3759, %v3767
        %v3776 = vadd.f32 %v3760, %v3768
        %v3777 = vadd.f32 %v3761, %v3769
        %v3778 = vadd.f32 %v3762, %v3770
        %v3779 = vadd.f32 %v3763, %v3771
        %v3780 = vld [vmem:[%s10] sm:$0xff]
        %v3781 = vld [vmem:[%s10 + $0x8] sm:$0xff]
        %v3782 = vld [vmem:[%s11] sm:$0x1]
        %v3784 = vlaneseq
        %v3785 = vshrl.u32 %v3784, 7
        %v3786 = vsub.s32 0, %v3785
        %v3787 = vrot.slane %v3782, %v3786
        %v3790 = vsel %vm623, %v3772, 0
        %v3793 = vsel %vm623, %v3773, 0
        %v3796 = vsel %vm623, %v3774, 0
        %v3799 = vsel %vm623, %v3775, 0
        %v3802 = vsel %vm623, %v3776, 0
        %v3805 = vsel %vm623, %v3777, 0
        %v3808 = vsel %vm623, %v3778, 0
        %v3811 = vsel %vm623, %v3779, 0
        %3813 = vmatprep.subr.mxu0 0.0
        %3814 = vmatpush1.msra.mxu0 %v3780
        %3815 = vmatprep.subr.mxu0 0.0
        %3816 = vmatpush1.msra.mxu0 %v3781
        %3817 = vmatprep.subr.mxu0 0.0
        %3818 = vmatpush1.msra.mxu0 0.0
        %3819 = vmatprep.subr.mxu0 0.0
        %3820 = vmatpush1.msra.mxu0 0.0
        %3821 = vmatprep.subr.mxu0 0.0
        %3822 = vmatpush1.msra.mxu0 0.0
        %3823 = vmatprep.subr.mxu0 0.0
        %3824 = vmatpush1.msra.mxu0 0.0
        %3825 = vmatprep.subr.mxu0 0.0
        %3826 = vmatpush1.msra.mxu0 0.0
        %3827 = vmatprep.subr.mxu0 0.0
        %3828 = vmatpush1.msra.mxu0 0.0
        %3829 = vmatprep.subr.mxu0 0.0
        %3830 = vmatpush1.msra.mxu0 0.0
        %3831 = vmatprep.subr.mxu0 0.0
        %3832 = vmatpush1.msra.mxu0 0.0
        %3833 = vmatprep.subr.mxu0 0.0
        %3834 = vmatpush1.msra.mxu0 0.0
        %3835 = vmatprep.subr.mxu0 0.0
        %3836 = vmatpush1.msra.mxu0 0.0
        %3837 = vmatprep.subr.mxu0 0.0
        %3838 = vmatpush1.msra.mxu0 0.0
        %3839 = vmatprep.subr.mxu0 0.0
        %3840 = vmatpush1.msra.mxu0 0.0
        %3841 = vmatprep.subr.mxu0 0.0
        %3842 = vmatpush1.msra.mxu0 0.0
        %3843 = vmatprep.subr.mxu0 0.0
        %3844 = vmatpush1.msra.mxu0 0.0
        %3845 = vmatprep.subr.mxu0 0.0
        %3846 = vmatpush1.msra.mxu0 0.0
        %3847 = vmatprep.subr.mxu0 0.0
        %3848 = vmatpush1.msra.mxu0 0.0
        %3849 = vmatprep.subr.mxu0 0.0
        %3850 = vmatpush1.msra.mxu0 0.0
        %3851 = vmatprep.subr.mxu0 0.0
        %3852 = vmatpush1.msra.mxu0 0.0
        %3853 = vmatprep.subr.mxu0 0.0
        %3854 = vmatpush1.msra.mxu0 0.0
        %3855 = vmatprep.subr.mxu0 0.0
        %3856 = vmatpush1.msra.mxu0 0.0
        %3857 = vmatprep.subr.mxu0 0.0
        %3858 = vmatpush1.msra.mxu0 0.0
        %3859 = vmatprep.subr.mxu0 0.0
        %3860 = vmatpush1.msra.mxu0 0.0
        %3861 = vmatprep.subr.mxu0 0.0
        %3862 = vmatpush1.msra.mxu0 0.0
        %3863 = vmatprep.subr.mxu0 0.0
        %3864 = vmatpush1.msra.mxu0 0.0
        %3865 = vmatprep.subr.mxu0 0.0
        %3866 = vmatpush1.msra.mxu0 0.0
        %3867 = vmatprep.subr.mxu0 0.0
        %3868 = vmatpush1.msra.mxu0 0.0
        %3869 = vmatprep.subr.mxu0 0.0
        %3870 = vmatpush1.msra.mxu0 0.0
        %3871 = vmatprep.subr.mxu0 0.0
        %3872 = vmatpush1.msra.mxu0 0.0
        %3873 = vmatprep.subr.mxu0 0.0
        %3874 = vmatpush1.msra.mxu0 0.0
        %3875 = vmatprep.subr.mxu0 0.0
        %3876 = vmatpush1.msra.mxu0 0.0
        %3877 = vmatprep.mubr.f32.mxu0 0.0
        %3878 = vmatmul.mubr.f32.gmra.mrb[0].mxu0 %v3790
        %v3879 = vpop.f32.mrb[0].mxu0
        %v3880 = vadd.f32 %v3787, %v3879
        %v3881 = vpop.f32.mrb[0].mxu0
        %3882 = vmatprep.mubr.f32.mxu0 0.0
        %3883 = vmatmul.mubr.f32.gmra.mrb[0].mxu0 %v3793
        %v3884 = vpop.f32.mrb[0].mxu0
        %v3885 = vadd.f32 %v3787, %v3884
        %v3886 = vpop.f32.mrb[0].mxu0
        %3887 = vmatprep.mubr.f32.mxu0 0.0
        %3888 = vmatmul.mubr.f32.gmra.mrb[0].mxu0 %v3796
        %v3889 = vpop.f32.mrb[0].mxu0
        %v3890 = vadd.f32 %v3787, %v3889
        %v3891 = vpop.f32.mrb[0].mxu0
        %3892 = vmatprep.mubr.f32.mxu0 0.0
        %3893 = vmatmul.mubr.f32.gmra.mrb[0].mxu0 %v3799
        %v3894 = vpop.f32.mrb[0].mxu0
        %v3895 = vadd.f32 %v3787, %v3894
        %v3896 = vpop.f32.mrb[0].mxu0
        %3897 = vmatprep.mubr.f32.mxu0 0.0
        %3898 = vmatmul.mubr.f32.gmra.mrb[0].mxu0 %v3802
        %v3899 = vpop.f32.mrb[0].mxu0
        %v3900 = vadd.f32 %v3787, %v3899
        %v3901 = vpop.f32.mrb[0].mxu0
        %3902 = vmatprep.mubr.f32.mxu0 0.0
        %3903 = vmatmul.mubr.f32.gmra.mrb[0].mxu0 %v3805
        %v3904 = vpop.f32.mrb[0].mxu0
        %v3905 = vadd.f32 %v3787, %v3904
        %v3906 = vpop.f32.mrb[0].mxu0
        %3907 = vmatprep.mubr.f32.mxu0 0.0
        %3908 = vmatmul.mubr.f32.gmra.mrb[0].mxu0 %v3808
        %v3909 = vpop.f32.mrb[0].mxu0
        %v3910 = vadd.f32 %v3787, %v3909
        %v3911 = vpop.f32.mrb[0].mxu0
        %3912 = vmatprep.mubr.f32.mxu0 0.0
        %3913 = vmatmul.mubr.f32.gmra.mrb[0].mxu0 %v3811
        %v3914 = vpop.f32.mrb[0].mxu0
        %v3915 = vadd.f32 %v3787, %v3914
        %v3916 = vpop.f32.mrb[0].mxu0
        %3917 = vdwg.mxu0
        %v3918 = vxor.u32 %v3880, 2147483648
        %v3919 = vxor.u32 %v3885, 2147483648
        %v3920 = vxor.u32 %v3890, 2147483648
        %v3921 = vxor.u32 %v3895, 2147483648
        %v3922 = vxor.u32 %v3900, 2147483648
        %v3923 = vxor.u32 %v3905, 2147483648
        %v3924 = vxor.u32 %v3910, 2147483648
        %v3925 = vxor.u32 %v3915, 2147483648
        %v3926 = vmul.f32 %v3918, 1.442695
        %v3927 = vpow.pop %v3926
        %v3928 = vmul.f32 %v3919, 1.442695
        %v3929 = vpow.pop %v3928
        %v3930 = vmul.f32 %v3920, 1.442695
        %v3931 = vpow.pop %v3930
        %v3932 = vmul.f32 %v3921, 1.442695
        %v3933 = vpow.pop %v3932
        %v3934 = vmul.f32 %v3922, 1.442695
        %v3935 = vpow.pop %v3934
        %v3936 = vmul.f32 %v3923, 1.442695
        %v3937 = vpow.pop %v3936
        %v3938 = vmul.f32 %v3924, 1.442695
        %v3939 = vpow.pop %v3938
        %v3940 = vmul.f32 %v3925, 1.442695
        %v3941 = vpow.pop %v3940
        %v3942 = vadd.f32 %v3927, 1.0
        %v3943 = vadd.f32 %v3929, 1.0
        %v3944 = vadd.f32 %v3931, 1.0
        %v3945 = vadd.f32 %v3933, 1.0
        %v3946 = vadd.f32 %v3935, 1.0
        %v3947 = vadd.f32 %v3937, 1.0
        %v3948 = vadd.f32 %v3939, 1.0
        %v3949 = vadd.f32 %v3941, 1.0
        %v3950 = vrcp.pop %v3942
        %v3951 = vmul.f32 1.0, %v3950
        %v3952 = vrcp.pop %v3943
        %v3953 = vmul.f32 1.0, %v3952
        %v3954 = vrcp.pop %v3944
        %v3955 = vmul.f32 1.0, %v3954
        %v3956 = vrcp.pop %v3945
        %v3957 = vmul.f32 1.0, %v3956
        %v3958 = vrcp.pop %v3946
        %v3959 = vmul.f32 1.0, %v3958
        %v3960 = vrcp.pop %v3947
        %v3961 = vmul.f32 1.0, %v3960
        %v3962 = vrcp.pop %v3948
        %v3963 = vmul.f32 1.0, %v3962
        %v3964 = vrcp.pop %v3949
        %v3965 = vmul.f32 1.0, %v3964
        %v3966 = vmul.f32 %v3880, %v3951
        %v3967 = vmul.f32 %v3885, %v3953
        %v3968 = vmul.f32 %v3890, %v3955
        %v3969 = vmul.f32 %v3895, %v3957
        %v3970 = vmul.f32 %v3900, %v3959
        %v3971 = vmul.f32 %v3905, %v3961
        %v3972 = vmul.f32 %v3910, %v3963
        %v3973 = vmul.f32 %v3915, %v3965
        %vm3974 = vcmask 64512
        %3975 = vst.msk [vmem:[%s477] sm:$0xff] %vm3974, %v3966
        %3976 = vst.msk [vmem:[%s477 + $0x8] sm:$0xff] %vm3974, %v3967
        %3977 = vst.msk [vmem:[%s477 + $0x10] sm:$0xff] %vm3974, %v3968
        %3978 = vst.msk [vmem:[%s477 + $0x18] sm:$0xff] %vm3974, %v3969
        %3979 = vst.msk [vmem:[%s477 + $0x20] sm:$0xff] %vm3974, %v3970
        %3980 = vst.msk [vmem:[%s477 + $0x28] sm:$0xff] %vm3974, %v3971
        %3981 = vst.msk [vmem:[%s477 + $0x30] sm:$0xff] %vm3974, %v3972
        %3982 = vst.msk [vmem:[%s477 + $0x38] sm:$0xff] %vm3974, %v3973
        %p3983 = scmp.lt.s32.totalorder %s26, 1
        %s3984 = scalar_select %p3983, %s26, 1
        %s3985 = smul.addr %s3984, 8
        %s3986 = smul.addr %s3985, 8
        %s3987 = scalar_lea.vmem %s12, %s3986
        // Predicated region
        $region81: #{tpu_custom_call.1} parent=67 // pred_check
          %p3988 = pneg %p306
        $region82: #{tpu_custom_call.1} parent=67 // pred_check_branch
          %3990 = sbr.rel (%p3988) target = $region84
        $region83: #{tpu_custom_call.1} parent=67 // pred_region
          _
        $region84: #{tpu_custom_call.1} parent=67 // pred_fallthru
          _
      $region68: #{tpu_custom_call.1} parent=5 // pred_fallthru
        _
      %p3991 = scmp.le.s32.totalorder 2, %s21
      // Predicated region
      $region85: #{tpu_custom_call.1} parent=5 // pred_check
        %p3992 = pneg %p3991
      $region86: #{tpu_custom_call.1} parent=5 // pred_check_branch
        %3994 = sbr.rel (%p3992) target = $region88
      $region87: #{tpu_custom_call.1} parent=5 // pred_region
        %s3995 = ssub.s32 %s21, 2
        // Predicated region
        $region89: #{tpu_custom_call.1} parent=87 // pred_check
          %p3996 = pneg %p312
        $region90: #{tpu_custom_call.1} parent=87 // pred_check_branch
          %3998 = sbr.rel (%p3996) target = $region92
        $region91: #{tpu_custom_call.1} parent=87 // pred_region
          %p3999 = scmp.lt.s32.totalorder %s27, 1
          %s4000 = scalar_select %p3999, %s27, 1
          %s4001 = smul.addr %s4000, 8
          %s4002 = smul.addr %s4001, 8
          %s4003 = scalar_lea.vmem %s12, %s4002
        $region92: #{tpu_custom_call.1} parent=87 // pred_fallthru
          _
      $region88: #{tpu_custom_call.1} parent=5 // pred_fallthru
        _
    $region6: #{tpu_custom_call.1} parent=1 // loop_footer
      %s25 = sadd.s32 1, %s21
    $region7: #{tpu_custom_call.1} parent=1 // loop_footer_branch
      %20 = sbr.rel target = $region3
    $region8: #{tpu_custom_call.1} parent=1 // loop_exit
      _
    %4004 = vsyncpa [#allocation5], 1
    %s4005 = scalar_lea.sflag [#allocation5], 1
    %4006 = vsyncpa %s4005, 1
    %4007 = vsyncpa [#allocation9], 1
    %4008 = vsyncpa [#allocation6], 1
    %s4009 = scalar_lea.sflag [#allocation6], 1
    %4010 = vsyncpa %s4009, 1

</llo_original>
